<compile_context>
chip_gen: v7x
topology: tpu7x:2x2x1
jax: 0.10.0
libtpu: 0.0.40
codegen_flags: <defaults>
</compile_context>

<pallas_src>
import math
from functools import partial

import jax
import jax.numpy as jnp
from jax import lax
from jax.experimental import pallas as pl
from jax.experimental.pallas import tpu as pltpu


def _round_up(x, m):
    return (x + m - 1) // m * m


# Slab geometry: valid pixel (r, c) lives at flat index (r + ROW0) * wp + (c + COL0)
# of a per-image (Hp * wp, C) slab, wp = round_up(W + 6, 8), Hp = H + 8.
# ROW0 = 4 / COL0 = 3 give >= 3 zero rows/cols on every side (conv_spatial pad=3)
# plus slack rows so every shifted-window read stays in bounds.
ROW0 = 4
COL0 = 3


# ----------------------------------------------------------------------------
# fused Pallas kernel: conv0 (3x3, pad=1) -> conv_spatial (3x3, pad=3, dil=3)
#                      -> conv1 (1x1) -> u * attn, all per image.
# ----------------------------------------------------------------------------
def _fused_attn_kernel(x_ref, mask_ref, w0_ref, b0_ref, wsp_ref, bsp_ref,
                       w1_ref, b1_ref, o_ref,
                       x0cat_ref, a0slab_ref, a0cat_ref,
                       *, H, W, C, wp, M, E0, Esp):
    f32 = jnp.float32

    # ---- conv0: 3x3, pad=1, dil=1 ------------------------------------------
    # ky taps folded into K: three sublane-aligned slab reads build the
    # lane-concat scratch, then 3 dots of K=3*C instead of 9 dots of K=C.
    q0 = (ROW0 - 1) * wp - 8                      # aligned base (wp % 8 == 0)
    x0cat_ref[...] = jnp.concatenate(
        [x_ref[pl.ds(q0, E0), :],
         x_ref[pl.ds(q0 + wp, E0), :],
         x_ref[pl.ds(q0 + 2 * wp, E0), :]], axis=-1)
    a0 = jnp.dot(x0cat_ref[pl.ds(7, M), :], w0_ref[0],
                 preferred_element_type=f32)
    for kx in (1, 2):                             # tap kx reads offset 7 + kx
        a0 = a0 + jnp.dot(x0cat_ref[pl.ds(7 + kx, M), :], w0_ref[kx],
                          preferred_element_type=f32)
    a0 = (a0 + b0_ref[...]) * mask_ref[...]       # zero the padding columns

    # conv0 output written straight into the pad=3 slab layout conv_spatial
    # expects; zero margins come from the scratch zero-init (no HBM round trip).
    a0slab_ref[...] = jnp.zeros_like(a0slab_ref)
    a0slab_ref[pl.ds(ROW0 * wp, M), :] = a0.astype(jnp.bfloat16)

    # ---- conv_spatial: 3x3, pad=3, dil=3 (cat([a, a]) folded into weights) --
    a0cat_ref[...] = jnp.concatenate(
        [a0slab_ref[pl.ds(1 * wp, Esp), :],
         a0slab_ref[pl.ds(4 * wp, Esp), :],
         a0slab_ref[pl.ds(7 * wp, Esp), :]], axis=-1)
    s = jnp.dot(a0cat_ref[pl.ds(0, M), :], wsp_ref[0],
                preferred_element_type=f32)
    for kx in (1, 2):                             # tap kx reads offset 3 * kx
        s = s + jnp.dot(a0cat_ref[pl.ds(3 * kx, M), :], wsp_ref[kx],
                        preferred_element_type=f32)
    s = s + bsp_ref[...]

    # ---- conv1 (1x1) + gate (u * attn), fused epilogue -----------------------
    y = jnp.dot(s.astype(jnp.bfloat16), w1_ref[...],
                preferred_element_type=f32) + b1_ref[...]
    u = x_ref[pl.ds(ROW0 * wp + COL0, M), :].astype(f32)   # gate straight off the slab
    y = u * y

    # compact store: drop the pitch-padding columns (no garbage-column stores).
    o_ref[...] = y.reshape(H, wp, C)[:, :W, :]


# ----------------------------------------------------------------------------
# glue: slab layout, weight folding, pallas_call
# ----------------------------------------------------------------------------
def attention_module_forward(x_nchw, params):
    """x: (N, dim, H, W) float32 -> (N, dim, H, W) float32."""
    N, C, H, W = x_nchw.shape
    wp = _round_up(W + 2 * COL0, 8)          # row pitch (>= W + 6 cols)
    Hp = H + 2 * ROW0                        # padded rows incl. read slack
    Lp = Hp * wp
    M = H * wp
    E0 = M + 16                              # conv0 cat-slab extent (taps @ +7..+9)
    Esp = M + 8                              # conv_spatial cat-slab extent (taps @ +0..+6)

    x_nhwc = jnp.transpose(x_nchw, (0, 2, 3, 1))
    x_slab = jnp.pad(
        x_nhwc.astype(jnp.bfloat16),
        ((0, 0), (ROW0, Hp - H - ROW0), (COL0, wp - W - COL0), (0, 0)),
    ).reshape(N, Lp, C)

    # column-validity mask for the conv0 output (zeros the pad columns so the
    # a0 slab is an exact zero-padded image for the dilated conv).
    col = jnp.arange(M, dtype=jnp.int32) % wp
    mask = ((col >= COL0) & (col < COL0 + W)).astype(jnp.float32).reshape(M, 1)

    # weights: ky folded into the contraction dim -> (kx, 3*Cin, Cout)
    def fold_taps(w_oihw):
        w = jnp.transpose(w_oihw, (3, 2, 1, 0))          # (kx, ky, Cin, Cout)
        return w.reshape(3, 3 * w.shape[2], w.shape[3])

    w0 = fold_taps(params["conv0_w"]).astype(jnp.bfloat16)
    # cat([attn, attn]) folded into conv_spatial's weight (exact rewrite).
    wsp = fold_taps(params["convsp_w"][:, :C] + params["convsp_w"][:, C:]
                    ).astype(jnp.bfloat16)
    w1 = params["conv1_w"].astype(jnp.bfloat16)
    b0 = params["conv0_b"].reshape(1, C).astype(jnp.float32)
    bsp = params["convsp_b"].reshape(1, C).astype(jnp.float32)
    b1 = params["conv1_b"].reshape(1, C).astype(jnp.float32)

    flops = 2 * N * M * C * C * (9 + 9 + 1)
    bytes_accessed = (N * (Lp * C * 2 + H * W * C * 4) + M * 4
                      + 2 * (2 * 3 * 3 * C * C + C * C) + 3 * C * 4)
    cost = pl.CostEstimate(flops=int(flops), transcendentals=0,
                           bytes_accessed=int(bytes_accessed))

    out = pl.pallas_call(
        partial(_fused_attn_kernel, H=H, W=W, C=C, wp=wp, M=M, E0=E0, Esp=Esp),
        grid=(N,),
        in_specs=[
            pl.BlockSpec((None, Lp, C), lambda n: (n, 0, 0)),      # x slab (bf16)
            pl.BlockSpec((M, 1), lambda n: (0, 0)),                # column mask
            pl.BlockSpec((3, 3 * C, C), lambda n: (0, 0, 0)),      # conv0 W (ky-folded)
            pl.BlockSpec((1, C), lambda n: (0, 0)),                # conv0 b
            pl.BlockSpec((3, 3 * C, C), lambda n: (0, 0, 0)),      # conv_spatial W
            pl.BlockSpec((1, C), lambda n: (0, 0)),                # conv_spatial b
            pl.BlockSpec((C, C), lambda n: (0, 0)),                # conv1 W
            pl.BlockSpec((1, C), lambda n: (0, 0)),                # conv1 b
        ],
        out_specs=pl.BlockSpec((None, H, W, C), lambda n: (n, 0, 0, 0)),
        out_shape=jax.ShapeDtypeStruct((N, H, W, C), jnp.float32),
        scratch_shapes=[
            pltpu.VMEM((E0, 3 * C), jnp.bfloat16),                 # conv0 ky-cat slab
            pltpu.VMEM((Lp, C), jnp.bfloat16),                     # a0 in pad=3 layout
            pltpu.VMEM((Esp, 3 * C), jnp.bfloat16),                # conv_spatial ky-cat slab
        ],
        compiler_params=pltpu.CompilerParams(
            dimension_semantics=("parallel",),
            vmem_limit_bytes=64 * 1024 * 1024),
        cost_estimate=cost,
    )(x_slab, mask, w0, b0, wsp, bsp, w1, b1)

    return jnp.transpose(out, (0, 3, 1, 2))


# ----------------------------------------------------------------------------
# parameter construction (deterministic, synthetic quaternion weights)
# ----------------------------------------------------------------------------
def quaternion_conv_weight(key, in_ch, out_ch, k):
    # Hamilton-product block weight, shape (out_ch, in_ch, k, k) (OIHW).
    assert in_ch % 4 == 0 and out_ch % 4 == 0
    ko, ki = out_ch // 4, in_ch // 4
    kr, kim, kj, kq = jax.random.split(key, 4)
    scale = 1.0 / math.sqrt(ki * k * k)
    r = jax.random.normal(kr, (ko, ki, k, k), jnp.float32) * scale
    i = jax.random.normal(kim, (ko, ki, k, k), jnp.float32) * scale
    j = jax.random.normal(kj, (ko, ki, k, k), jnp.float32) * scale
    q = jax.random.normal(kq, (ko, ki, k, k), jnp.float32) * scale
    row_r = jnp.concatenate([r, -i, -j, -q], axis=1)
    row_i = jnp.concatenate([i, r, -q, j], axis=1)
    row_j = jnp.concatenate([j, q, r, -i], axis=1)
    row_k = jnp.concatenate([q, -j, i, r], axis=1)
    return jnp.concatenate([row_r, row_i, row_j, row_k], axis=0)


def init_params(key, dim):
    keys = jax.random.split(key, 6)
    p = {}
    p["conv0_w"] = quaternion_conv_weight(keys[0], dim, dim, 3)        # (dim, dim, 3, 3)
    p["conv0_b"] = jax.random.normal(keys[1], (dim,), jnp.float32) * 0.02
    p["convsp_w"] = quaternion_conv_weight(keys[2], 2 * dim, dim, 3)   # (dim, 2*dim, 3, 3)
    p["convsp_b"] = jax.random.normal(keys[3], (dim,), jnp.float32) * 0.02
    p["conv1_w"] = quaternion_conv_weight(keys[4], dim, dim, 1)[:, :, 0, 0].T  # (in, out)
    p["conv1_b"] = jax.random.normal(keys[5], (dim,), jnp.float32) * 0.02
    return p


# ----------------------------------------------------------------------------
# pure-XLA reference (structural self-check only; f32 HIGHEST precision)
# ----------------------------------------------------------------------------
def _ref_forward(x, p):
    dn = ("NCHW", "OIHW", "NCHW")
    hi = lax.Precision.HIGHEST
    a = lax.conv_general_dilated(x, p["conv0_w"], (1, 1), [(1, 1), (1, 1)],
                                 rhs_dilation=(1, 1), dimension_numbers=dn,
                                 precision=hi)
    a = a + p["conv0_b"][None, :, None, None]
    acat = jnp.concatenate([a, a], axis=1)
    s = lax.conv_general_dilated(acat, p["convsp_w"], (1, 1), [(3, 3), (3, 3)],
                                 rhs_dilation=(3, 3), dimension_numbers=dn,
                                 precision=hi)
    s = s + p["convsp_b"][None, :, None, None]
    c1 = jnp.einsum("nchw,cd->ndhw", s, p["conv1_w"], precision=hi)
    c1 = c1 + p["conv1_b"][None, :, None, None]
    return x * c1


# ----------------------------------------------------------------------------
if __name__ == "__main__":
    key = jax.random.PRNGKey(0)
    k_x, k_p = jax.random.split(key)
    dim, N, H, W = 8, 2, 16, 16          # dim must be divisible by 4 (quaternion)
    x = jax.random.normal(k_x, (N, dim, H, W), jnp.float32)
    params = init_params(k_p, dim)

    fwd = jax.jit(attention_module_forward)
    y = fwd(x, params)
    jax.block_until_ready(y)

    assert y.shape == x.shape
    assert bool(jnp.all(jnp.isfinite(y)))

    # loose structural check vs XLA f32 reference (kernel uses bf16 MXU operands)
    y_ref = _ref_forward(x, params)
    rel = float(jnp.max(jnp.abs(y - y_ref)) / (jnp.max(jnp.abs(y_ref)) + 1e-6))
    assert rel < 5e-2, f"mismatch vs reference: rel={rel}"

    print("KERNEL_OK")
</pallas_src>

<mosaic_0001>
module attributes {stable_mosaic.version = 11 : i64} {
  func.func @_fused_attn_kernel(%arg0: i32, %arg1: memref<1x576x8xbf16, #tpu.memory_space<vmem>>, %arg2: memref<384x1xf32, #tpu.memory_space<vmem>>, %arg3: memref<3x24x8xbf16, #tpu.memory_space<vmem>>, %arg4: memref<1x8xf32, #tpu.memory_space<vmem>>, %arg5: memref<3x24x8xbf16, #tpu.memory_space<vmem>>, %arg6: memref<1x8xf32, #tpu.memory_space<vmem>>, %arg7: memref<8x8xbf16, #tpu.memory_space<vmem>>, %arg8: memref<1x8xf32, #tpu.memory_space<vmem>>, %arg9: memref<1x16x16x8xf32, #tpu.memory_space<vmem>>, %arg10: memref<400x24xbf16, #tpu.memory_space<vmem>>, %arg11: memref<576x8xbf16, #tpu.memory_space<vmem>>, %arg12: memref<392x24xbf16, #tpu.memory_space<vmem>>) attributes {dimension_semantics = [#tpu.dimension_semantics<parallel>], iteration_bounds = array<i64: 2>, scalar_prefetch = 0 : i64, scratch_operands = 3 : i64, tpu.core_type = #tpu.core_type<tc>, window_params = [{transform_indices = @transform_0, window_bounds = array<i64: 1, 576, 8>}, {pipeline_mode = #tpu.pipeline_mode<synchronous>, transform_indices = @transform_1, window_bounds = array<i64: 384, 1>}, {pipeline_mode = #tpu.pipeline_mode<synchronous>, transform_indices = @transform_2, window_bounds = array<i64: 3, 24, 8>}, {pipeline_mode = #tpu.pipeline_mode<synchronous>, transform_indices = @transform_3, window_bounds = array<i64: 1, 8>}, {pipeline_mode = #tpu.pipeline_mode<synchronous>, transform_indices = @transform_4, window_bounds = array<i64: 3, 24, 8>}, {pipeline_mode = #tpu.pipeline_mode<synchronous>, transform_indices = @transform_5, window_bounds = array<i64: 1, 8>}, {pipeline_mode = #tpu.pipeline_mode<synchronous>, transform_indices = @transform_6, window_bounds = array<i64: 8, 8>}, {pipeline_mode = #tpu.pipeline_mode<synchronous>, transform_indices = @transform_7, window_bounds = array<i64: 1, 8>}, {transform_indices = @transform_8, window_bounds = array<i64: 1, 16, 16, 8>}]} {
    %c0 = arith.constant 0 : index
    %c64 = arith.constant 64 : index
    %c0_0 = arith.constant 0 : index
    %0 = vector.load %arg1[%c0, %c64, %c0_0] : memref<1x576x8xbf16, #tpu.memory_space<vmem>>, vector<1x400x8xbf16>
    %1 = vector.shape_cast %0 : vector<1x400x8xbf16> to vector<400x8xbf16>
    %c0_1 = arith.constant 0 : index
    %c88 = arith.constant 88 : index
    %c0_2 = arith.constant 0 : index
    %2 = vector.load %arg1[%c0_1, %c88, %c0_2] : memref<1x576x8xbf16, #tpu.memory_space<vmem>>, vector<1x400x8xbf16>
    %3 = vector.shape_cast %2 : vector<1x400x8xbf16> to vector<400x8xbf16>
    %c0_3 = arith.constant 0 : index
    %c112 = arith.constant 112 : index
    %c0_4 = arith.constant 0 : index
    %4 = vector.load %arg1[%c0_3, %c112, %c0_4] : memref<1x576x8xbf16, #tpu.memory_space<vmem>>, vector<1x400x8xbf16>
    %5 = vector.shape_cast %4 : vector<1x400x8xbf16> to vector<400x8xbf16>
    %6 = tpu.concatenate %1, %3, %5 in 1 : vector<400x8xbf16>, vector<400x8xbf16>, vector<400x8xbf16> -> vector<400x24xbf16>
    %c0_5 = arith.constant 0 : index
    %c0_6 = arith.constant 0 : index
    %7 = vector.load %arg10[%c0_5, %c0_6] : memref<400x24xbf16, #tpu.memory_space<vmem>>, vector<400x24xbf16>
    tpu.vector_store %arg10[%c0_5, %c0_6], %6 {strides = array<i32>} : memref<400x24xbf16, #tpu.memory_space<vmem>>, vector<400x24xbf16>,
    %c7 = arith.constant 7 : index
    %c0_7 = arith.constant 0 : index
    %8 = vector.load %arg10[%c7, %c0_7] : memref<400x24xbf16, #tpu.memory_space<vmem>>, vector<384x24xbf16>
    %c0_8 = arith.constant 0 : index
    %c0_9 = arith.constant 0 : index
    %c0_10 = arith.constant 0 : index
    %9 = vector.load %arg3[%c0_8, %c0_9, %c0_10] : memref<3x24x8xbf16, #tpu.memory_space<vmem>>, vector<1x24x8xbf16>
    %10 = vector.shape_cast %9 : vector<1x24x8xbf16> to vector<24x8xbf16>
    %cst = arith.constant dense<0.000000e+00> : vector<384x8xf32>
    %11 = tpu.matmul %8, %10, %cst {dimension_numbers = #tpu.dot_dimension_numbers<[1], [0], [0], [1], [0, 0, 1, 1], [], []>} : vector<384x24xbf16>, vector<24x8xbf16>, vector<384x8xf32> -> vector<384x8xf32>
    %c8 = arith.constant 8 : index
    %c0_11 = arith.constant 0 : index
    %12 = vector.load %arg10[%c8, %c0_11] : memref<400x24xbf16, #tpu.memory_space<vmem>>, vector<384x24xbf16>
    %c1 = arith.constant 1 : index
    %c0_12 = arith.constant 0 : index
    %c0_13 = arith.constant 0 : index
    %13 = vector.load %arg3[%c1, %c0_12, %c0_13] : memref<3x24x8xbf16, #tpu.memory_space<vmem>>, vector<1x24x8xbf16>
    %14 = vector.shape_cast %13 : vector<1x24x8xbf16> to vector<24x8xbf16>
    %cst_14 = arith.constant dense<0.000000e+00> : vector<384x8xf32>
    %15 = tpu.matmul %12, %14, %cst_14 {dimension_numbers = #tpu.dot_dimension_numbers<[1], [0], [0], [1], [0, 0, 1, 1], [], []>} : vector<384x24xbf16>, vector<24x8xbf16>, vector<384x8xf32> -> vector<384x8xf32>
    %16 = arith.addf %11, %15 : vector<384x8xf32>
    %c9 = arith.constant 9 : index
    %c0_15 = arith.constant 0 : index
    %17 = vector.load %arg10[%c9, %c0_15] : memref<400x24xbf16, #tpu.memory_space<vmem>>, vector<384x24xbf16>
    %c2 = arith.constant 2 : index
    %c0_16 = arith.constant 0 : index
    %c0_17 = arith.constant 0 : index
    %18 = vector.load %arg3[%c2, %c0_16, %c0_17] : memref<3x24x8xbf16, #tpu.memory_space<vmem>>, vector<1x24x8xbf16>
    %19 = vector.shape_cast %18 : vector<1x24x8xbf16> to vector<24x8xbf16>
    %cst_18 = arith.constant dense<0.000000e+00> : vector<384x8xf32>
    %20 = tpu.matmul %17, %19, %cst_18 {dimension_numbers = #tpu.dot_dimension_numbers<[1], [0], [0], [1], [0, 0, 1, 1], [], []>} : vector<384x24xbf16>, vector<24x8xbf16>, vector<384x8xf32> -> vector<384x8xf32>
    %21 = arith.addf %16, %20 : vector<384x8xf32>
    %c0_19 = arith.constant 0 : index
    %c0_20 = arith.constant 0 : index
    %22 = vector.load %arg4[%c0_19, %c0_20] : memref<1x8xf32, #tpu.memory_space<vmem>>, vector<1x8xf32>
    %23 = vector.broadcast %22 : vector<1x8xf32> to vector<384x8xf32>
    %24 = arith.addf %21, %23 : vector<384x8xf32>
    %c0_21 = arith.constant 0 : index
    %c0_22 = arith.constant 0 : index
    %25 = vector.load %arg2[%c0_21, %c0_22] : memref<384x1xf32, #tpu.memory_space<vmem>>, vector<384x1xf32>
    %26 = vector.broadcast %25 : vector<384x1xf32> to vector<384x8xf32>
    %27 = arith.mulf %24, %26 : vector<384x8xf32>
    %cst_23 = arith.constant 0.000000e+00 : bf16
    %28 = vector.broadcast %cst_23 : bf16 to vector<576x8xbf16>
    %c0_24 = arith.constant 0 : index
    %c0_25 = arith.constant 0 : index
    %29 = vector.load %arg11[%c0_24, %c0_25] : memref<576x8xbf16, #tpu.memory_space<vmem>>, vector<576x8xbf16>
    tpu.vector_store %arg11[%c0_24, %c0_25], %28 {strides = array<i32>} : memref<576x8xbf16, #tpu.memory_space<vmem>>, vector<576x8xbf16>,
    %30 = arith.truncf %27 : vector<384x8xf32> to vector<384x8xbf16>
    %c96 = arith.constant 96 : index
    %c0_26 = arith.constant 0 : index
    %31 = vector.load %arg11[%c96, %c0_26] : memref<576x8xbf16, #tpu.memory_space<vmem>>, vector<384x8xbf16>
    tpu.vector_store %arg11[%c96, %c0_26], %30 {strides = array<i32>} : memref<576x8xbf16, #tpu.memory_space<vmem>>, vector<384x8xbf16>,
    %c24 = arith.constant 24 : index
    %c0_27 = arith.constant 0 : index
    %32 = vector.load %arg11[%c24, %c0_27] : memref<576x8xbf16, #tpu.memory_space<vmem>>, vector<392x8xbf16>
    %c96_28 = arith.constant 96 : index
    %c0_29 = arith.constant 0 : index
    %33 = vector.load %arg11[%c96_28, %c0_29] : memref<576x8xbf16, #tpu.memory_space<vmem>>, vector<392x8xbf16>
    %c168 = arith.constant 168 : index
    %c0_30 = arith.constant 0 : index
    %34 = vector.load %arg11[%c168, %c0_30] : memref<576x8xbf16, #tpu.memory_space<vmem>>, vector<392x8xbf16>
    %35 = tpu.concatenate %32, %33, %34 in 1 : vector<392x8xbf16>, vector<392x8xbf16>, vector<392x8xbf16> -> vector<392x24xbf16>
    %c0_31 = arith.constant 0 : index
    %c0_32 = arith.constant 0 : index
    %36 = vector.load %arg12[%c0_31, %c0_32] : memref<392x24xbf16, #tpu.memory_space<vmem>>, vector<392x24xbf16>
    tpu.vector_store %arg12[%c0_31, %c0_32], %35 {strides = array<i32>} : memref<392x24xbf16, #tpu.memory_space<vmem>>, vector<392x24xbf16>,
    %c0_33 = arith.constant 0 : index
    %c0_34 = arith.constant 0 : index
    %37 = vector.load %arg12[%c0_33, %c0_34] : memref<392x24xbf16, #tpu.memory_space<vmem>>, vector<384x24xbf16>
    %c0_35 = arith.constant 0 : index
    %c0_36 = arith.constant 0 : index
    %c0_37 = arith.constant 0 : index
    %38 = vector.load %arg5[%c0_35, %c0_36, %c0_37] : memref<3x24x8xbf16, #tpu.memory_space<vmem>>, vector<1x24x8xbf16>
    %39 = vector.shape_cast %38 : vector<1x24x8xbf16> to vector<24x8xbf16>
    %cst_38 = arith.constant dense<0.000000e+00> : vector<384x8xf32>
    %40 = tpu.matmul %37, %39, %cst_38 {dimension_numbers = #tpu.dot_dimension_numbers<[1], [0], [0], [1], [0, 0, 1, 1], [], []>} : vector<384x24xbf16>, vector<24x8xbf16>, vector<384x8xf32> -> vector<384x8xf32>
    %c3 = arith.constant 3 : index
    %c0_39 = arith.constant 0 : index
    %41 = vector.load %arg12[%c3, %c0_39] : memref<392x24xbf16, #tpu.memory_space<vmem>>, vector<384x24xbf16>
    %c1_40 = arith.constant 1 : index
    %c0_41 = arith.constant 0 : index
    %c0_42 = arith.constant 0 : index
    %42 = vector.load %arg5[%c1_40, %c0_41, %c0_42] : memref<3x24x8xbf16, #tpu.memory_space<vmem>>, vector<1x24x8xbf16>
    %43 = vector.shape_cast %42 : vector<1x24x8xbf16> to vector<24x8xbf16>
    %cst_43 = arith.constant dense<0.000000e+00> : vector<384x8xf32>
    %44 = tpu.matmul %41, %43, %cst_43 {dimension_numbers = #tpu.dot_dimension_numbers<[1], [0], [0], [1], [0, 0, 1, 1], [], []>} : vector<384x24xbf16>, vector<24x8xbf16>, vector<384x8xf32> -> vector<384x8xf32>
    %45 = arith.addf %40, %44 : vector<384x8xf32>
    %c6 = arith.constant 6 : index
    %c0_44 = arith.constant 0 : index
    %46 = vector.load %arg12[%c6, %c0_44] : memref<392x24xbf16, #tpu.memory_space<vmem>>, vector<384x24xbf16>
    %c2_45 = arith.constant 2 : index
    %c0_46 = arith.constant 0 : index
    %c0_47 = arith.constant 0 : index
    %47 = vector.load %arg5[%c2_45, %c0_46, %c0_47] : memref<3x24x8xbf16, #tpu.memory_space<vmem>>, vector<1x24x8xbf16>
    %48 = vector.shape_cast %47 : vector<1x24x8xbf16> to vector<24x8xbf16>
    %cst_48 = arith.constant dense<0.000000e+00> : vector<384x8xf32>
    %49 = tpu.matmul %46, %48, %cst_48 {dimension_numbers = #tpu.dot_dimension_numbers<[1], [0], [0], [1], [0, 0, 1, 1], [], []>} : vector<384x24xbf16>, vector<24x8xbf16>, vector<384x8xf32> -> vector<384x8xf32>
    %50 = arith.addf %45, %49 : vector<384x8xf32>
    %c0_49 = arith.constant 0 : index
    %c0_50 = arith.constant 0 : index
    %51 = vector.load %arg6[%c0_49, %c0_50] : memref<1x8xf32, #tpu.memory_space<vmem>>, vector<1x8xf32>
    %52 = vector.broadcast %51 : vector<1x8xf32> to vector<384x8xf32>
    %53 = arith.addf %50, %52 : vector<384x8xf32>
    %54 = arith.truncf %53 : vector<384x8xf32> to vector<384x8xbf16>
    %c0_51 = arith.constant 0 : index
    %c0_52 = arith.constant 0 : index
    %55 = vector.load %arg7[%c0_51, %c0_52] : memref<8x8xbf16, #tpu.memory_space<vmem>>, vector<8x8xbf16>
    %cst_53 = arith.constant dense<0.000000e+00> : vector<384x8xf32>
    %56 = tpu.matmul %54, %55, %cst_53 {dimension_numbers = #tpu.dot_dimension_numbers<[1], [0], [0], [1], [0, 0, 1, 1], [], []>} : vector<384x8xbf16>, vector<8x8xbf16>, vector<384x8xf32> -> vector<384x8xf32>
    %c0_54 = arith.constant 0 : index
    %c0_55 = arith.constant 0 : index
    %57 = vector.load %arg8[%c0_54, %c0_55] : memref<1x8xf32, #tpu.memory_space<vmem>>, vector<1x8xf32>
    %58 = vector.broadcast %57 : vector<1x8xf32> to vector<384x8xf32>
    %59 = arith.addf %56, %58 : vector<384x8xf32>
    %c0_56 = arith.constant 0 : index
    %c99 = arith.constant 99 : index
    %c0_57 = arith.constant 0 : index
    %60 = vector.load %arg1[%c0_56, %c99, %c0_57] : memref<1x576x8xbf16, #tpu.memory_space<vmem>>, vector<1x384x8xbf16>
    %61 = vector.shape_cast %60 : vector<1x384x8xbf16> to vector<384x8xbf16>
    %62 = arith.extf %61 : vector<384x8xbf16> to vector<384x8xf32>
    %63 = arith.mulf %62, %59 : vector<384x8xf32>
    %64 = vector.shape_cast %63 : vector<384x8xf32> to vector<16x24x8xf32>
    %65 = vector.extract_strided_slice %64 {offsets = [0, 0, 0], sizes = [16, 16, 8], strides = [1, 1, 1]} : vector<16x24x8xf32> to vector<16x16x8xf32>
    %c0_58 = arith.constant 0 : index
    %c0_59 = arith.constant 0 : index
    %c0_60 = arith.constant 0 : index
    %c0_61 = arith.constant 0 : index
    %66 = vector.load %arg9[%c0_58, %c0_59, %c0_60, %c0_61] : memref<1x16x16x8xf32, #tpu.memory_space<vmem>>, vector<1x16x16x8xf32>
    %67 = vector.shape_cast %66 : vector<1x16x16x8xf32> to vector<16x16x8xf32>
    %68 = vector.shape_cast %65 : vector<16x16x8xf32> to vector<1x16x16x8xf32>
    tpu.vector_store %arg9[%c0_58, %c0_59, %c0_60, %c0_61], %68 {strides = array<i32>} : memref<1x16x16x8xf32, #tpu.memory_space<vmem>>, vector<1x16x16x8xf32>,
    return
  }
  func.func @transform_0(%arg0: i32) -> (i32, i32, i32) {
    %c0_i32 = arith.constant 0 : i32
    %c0_i32_0 = arith.constant 0 : i32
    %c0_i32_1 = arith.constant 0 : i32
    return %arg0, %c0_i32, %c0_i32_0 : i32, i32, i32
  }
  func.func @transform_1(%arg0: i32) -> (i32, i32) {
    %c0_i32 = arith.constant 0 : i32
    %c0_i32_0 = arith.constant 0 : i32
    %c0_i32_1 = arith.constant 0 : i32
    return %c0_i32, %c0_i32_0 : i32, i32
  }
  func.func @transform_2(%arg0: i32) -> (i32, i32, i32) {
    %c0_i32 = arith.constant 0 : i32
    %c0_i32_0 = arith.constant 0 : i32
    %c0_i32_1 = arith.constant 0 : i32
    %c0_i32_2 = arith.constant 0 : i32
    return %c0_i32, %c0_i32_0, %c0_i32_1 : i32, i32, i32
  }
  func.func @transform_3(%arg0: i32) -> (i32, i32) {
    %c0_i32 = arith.constant 0 : i32
    %c0_i32_0 = arith.constant 0 : i32
    %c0_i32_1 = arith.constant 0 : i32
    return %c0_i32, %c0_i32_0 : i32, i32
  }
  func.func @transform_4(%arg0: i32) -> (i32, i32, i32) {
    %c0_i32 = arith.constant 0 : i32
    %c0_i32_0 = arith.constant 0 : i32
    %c0_i32_1 = arith.constant 0 : i32
    %c0_i32_2 = arith.constant 0 : i32
    return %c0_i32, %c0_i32_0, %c0_i32_1 : i32, i32, i32
  }
  func.func @transform_5(%arg0: i32) -> (i32, i32) {
    %c0_i32 = arith.constant 0 : i32
    %c0_i32_0 = arith.constant 0 : i32
    %c0_i32_1 = arith.constant 0 : i32
    return %c0_i32, %c0_i32_0 : i32, i32
  }
  func.func @transform_6(%arg0: i32) -> (i32, i32) {
    %c0_i32 = arith.constant 0 : i32
    %c0_i32_0 = arith.constant 0 : i32
    %c0_i32_1 = arith.constant 0 : i32
    return %c0_i32, %c0_i32_0 : i32, i32
  }
  func.func @transform_7(%arg0: i32) -> (i32, i32) {
    %c0_i32 = arith.constant 0 : i32
    %c0_i32_0 = arith.constant 0 : i32
    %c0_i32_1 = arith.constant 0 : i32
    return %c0_i32, %c0_i32_0 : i32, i32
  }
  func.func @transform_8(%arg0: i32) -> (i32, i32, i32, i32) {
    %c0_i32 = arith.constant 0 : i32
    %c0_i32_0 = arith.constant 0 : i32
    %c0_i32_1 = arith.constant 0 : i32
    %c0_i32_2 = arith.constant 0 : i32
    return %arg0, %c0_i32, %c0_i32_0, %c0_i32_1 : i32, i32, i32, i32
  }
}

</mosaic_0001>

<llo_original>
// kernel: attention_module_forward.1
$region0: #{attention_module_forward.1}
  #allocation0 [shape = 'u32[]', space=smem, size = 0x4, offset = 0x4, fixed_abs, tag = 'smem constant byte address 0x4 - core index']
  #allocation1 [shape = 'u32[144,128]{1,0:T(1,128)}', space=vmem, size = 0x12000, scoped, tag = 'internal scratch']
  #allocation2 [shape = 'bf16[400,24]{1,0:T(16,128)(2,1)}', space=vmem, size = 0x19000, scoped, tag = 'scratch operand']
  #allocation3 [shape = 'bf16[576,8]{1,0:T(16,128)(2,1)}', space=vmem, size = 0x24000, scoped, tag = 'scratch operand']
  #allocation4 [shape = 'bf16[392,24]{1,0:T(8,128)(2,1)}', space=vmem, size = 0x18800, scoped, tag = 'scratch operand']
  %s0 = inlined_call_operand.hbm [shape: bf16[2,576,8], index: 0, kind: input, shape index: {}]
  %s1 = inlined_call_operand.hbm [shape: f32[384,1], index: 1, kind: input, shape index: {}]
  %s2 = inlined_call_operand.hbm [shape: bf16[3,24,8], index: 2, kind: input, shape index: {}]
  %s3 = inlined_call_operand.hbm [shape: f32[1,8], index: 3, kind: input, shape index: {}]
  %s4 = inlined_call_operand.hbm [shape: bf16[3,24,8], index: 4, kind: input, shape index: {}]
  %s5 = inlined_call_operand.hbm [shape: f32[1,8], index: 5, kind: input, shape index: {}]
  %s6 = inlined_call_operand.hbm [shape: bf16[8,8], index: 6, kind: input, shape index: {}]
  %s7 = inlined_call_operand.hbm [shape: f32[1,8], index: 7, kind: input, shape index: {}]
  %s8 = inlined_call_operand.hbm [shape: f32[2,16,16,8], index: 8, kind: output, shape index: {}]
  %s9 = sld [smem:[#allocation0]]
  $region97: #{attention_module_forward.1} parent=0
    _
  %s11 = ssub.s32 1, %s9
  %s12 = scalar_select 0, %s11, %s9
  $region1: #{attention_module_forward.1} parent=0
    #allocation5 [shape = 'u8[294912]{0}', space=vmem, size = 0x48000, scoped, tag = 'input window, operand 0']
    #allocation6 [shape = 's32[2]{0}', space=sflag, size = 0x8, scoped, tag = 'scoped memory for attention_module_forward.1']
    #allocation7 [shape = 's32[2]{0}', space=sflag, size = 0x8, scoped, tag = 'scoped memory for attention_module_forward.1']
    #allocation8 [shape = 'u8[196608]{0}', space=vmem, size = 0x30000, scoped, tag = 'input window, operand 1, single buffered']
    #allocation9 [shape = 's32[1]{0}', space=sflag, size = 0x4, scoped, tag = 'scoped memory for attention_module_forward.1']
    #allocation10 [shape = 'u8[18432]{0}', space=vmem, size = 0x4800, scoped, tag = 'input window, operand 2, single buffered']
    #allocation11 [shape = 'u8[512]{0}', space=vmem, size = 0x400, scoped, tag = 'input window, operand 3, single buffered']
    #allocation12 [shape = 's32[1]{0}', space=sflag, size = 0x4, scoped, tag = 'scoped memory for attention_module_forward.1']
    #allocation13 [shape = 'u8[18432]{0}', space=vmem, size = 0x4800, scoped, tag = 'input window, operand 4, single buffered']
    #allocation14 [shape = 'u8[512]{0}', space=vmem, size = 0x400, scoped, tag = 'input window, operand 5, single buffered']
    #allocation15 [shape = 's32[1]{0}', space=sflag, size = 0x4, scoped, tag = 'scoped memory for attention_module_forward.1']
    #allocation16 [shape = 'u8[2048]{0}', space=vmem, size = 0x800, scoped, tag = 'input window, operand 6, single buffered']
    #allocation17 [shape = 'u8[512]{0}', space=vmem, size = 0x400, scoped, tag = 'input window, operand 7, single buffered']
    #allocation18 [shape = 's32[1]{0}', space=sflag, size = 0x4, scoped, tag = 'scoped memory for attention_module_forward.1']
    #allocation19 [shape = 'u8[262144]{0}', space=vmem, size = 0x40000, scoped, tag = 'output window, operand 0']
    %13 = vsyncpa [#allocation6], 0
    %s14 = scalar_lea.sflag [#allocation6], 1
    %15 = vsyncpa %s14, 0
    %16 = vsyncpa [#allocation9], 0
    %17 = vsyncpa [#allocation12], 0
    %18 = vsyncpa [#allocation15], 0
    %19 = vsyncpa [#allocation18], 0
    %20 = vsyncpa [#allocation7], 0
    %s21 = scalar_lea.sflag [#allocation7], 1
    %22 = vsyncpa %s21, 0
    loop: start=0, step=1, limit=4
    $region2: #{attention_module_forward.1} parent=1 // loop_pre_header
      _
    $region3: #{attention_module_forward.1} parent=1 // loop_header
      %s24 = sphi 0, %s28
      %p25 = scmp.ge.s32.totalorder %s24, 4
      %s34 = sphi 0, %s36
      %s37 = sphi 0, %s34
      %s38 = sphi 0, %s37
      %s54 = sphi 0, %s38
      %s58 = sphi 0, %s58
      %s60 = sphi 0, %s58
      %s61 = sphi 0, %s60
      %s75 = sphi 0, %s61
      %s79 = sphi 0, %s79
      %s81 = sphi 0, %s79
      %s82 = sphi 0, %s81
      %s96 = sphi 0, %s82
      %s100 = sphi 0, %s100
      %s102 = sphi 0, %s100
      %s103 = sphi 0, %s102
      %s117 = sphi 0, %s103
      %s121 = sphi 0, %s121
      %s123 = sphi 0, %s121
      %s124 = sphi 0, %s123
      %s138 = sphi 0, %s124
      %s142 = sphi 0, %s142
      %s144 = sphi 0, %s142
      %s145 = sphi 0, %s144
      %s159 = sphi 0, %s145
      %s163 = sphi 0, %s163
      %s165 = sphi 0, %s163
      %s166 = sphi 0, %s165
      %s180 = sphi 0, %s166
      %s184 = sphi 0, %s184
      %s186 = sphi 0, %s184
      %s187 = sphi 0, %s186
      %s201 = sphi 0, %s187
      %s207 = sphi 0, %s209
      %s210 = sphi 0, %s207
      %s211 = sphi 0, %s210
      %s227 = sphi 0, %s211
    $region4: #{attention_module_forward.1} parent=1 // loop_header_branch
      %27 = sbr.rel (%p25) target = $region8
    $region5: #{attention_module_forward.1} parent=1 // loop_body
      %s29 = ssub.s32 %s24, 1
      %s30 = ssub.s32 %s24, 2
      %s31 = sadd.s32 %s24, 1
      %s32 = ssub.s32 %s24, %s31
      %p33 = scmp.eq.s32.totalorder %s32, 0
      %s35 = sadd.s32 %s34, 1
      %s36 = scalar_select %p33, %s34, %s35
      %p39 = pneg %p33
      %p40 = scmp.eq.s32.totalorder %s24, 1
      %p41 = por %p39, %p40
      %p42 = scmp.ne.s32.totalorder %s34, %s37
      %p43 = scmp.eq.s32.totalorder %s24, 0
      %p44 = por %p42, %p43
      %p45 = scmp.ne.s32.totalorder %s34, %s37
      %p46 = scmp.eq.s32.totalorder %s29, 1
      %p47 = por %p45, %p46
      %p48 = scmp.ne.s32.totalorder %s37, %s38
      %p49 = scmp.eq.s32.totalorder %s29, 0
      %p50 = por %p48, %p49
      %p51 = scmp.ne.s32.totalorder %s37, %s38
      %p52 = scmp.eq.s32.totalorder %s30, 1
      %p53 = por %p51, %p52
      %p55 = scmp.ne.s32.totalorder %s38, %s54
      %p56 = scmp.eq.s32.totalorder %s30, 0
      %p57 = por %p55, %p56
      %s59 = sadd.s32 %s58, 1
      %p62 = scmp.eq.s32.totalorder %s24, 1
      %p63 = scmp.ne.s32.totalorder %s58, %s60
      %p64 = scmp.eq.s32.totalorder %s24, 0
      %p65 = por %p63, %p64
      %p66 = scmp.ne.s32.totalorder %s58, %s60
      %p67 = scmp.eq.s32.totalorder %s29, 1
      %p68 = por %p66, %p67
      %p69 = scmp.ne.s32.totalorder %s60, %s61
      %p70 = scmp.eq.s32.totalorder %s29, 0
      %p71 = por %p69, %p70
      %p72 = scmp.ne.s32.totalorder %s60, %s61
      %p73 = scmp.eq.s32.totalorder %s30, 1
      %p74 = por %p72, %p73
      %p76 = scmp.ne.s32.totalorder %s61, %s75
      %p77 = scmp.eq.s32.totalorder %s30, 0
      %p78 = por %p76, %p77
      %s80 = sadd.s32 %s79, 1
      %p83 = scmp.eq.s32.totalorder %s24, 1
      %p84 = scmp.ne.s32.totalorder %s79, %s81
      %p85 = scmp.eq.s32.totalorder %s24, 0
      %p86 = por %p84, %p85
      %p87 = scmp.ne.s32.totalorder %s79, %s81
      %p88 = scmp.eq.s32.totalorder %s29, 1
      %p89 = por %p87, %p88
      %p90 = scmp.ne.s32.totalorder %s81, %s82
      %p91 = scmp.eq.s32.totalorder %s29, 0
      %p92 = por %p90, %p91
      %p93 = scmp.ne.s32.totalorder %s81, %s82
      %p94 = scmp.eq.s32.totalorder %s30, 1
      %p95 = por %p93, %p94
      %p97 = scmp.ne.s32.totalorder %s82, %s96
      %p98 = scmp.eq.s32.totalorder %s30, 0
      %p99 = por %p97, %p98
      %s101 = sadd.s32 %s100, 1
      %p104 = scmp.eq.s32.totalorder %s24, 1
      %p105 = scmp.ne.s32.totalorder %s100, %s102
      %p106 = scmp.eq.s32.totalorder %s24, 0
      %p107 = por %p105, %p106
      %p108 = scmp.ne.s32.totalorder %s100, %s102
      %p109 = scmp.eq.s32.totalorder %s29, 1
      %p110 = por %p108, %p109
      %p111 = scmp.ne.s32.totalorder %s102, %s103
      %p112 = scmp.eq.s32.totalorder %s29, 0
      %p113 = por %p111, %p112
      %p114 = scmp.ne.s32.totalorder %s102, %s103
      %p115 = scmp.eq.s32.totalorder %s30, 1
      %p116 = por %p114, %p115
      %p118 = scmp.ne.s32.totalorder %s103, %s117
      %p119 = scmp.eq.s32.totalorder %s30, 0
      %p120 = por %p118, %p119
      %s122 = sadd.s32 %s121, 1
      %p125 = scmp.eq.s32.totalorder %s24, 1
      %p126 = scmp.ne.s32.totalorder %s121, %s123
      %p127 = scmp.eq.s32.totalorder %s24, 0
      %p128 = por %p126, %p127
      %p129 = scmp.ne.s32.totalorder %s121, %s123
      %p130 = scmp.eq.s32.totalorder %s29, 1
      %p131 = por %p129, %p130
      %p132 = scmp.ne.s32.totalorder %s123, %s124
      %p133 = scmp.eq.s32.totalorder %s29, 0
      %p134 = por %p132, %p133
      %p135 = scmp.ne.s32.totalorder %s123, %s124
      %p136 = scmp.eq.s32.totalorder %s30, 1
      %p137 = por %p135, %p136
      %p139 = scmp.ne.s32.totalorder %s124, %s138
      %p140 = scmp.eq.s32.totalorder %s30, 0
      %p141 = por %p139, %p140
      %s143 = sadd.s32 %s142, 1
      %p146 = scmp.eq.s32.totalorder %s24, 1
      %p147 = scmp.ne.s32.totalorder %s142, %s144
      %p148 = scmp.eq.s32.totalorder %s24, 0
      %p149 = por %p147, %p148
      %p150 = scmp.ne.s32.totalorder %s142, %s144
      %p151 = scmp.eq.s32.totalorder %s29, 1
      %p152 = por %p150, %p151
      %p153 = scmp.ne.s32.totalorder %s144, %s145
      %p154 = scmp.eq.s32.totalorder %s29, 0
      %p155 = por %p153, %p154
      %p156 = scmp.ne.s32.totalorder %s144, %s145
      %p157 = scmp.eq.s32.totalorder %s30, 1
      %p158 = por %p156, %p157
      %p160 = scmp.ne.s32.totalorder %s145, %s159
      %p161 = scmp.eq.s32.totalorder %s30, 0
      %p162 = por %p160, %p161
      %s164 = sadd.s32 %s163, 1
      %p167 = scmp.eq.s32.totalorder %s24, 1
      %p168 = scmp.ne.s32.totalorder %s163, %s165
      %p169 = scmp.eq.s32.totalorder %s24, 0
      %p170 = por %p168, %p169
      %p171 = scmp.ne.s32.totalorder %s163, %s165
      %p172 = scmp.eq.s32.totalorder %s29, 1
      %p173 = por %p171, %p172
      %p174 = scmp.ne.s32.totalorder %s165, %s166
      %p175 = scmp.eq.s32.totalorder %s29, 0
      %p176 = por %p174, %p175
      %p177 = scmp.ne.s32.totalorder %s165, %s166
      %p178 = scmp.eq.s32.totalorder %s30, 1
      %p179 = por %p177, %p178
      %p181 = scmp.ne.s32.totalorder %s166, %s180
      %p182 = scmp.eq.s32.totalorder %s30, 0
      %p183 = por %p181, %p182
      %s185 = sadd.s32 %s184, 1
      %p188 = scmp.eq.s32.totalorder %s24, 1
      %p189 = scmp.ne.s32.totalorder %s184, %s186
      %p190 = scmp.eq.s32.totalorder %s24, 0
      %p191 = por %p189, %p190
      %p192 = scmp.ne.s32.totalorder %s184, %s186
      %p193 = scmp.eq.s32.totalorder %s29, 1
      %p194 = por %p192, %p193
      %p195 = scmp.ne.s32.totalorder %s186, %s187
      %p196 = scmp.eq.s32.totalorder %s29, 0
      %p197 = por %p195, %p196
      %p198 = scmp.ne.s32.totalorder %s186, %s187
      %p199 = scmp.eq.s32.totalorder %s30, 1
      %p200 = por %p198, %p199
      %p202 = scmp.ne.s32.totalorder %s187, %s201
      %p203 = scmp.eq.s32.totalorder %s30, 0
      %p204 = por %p202, %p203
      %s205 = ssub.s32 %s24, %s31
      %p206 = scmp.eq.s32.totalorder %s205, 0
      %s208 = sadd.s32 %s207, 1
      %s209 = scalar_select %p206, %s207, %s208
      %p212 = pneg %p206
      %p213 = scmp.eq.s32.totalorder %s24, 1
      %p214 = por %p212, %p213
      %p215 = scmp.ne.s32.totalorder %s207, %s210
      %p216 = scmp.eq.s32.totalorder %s24, 0
      %p217 = por %p215, %p216
      %p218 = scmp.ne.s32.totalorder %s207, %s210
      %p219 = scmp.eq.s32.totalorder %s29, 1
      %p220 = por %p218, %p219
      %p221 = scmp.ne.s32.totalorder %s210, %s211
      %p222 = scmp.eq.s32.totalorder %s29, 0
      %p223 = por %p221, %p222
      %p224 = scmp.ne.s32.totalorder %s210, %s211
      %p225 = scmp.eq.s32.totalorder %s30, 1
      %p226 = por %p224, %p225
      %p228 = scmp.ne.s32.totalorder %s211, %s227
      %p229 = scmp.eq.s32.totalorder %s30, 0
      %p230 = por %p228, %p229
      %p231 = scmp.le.s32.totalorder 1, %s24
      %p232 = scmp.lt.s32.totalorder %s24, 3
      %p233 = pnand %p231, %p232
      %p234 = pneg %p233
      // Predicated region
      $region9: #{attention_module_forward.1} parent=5 // pred_check
        _
      $region10: #{attention_module_forward.1} parent=5 // pred_check_branch
        %236 = sbr.rel (%p233) target = $region12
      $region11: #{attention_module_forward.1} parent=5 // pred_region
        %s237 = ssub.s32 %s24, 1
        // Predicated region
        $region13: #{attention_module_forward.1} parent=11 // pred_check
          %p238 = pneg %p71
        $region14: #{attention_module_forward.1} parent=11 // pred_check_branch
          %240 = sbr.rel (%p238) target = $region16
        $region15: #{attention_module_forward.1} parent=11 // pred_region
          %s242 = ssub.s32 6144, 6144
          %243 = vsyncadd [#allocation9], %s242
          %s244 = sshll.u32 [#allocation8], 4
          %s245 = int_to_ptr.vmem [resolvable:$true] %s244
          %250 = dma.hbm_to_vmem [thread:$0]  %s1, 6144, %s245, [#allocation9], 128, 128, 8
        $region16: #{attention_module_forward.1} parent=11 // pred_fallthru
          _
        // Predicated region
        $region17: #{attention_module_forward.1} parent=11 // pred_check
          %p251 = pneg %p92
        $region18: #{attention_module_forward.1} parent=11 // pred_check_branch
          %253 = sbr.rel (%p251) target = $region20
        $region19: #{attention_module_forward.1} parent=11 // pred_region
          %s255 = ssub.s32 576, 576
          %256 = vsyncadd [#allocation9], %s255
          %s257 = sshll.u32 [#allocation10], 4
          %s258 = int_to_ptr.vmem [resolvable:$true] %s257
          %263 = dma.hbm_to_vmem [thread:$0]  %s2, 576, %s258, [#allocation9], 64, 64, 4
        $region20: #{attention_module_forward.1} parent=11 // pred_fallthru
          _
        // Predicated region
        $region21: #{attention_module_forward.1} parent=11 // pred_check
          %p264 = pneg %p113
        $region22: #{attention_module_forward.1} parent=11 // pred_check_branch
          %266 = sbr.rel (%p264) target = $region24
        $region23: #{attention_module_forward.1} parent=11 // pred_region
          %s268 = ssub.s32 16, 16
          %269 = vsyncadd [#allocation12], %s268
          %s271 = sshll.u32 [#allocation11], 4
          %s272 = int_to_ptr.vmem [resolvable:$true] %s271
          %274 = dma.hbm_to_vmem [thread:$0]  %s3, 16, %s272, [#allocation12]
        $region24: #{attention_module_forward.1} parent=11 // pred_fallthru
          _
        // Predicated region
        $region25: #{attention_module_forward.1} parent=11 // pred_check
          %p275 = pneg %p134
        $region26: #{attention_module_forward.1} parent=11 // pred_check_branch
          %277 = sbr.rel (%p275) target = $region28
        $region27: #{attention_module_forward.1} parent=11 // pred_region
          %s279 = ssub.s32 576, 576
          %280 = vsyncadd [#allocation12], %s279
          %s281 = sshll.u32 [#allocation13], 4
          %s282 = int_to_ptr.vmem [resolvable:$true] %s281
          %287 = dma.hbm_to_vmem [thread:$0]  %s4, 576, %s282, [#allocation12], 64, 64, 4
        $region28: #{attention_module_forward.1} parent=11 // pred_fallthru
          _
        // Predicated region
        $region29: #{attention_module_forward.1} parent=11 // pred_check
          %p288 = pneg %p155
        $region30: #{attention_module_forward.1} parent=11 // pred_check_branch
          %290 = sbr.rel (%p288) target = $region32
        $region31: #{attention_module_forward.1} parent=11 // pred_region
          %s292 = ssub.s32 16, 16
          %293 = vsyncadd [#allocation15], %s292
          %s295 = sshll.u32 [#allocation14], 4
          %s296 = int_to_ptr.vmem [resolvable:$true] %s295
          %298 = dma.hbm_to_vmem [thread:$0]  %s5, 16, %s296, [#allocation15]
        $region32: #{attention_module_forward.1} parent=11 // pred_fallthru
          _
        // Predicated region
        $region33: #{attention_module_forward.1} parent=11 // pred_check
          %p299 = pneg %p176
        $region34: #{attention_module_forward.1} parent=11 // pred_check_branch
          %301 = sbr.rel (%p299) target = $region36
        $region35: #{attention_module_forward.1} parent=11 // pred_region
          %s303 = ssub.s32 64, 64
          %304 = vsyncadd [#allocation15], %s303
          %s306 = sshll.u32 [#allocation16], 4
          %s307 = int_to_ptr.vmem [resolvable:$true] %s306
          %309 = dma.hbm_to_vmem [thread:$0]  %s6, 64, %s307, [#allocation15]
        $region36: #{attention_module_forward.1} parent=11 // pred_fallthru
          _
        // Predicated region
        $region37: #{attention_module_forward.1} parent=11 // pred_check
          %p310 = pneg %p197
        $region38: #{attention_module_forward.1} parent=11 // pred_check_branch
          %312 = sbr.rel (%p310) target = $region40
        $region39: #{attention_module_forward.1} parent=11 // pred_region
          %s314 = ssub.s32 16, 16
          %315 = vsyncadd [#allocation18], %s314
          %s317 = sshll.u32 [#allocation17], 4
          %s318 = int_to_ptr.vmem [resolvable:$true] %s317
          %320 = dma.hbm_to_vmem [thread:$0]  %s7, 16, %s318, [#allocation18]
        $region40: #{attention_module_forward.1} parent=11 // pred_fallthru
          _
      $region12: #{attention_module_forward.1} parent=5 // pred_fallthru
        _
      %p321 = scmp.lt.s32.totalorder %s24, 2
      // Predicated region
      $region41: #{attention_module_forward.1} parent=5 // pred_check
        %p322 = pneg %p321
      $region42: #{attention_module_forward.1} parent=5 // pred_check_branch
        %324 = sbr.rel (%p322) target = $region44
      $region43: #{attention_module_forward.1} parent=5 // pred_region
        // Predicated region
        $region45: #{attention_module_forward.1} parent=43 // pred_check
          %p325 = pneg %p44
        $region46: #{attention_module_forward.1} parent=43 // pred_check_branch
          %327 = sbr.rel (%p325) target = $region48
        $region47: #{attention_module_forward.1} parent=43 // pred_region
          %s328 = sand.u32 %s34, 1
          %s329 = scalar_lea.sflag [#allocation6], %s328
          %s330 = sand.u32 %s34, 1
          %s331 = smul.addr %s330, 288
          %s332 = scalar_lea.vmem [#allocation5], %s331
          %s334 = ssub.s32 4608, 4608
          %335 = vsyncadd %s329, %s334
          %s336 = smul.addr %s24, 72
          %s337 = smul.addr %s336, 64
          %s338 = scalar_lea.hbm %s0, %s337
          %s339 = sshll.u32 %s332, 4
          %s340 = int_to_ptr.vmem [resolvable:$true] %s339
          %345 = dma.hbm_to_vmem [thread:$0]  %s338, 4608, %s340, %s329, 64, 64, 4
        $region48: #{attention_module_forward.1} parent=43 // pred_fallthru
          _
      $region44: #{attention_module_forward.1} parent=5 // pred_fallthru
        _
      %p346 = scmp.le.s32.totalorder 1, %s24
      %p347 = scmp.lt.s32.totalorder %s24, 3
      %p348 = pnand %p346, %p347
      %p349 = pneg %p348
      // Predicated region
      $region49: #{attention_module_forward.1} parent=5 // pred_check
        _
      $region50: #{attention_module_forward.1} parent=5 // pred_check_branch
        %351 = sbr.rel (%p348) target = $region52
      $region51: #{attention_module_forward.1} parent=5 // pred_region
        %s352 = ssub.s32 %s24, 1
        %s353 = sand.u32 %s37, 1
        %s354 = scalar_lea.sflag [#allocation6], %s353
        %s355 = sand.u32 %s37, 1
        %s356 = smul.addr %s355, 288
        %s357 = scalar_lea.vmem [#allocation5], %s356
        // Predicated region
        $region53: #{attention_module_forward.1} parent=51 // pred_check
          %p358 = pneg %p50
        $region54: #{attention_module_forward.1} parent=51 // pred_check_branch
          %360 = sbr.rel (%p358) target = $region56
        $region55: #{attention_module_forward.1} parent=51 // pred_region
          %361 = dma.done %s354, 4608
        $region56: #{attention_module_forward.1} parent=51 // pred_fallthru
          _
        // Predicated region
        $region57: #{attention_module_forward.1} parent=51 // pred_check
          %p362 = pneg %p71
        $region58: #{attention_module_forward.1} parent=51 // pred_check_branch
          %364 = sbr.rel (%p362) target = $region60
        $region59: #{attention_module_forward.1} parent=51 // pred_region
          %365 = dma.done [#allocation9], 6144
        $region60: #{attention_module_forward.1} parent=51 // pred_fallthru
          _
        // Predicated region
        $region61: #{attention_module_forward.1} parent=51 // pred_check
          %p366 = pneg %p92
        $region62: #{attention_module_forward.1} parent=51 // pred_check_branch
          %368 = sbr.rel (%p366) target = $region64
        $region63: #{attention_module_forward.1} parent=51 // pred_region
          %369 = dma.done [#allocation9], 576
        $region64: #{attention_module_forward.1} parent=51 // pred_fallthru
          _
        // Predicated region
        $region65: #{attention_module_forward.1} parent=51 // pred_check
          %p370 = pneg %p113
        $region66: #{attention_module_forward.1} parent=51 // pred_check_branch
          %372 = sbr.rel (%p370) target = $region68
        $region67: #{attention_module_forward.1} parent=51 // pred_region
          %373 = dma.done [#allocation12], 16
        $region68: #{attention_module_forward.1} parent=51 // pred_fallthru
          _
        // Predicated region
        $region69: #{attention_module_forward.1} parent=51 // pred_check
          %p374 = pneg %p134
        $region70: #{attention_module_forward.1} parent=51 // pred_check_branch
          %376 = sbr.rel (%p374) target = $region72
        $region71: #{attention_module_forward.1} parent=51 // pred_region
          %377 = dma.done [#allocation12], 576
        $region72: #{attention_module_forward.1} parent=51 // pred_fallthru
          _
        // Predicated region
        $region73: #{attention_module_forward.1} parent=51 // pred_check
          %p378 = pneg %p155
        $region74: #{attention_module_forward.1} parent=51 // pred_check_branch
          %380 = sbr.rel (%p378) target = $region76
        $region75: #{attention_module_forward.1} parent=51 // pred_region
          %381 = dma.done [#allocation15], 16
        $region76: #{attention_module_forward.1} parent=51 // pred_fallthru
          _
        // Predicated region
        $region77: #{attention_module_forward.1} parent=51 // pred_check
          %p382 = pneg %p176
        $region78: #{attention_module_forward.1} parent=51 // pred_check_branch
          %384 = sbr.rel (%p382) target = $region80
        $region79: #{attention_module_forward.1} parent=51 // pred_region
          %385 = dma.done [#allocation15], 64
        $region80: #{attention_module_forward.1} parent=51 // pred_fallthru
          _
        // Predicated region
        $region81: #{attention_module_forward.1} parent=51 // pred_check
          %p386 = pneg %p197
        $region82: #{attention_module_forward.1} parent=51 // pred_check_branch
          %388 = sbr.rel (%p386) target = $region84
        $region83: #{attention_module_forward.1} parent=51 // pred_region
          %389 = dma.done [#allocation18], 16
        $region84: #{attention_module_forward.1} parent=51 // pred_fallthru
          _
        %s390 = sand.u32 %s37, 1
        %s391 = scalar_lea.sflag [#allocation6], %s390
        %s392 = sand.u32 %s37, 1
        %s393 = smul.addr %s392, 288
        %s394 = scalar_lea.vmem [#allocation5], %s393
        %p395 = pneg %p50
        %p396 = pneg %p47
        %p397 = pneg %p71
        %p398 = pneg %p68
        %p399 = pneg %p92
        %p400 = pneg %p89
        %p401 = pneg %p113
        %p402 = pneg %p110
        %p403 = pneg %p134
        %p404 = pneg %p131
        %p405 = pneg %p155
        %p406 = pneg %p152
        %p407 = pneg %p176
        %p408 = pneg %p173
        %p409 = pneg %p197
        %p410 = pneg %p194
        %p411 = pneg %p223
        %p412 = pneg %p220
        %s413 = sand.u32 %s210, 1
        %s414 = scalar_lea.sflag [#allocation7], %s413
        %s415 = sand.u32 %s210, 1
        %s416 = smul.addr %s415, 256
        %s417 = scalar_lea.vmem [#allocation19], %s416
        %v419 = vld [vmem:[%s357 + $0x20] sm:$0xf]
        %v420 = vld [vmem:[%s357 + $0x24] sm:$0xf]
        %v421 = vld [vmem:[%s357 + $0x28] sm:$0xf]
        %v422 = vld [vmem:[%s357 + $0x2c] sm:$0xf]
        %v423 = vld [vmem:[%s357 + $0x30] sm:$0xf]
        %v424 = vld [vmem:[%s357 + $0x34] sm:$0xf]
        %v425 = vld [vmem:[%s357 + $0x38] sm:$0xf]
        %v426 = vld [vmem:[%s357 + $0x3c] sm:$0xf]
        %v427 = vld [vmem:[%s357 + $0x40] sm:$0xf]
        %v428 = vld [vmem:[%s357 + $0x44] sm:$0xf]
        %v429 = vld [vmem:[%s357 + $0x48] sm:$0xf]
        %v430 = vld [vmem:[%s357 + $0x4c] sm:$0xf]
        %v431 = vld [vmem:[%s357 + $0x50] sm:$0xf]
        %v432 = vld [vmem:[%s357 + $0x54] sm:$0xf]
        %v433 = vld [vmem:[%s357 + $0x58] sm:$0xf]
        %v434 = vld [vmem:[%s357 + $0x5c] sm:$0xf]
        %v435 = vld [vmem:[%s357 + $0x60] sm:$0xf]
        %v436 = vld [vmem:[%s357 + $0x64] sm:$0xf]
        %v437 = vld [vmem:[%s357 + $0x68] sm:$0xf]
        %v438 = vld [vmem:[%s357 + $0x6c] sm:$0xf]
        %v439 = vld [vmem:[%s357 + $0x70] sm:$0xf]
        %v440 = vld [vmem:[%s357 + $0x74] sm:$0xf]
        %v441 = vld [vmem:[%s357 + $0x78] sm:$0xf]
        %v442 = vld [vmem:[%s357 + $0x7c] sm:$0xf]
        %v443 = vld [vmem:[%s357 + $0x80] sm:$0xf]
        %v444 = vld [vmem:[%s357 + $0x84] sm:$0xf]
        %v445 = vld [vmem:[%s357 + $0x88] sm:$0xf]
        %v446 = vld [vmem:[%s357 + $0x8c] sm:$0xf]
        %v447 = vld [vmem:[%s357 + $0x90] sm:$0xf]
        %v448 = vld [vmem:[%s357 + $0x94] sm:$0xf]
        %v449 = vld [vmem:[%s357 + $0x98] sm:$0xf]
        %v450 = vld [vmem:[%s357 + $0x9c] sm:$0xf]
        %v451 = vld [vmem:[%s357 + $0xa0] sm:$0xf]
        %v452 = vld [vmem:[%s357 + $0xa4] sm:$0xf]
        %v453 = vld [vmem:[%s357 + $0xa8] sm:$0xf]
        %v454 = vld [vmem:[%s357 + $0xac] sm:$0xf]
        %v455 = vld [vmem:[%s357 + $0xb0] sm:$0xf]
        %v456 = vld [vmem:[%s357 + $0xb4] sm:$0xf]
        %v457 = vld [vmem:[%s357 + $0xb8] sm:$0xf]
        %v458 = vld [vmem:[%s357 + $0xbc] sm:$0xf]
        %v459 = vld [vmem:[%s357 + $0xc0] sm:$0xf]
        %v460 = vld [vmem:[%s357 + $0xc4] sm:$0xf]
        %v461 = vld [vmem:[%s357 + $0xc8] sm:$0xf]
        %v462 = vld [vmem:[%s357 + $0xcc] sm:$0xf]
        %v463 = vld [vmem:[%s357 + $0xd0] sm:$0xf]
        %v464 = vld [vmem:[%s357 + $0xd4] sm:$0xf]
        %v465 = vld [vmem:[%s357 + $0xd8] sm:$0xf]
        %v466 = vld [vmem:[%s357 + $0xdc] sm:$0xf]
        %v467 = vld [vmem:[%s357 + $0xe0] sm:$0xf]
        %v468 = vld [vmem:[%s357 + $0xe4] sm:$0xf]
        %v469 = vld [vmem:[%s357 + $0xe8] sm:$0xf]
        %v470 = vld [vmem:[%s357 + $0xec] sm:$0xf]
        %v471 = vld [vmem:[%s357 + $0xf0] sm:$0xf]
        %v472 = vld [vmem:[%s357 + $0xf4] sm:$0xf]
        %v473 = vld [vmem:[%s357 + $0xf8] sm:$0xf]
        %v474 = vld [vmem:[%s357 + $0xfc] sm:$0xf]
        %v525 = vunpack.c.l.b16 %v419
        %v526 = vunpack.c.l.b16 %v420
        %v527 = vunpack.c.l.b16 %v421
        %v528 = vunpack.c.l.b16 %v422
        %v529 = vunpack.c.l.b16 %v423
        %v530 = vunpack.c.l.b16 %v424
        %v531 = vunpack.c.l.b16 %v425
        %v532 = vunpack.c.l.b16 %v426
        %v533 = vunpack.c.l.b16 %v427
        %v534 = vunpack.c.l.b16 %v428
        %v535 = vunpack.c.l.b16 %v429
        %v536 = vunpack.c.l.b16 %v430
        %v537 = vunpack.c.l.b16 %v431
        %v538 = vunpack.c.l.b16 %v432
        %v539 = vunpack.c.l.b16 %v433
        %v540 = vunpack.c.l.b16 %v434
        %v541 = vunpack.c.l.b16 %v435
        %v542 = vunpack.c.l.b16 %v436
        %v543 = vunpack.c.l.b16 %v437
        %v544 = vunpack.c.l.b16 %v438
        %v545 = vunpack.c.l.b16 %v439
        %v546 = vunpack.c.l.b16 %v440
        %v547 = vunpack.c.l.b16 %v441
        %v548 = vunpack.c.l.b16 %v442
        %v549 = vunpack.c.l.b16 %v443
        %v550 = vunpack.c.l.b16 %v444
        %v551 = vunpack.c.l.b16 %v445
        %v552 = vunpack.c.l.b16 %v446
        %v553 = vunpack.c.l.b16 %v447
        %v554 = vunpack.c.l.b16 %v448
        %v555 = vunpack.c.l.b16 %v449
        %v556 = vunpack.c.l.b16 %v450
        %v557 = vunpack.c.l.b16 %v451
        %v558 = vunpack.c.l.b16 %v452
        %v559 = vunpack.c.l.b16 %v453
        %v560 = vunpack.c.l.b16 %v454
        %v561 = vunpack.c.l.b16 %v455
        %v562 = vunpack.c.l.b16 %v456
        %v563 = vunpack.c.l.b16 %v457
        %v564 = vunpack.c.l.b16 %v458
        %v565 = vunpack.c.l.b16 %v459
        %v566 = vunpack.c.l.b16 %v460
        %v567 = vunpack.c.l.b16 %v461
        %v568 = vunpack.c.l.b16 %v462
        %v569 = vunpack.c.l.b16 %v463
        %v570 = vunpack.c.l.b16 %v464
        %v571 = vunpack.c.l.b16 %v465
        %v572 = vunpack.c.l.b16 %v466
        %v573 = vunpack.c.l.b16 %v467
        %v574 = vunpack.c.l.b16 %v468
        %v575 = vpack.c.b16 %v526, %v525
        %v576 = vpack.c.b16 %v528, %v527
        %v577 = vpack.c.b16 %v530, %v529
        %v578 = vpack.c.b16 %v532, %v531
        %v579 = vpack.c.b16 %v534, %v533
        %v580 = vpack.c.b16 %v536, %v535
        %v581 = vpack.c.b16 %v538, %v537
        %v582 = vpack.c.b16 %v540, %v539
        %v583 = vpack.c.b16 %v542, %v541
        %v584 = vpack.c.b16 %v544, %v543
        %v585 = vpack.c.b16 %v546, %v545
        %v586 = vpack.c.b16 %v548, %v547
        %v587 = vpack.c.b16 %v550, %v549
        %v588 = vpack.c.b16 %v552, %v551
        %v589 = vpack.c.b16 %v554, %v553
        %v590 = vpack.c.b16 %v556, %v555
        %v591 = vpack.c.b16 %v558, %v557
        %v592 = vpack.c.b16 %v560, %v559
        %v593 = vpack.c.b16 %v562, %v561
        %v594 = vpack.c.b16 %v564, %v563
        %v595 = vpack.c.b16 %v566, %v565
        %v596 = vpack.c.b16 %v568, %v567
        %v597 = vpack.c.b16 %v570, %v569
        %v598 = vpack.c.b16 %v572, %v571
        %v599 = vpack.c.b16 %v574, %v573
        %v603 = vunpack.c.l.b16 %v469
        %v604 = vunpack.c.l.b16 %v470
        %v605 = vunpack.c.l.b16 %v471
        %v606 = vpack.c.b16 %v529, %v528
        %v607 = vpack.c.b16 %v531, %v530
        %v608 = vpack.c.b16 %v533, %v532
        %v609 = vpack.c.b16 %v535, %v534
        %v610 = vpack.c.b16 %v537, %v536
        %v611 = vpack.c.b16 %v539, %v538
        %v612 = vpack.c.b16 %v541, %v540
        %v613 = vpack.c.b16 %v543, %v542
        %v614 = vpack.c.b16 %v545, %v544
        %v615 = vpack.c.b16 %v547, %v546
        %v616 = vpack.c.b16 %v549, %v548
        %v617 = vpack.c.b16 %v551, %v550
        %v618 = vpack.c.b16 %v553, %v552
        %v619 = vpack.c.b16 %v555, %v554
        %v620 = vpack.c.b16 %v557, %v556
        %v621 = vpack.c.b16 %v559, %v558
        %v622 = vpack.c.b16 %v561, %v560
        %v623 = vpack.c.b16 %v563, %v562
        %v624 = vpack.c.b16 %v565, %v564
        %v625 = vpack.c.b16 %v567, %v566
        %v626 = vpack.c.b16 %v569, %v568
        %v627 = vpack.c.b16 %v571, %v570
        %v628 = vpack.c.b16 %v573, %v572
        %v629 = vpack.c.b16 %v603, %v574
        %v630 = vpack.c.b16 %v605, %v604
        %631 = vrot.lane.b32.xlu0 %v606, 8
        %v632 = vpop.permute.xlu0 %631
        %633 = vrot.lane.b32.xlu0 %v607, 8
        %v634 = vpop.permute.xlu0 %633
        %635 = vrot.lane.b32.xlu0 %v608, 8
        %v636 = vpop.permute.xlu0 %635
        %637 = vrot.lane.b32.xlu0 %v609, 8
        %v638 = vpop.permute.xlu0 %637
        %639 = vrot.lane.b32.xlu0 %v610, 8
        %v640 = vpop.permute.xlu0 %639
        %641 = vrot.lane.b32.xlu0 %v611, 8
        %v642 = vpop.permute.xlu0 %641
        %643 = vrot.lane.b32.xlu0 %v612, 8
        %v644 = vpop.permute.xlu0 %643
        %645 = vrot.lane.b32.xlu0 %v613, 8
        %v646 = vpop.permute.xlu0 %645
        %647 = vrot.lane.b32.xlu0 %v614, 8
        %v648 = vpop.permute.xlu0 %647
        %649 = vrot.lane.b32.xlu0 %v615, 8
        %v650 = vpop.permute.xlu0 %649
        %651 = vrot.lane.b32.xlu0 %v616, 8
        %v652 = vpop.permute.xlu0 %651
        %653 = vrot.lane.b32.xlu0 %v617, 8
        %v654 = vpop.permute.xlu0 %653
        %655 = vrot.lane.b32.xlu0 %v618, 8
        %v656 = vpop.permute.xlu0 %655
        %657 = vrot.lane.b32.xlu0 %v619, 8
        %v658 = vpop.permute.xlu0 %657
        %659 = vrot.lane.b32.xlu0 %v620, 8
        %v660 = vpop.permute.xlu0 %659
        %661 = vrot.lane.b32.xlu0 %v621, 8
        %v662 = vpop.permute.xlu0 %661
        %663 = vrot.lane.b32.xlu0 %v622, 8
        %v664 = vpop.permute.xlu0 %663
        %665 = vrot.lane.b32.xlu0 %v623, 8
        %v666 = vpop.permute.xlu0 %665
        %667 = vrot.lane.b32.xlu0 %v624, 8
        %v668 = vpop.permute.xlu0 %667
        %669 = vrot.lane.b32.xlu0 %v625, 8
        %v670 = vpop.permute.xlu0 %669
        %671 = vrot.lane.b32.xlu0 %v626, 8
        %v672 = vpop.permute.xlu0 %671
        %673 = vrot.lane.b32.xlu0 %v627, 8
        %v674 = vpop.permute.xlu0 %673
        %675 = vrot.lane.b32.xlu0 %v628, 8
        %v676 = vpop.permute.xlu0 %675
        %677 = vrot.lane.b32.xlu0 %v629, 8
        %v678 = vpop.permute.xlu0 %677
        %679 = vrot.lane.b32.xlu0 %v630, 8
        %v680 = vpop.permute.xlu0 %679
        %v684 = vunpack.c.l.b16 %v472
        %v685 = vunpack.c.l.b16 %v473
        %v686 = vunpack.c.l.b16 %v474
        %v687 = vpack.c.b16 %v604, %v603
        %v688 = vpack.c.b16 %v684, %v605
        %v689 = vpack.c.b16 %v686, %v685
        %690 = vrot.lane.b32.xlu0 %v578, 16
        %v691 = vpop.permute.xlu0 %690
        %692 = vrot.lane.b32.xlu0 %v579, 16
        %v693 = vpop.permute.xlu0 %692
        %694 = vrot.lane.b32.xlu0 %v580, 16
        %v695 = vpop.permute.xlu0 %694
        %696 = vrot.lane.b32.xlu0 %v581, 16
        %v697 = vpop.permute.xlu0 %696
        %698 = vrot.lane.b32.xlu0 %v582, 16
        %v699 = vpop.permute.xlu0 %698
        %700 = vrot.lane.b32.xlu0 %v583, 16
        %v701 = vpop.permute.xlu0 %700
        %702 = vrot.lane.b32.xlu0 %v584, 16
        %v703 = vpop.permute.xlu0 %702
        %704 = vrot.lane.b32.xlu0 %v585, 16
        %v705 = vpop.permute.xlu0 %704
        %706 = vrot.lane.b32.xlu0 %v586, 16
        %v707 = vpop.permute.xlu0 %706
        %708 = vrot.lane.b32.xlu0 %v587, 16
        %v709 = vpop.permute.xlu0 %708
        %710 = vrot.lane.b32.xlu0 %v588, 16
        %v711 = vpop.permute.xlu0 %710
        %712 = vrot.lane.b32.xlu0 %v589, 16
        %v713 = vpop.permute.xlu0 %712
        %714 = vrot.lane.b32.xlu0 %v590, 16
        %v715 = vpop.permute.xlu0 %714
        %716 = vrot.lane.b32.xlu0 %v591, 16
        %v717 = vpop.permute.xlu0 %716
        %718 = vrot.lane.b32.xlu0 %v592, 16
        %v719 = vpop.permute.xlu0 %718
        %720 = vrot.lane.b32.xlu0 %v593, 16
        %v721 = vpop.permute.xlu0 %720
        %722 = vrot.lane.b32.xlu0 %v594, 16
        %v723 = vpop.permute.xlu0 %722
        %724 = vrot.lane.b32.xlu0 %v595, 16
        %v725 = vpop.permute.xlu0 %724
        %726 = vrot.lane.b32.xlu0 %v596, 16
        %v727 = vpop.permute.xlu0 %726
        %728 = vrot.lane.b32.xlu0 %v597, 16
        %v729 = vpop.permute.xlu0 %728
        %730 = vrot.lane.b32.xlu0 %v598, 16
        %v731 = vpop.permute.xlu0 %730
        %732 = vrot.lane.b32.xlu0 %v599, 16
        %v733 = vpop.permute.xlu0 %732
        %734 = vrot.lane.b32.xlu0 %v687, 16
        %v735 = vpop.permute.xlu0 %734
        %736 = vrot.lane.b32.xlu0 %v688, 16
        %v737 = vpop.permute.xlu0 %736
        %738 = vrot.lane.b32.xlu0 %v689, 16
        %v739 = vpop.permute.xlu0 %738
        %vm740 = vcmask 64512
        %v743 = vsel %vm740, %v575, %v632
        %v746 = vsel %vm740, %v576, %v634
        %v749 = vsel %vm740, %v577, %v636
        %v752 = vsel %vm740, %v578, %v638
        %v755 = vsel %vm740, %v579, %v640
        %v758 = vsel %vm740, %v580, %v642
        %v761 = vsel %vm740, %v581, %v644
        %v764 = vsel %vm740, %v582, %v646
        %v767 = vsel %vm740, %v583, %v648
        %v770 = vsel %vm740, %v584, %v650
        %v773 = vsel %vm740, %v585, %v652
        %v776 = vsel %vm740, %v586, %v654
        %v779 = vsel %vm740, %v587, %v656
        %v782 = vsel %vm740, %v588, %v658
        %v785 = vsel %vm740, %v589, %v660
        %v788 = vsel %vm740, %v590, %v662
        %v791 = vsel %vm740, %v591, %v664
        %v794 = vsel %vm740, %v592, %v666
        %v797 = vsel %vm740, %v593, %v668
        %v800 = vsel %vm740, %v594, %v670
        %v803 = vsel %vm740, %v595, %v672
        %v806 = vsel %vm740, %v596, %v674
        %v809 = vsel %vm740, %v597, %v676
        %v812 = vsel %vm740, %v598, %v678
        %v815 = vsel %vm740, %v599, %v680
        %vm816 = vcmask 130048
        %v818 = vsel %vm816, %v743, %v691
        %v821 = vsel %vm816, %v746, %v693
        %v824 = vsel %vm816, %v749, %v695
        %v827 = vsel %vm816, %v752, %v697
        %v830 = vsel %vm816, %v755, %v699
        %v833 = vsel %vm816, %v758, %v701
        %v836 = vsel %vm816, %v761, %v703
        %v839 = vsel %vm816, %v764, %v705
        %v842 = vsel %vm816, %v767, %v707
        %v845 = vsel %vm816, %v770, %v709
        %v848 = vsel %vm816, %v773, %v711
        %v851 = vsel %vm816, %v776, %v713
        %v854 = vsel %vm816, %v779, %v715
        %v857 = vsel %vm816, %v782, %v717
        %v860 = vsel %vm816, %v785, %v719
        %v863 = vsel %vm816, %v788, %v721
        %v866 = vsel %vm816, %v791, %v723
        %v869 = vsel %vm816, %v794, %v725
        %v872 = vsel %vm816, %v797, %v727
        %v875 = vsel %vm816, %v800, %v729
        %v878 = vsel %vm816, %v803, %v731
        %v881 = vsel %vm816, %v806, %v733
        %v884 = vsel %vm816, %v809, %v735
        %v887 = vsel %vm816, %v812, %v737
        %v890 = vsel %vm816, %v815, %v739
        %vm892 = vcmask 195584
        %893 = vst.msk [vmem:[#allocation2] sm:$0xff] %vm892, %v818
        %894 = vst.msk [vmem:[#allocation2 + $0x8] sm:$0xff] %vm892, %v821
        %895 = vst.msk [vmem:[#allocation2 + $0x10] sm:$0xff] %vm892, %v824
        %896 = vst.msk [vmem:[#allocation2 + $0x18] sm:$0xff] %vm892, %v827
        %897 = vst.msk [vmem:[#allocation2 + $0x20] sm:$0xff] %vm892, %v830
        %898 = vst.msk [vmem:[#allocation2 + $0x28] sm:$0xff] %vm892, %v833
        %899 = vst.msk [vmem:[#allocation2 + $0x30] sm:$0xff] %vm892, %v836
        %900 = vst.msk [vmem:[#allocation2 + $0x38] sm:$0xff] %vm892, %v839
        %901 = vst.msk [vmem:[#allocation2 + $0x40] sm:$0xff] %vm892, %v842
        %902 = vst.msk [vmem:[#allocation2 + $0x48] sm:$0xff] %vm892, %v845
        %903 = vst.msk [vmem:[#allocation2 + $0x50] sm:$0xff] %vm892, %v848
        %904 = vst.msk [vmem:[#allocation2 + $0x58] sm:$0xff] %vm892, %v851
        %905 = vst.msk [vmem:[#allocation2 + $0x60] sm:$0xff] %vm892, %v854
        %906 = vst.msk [vmem:[#allocation2 + $0x68] sm:$0xff] %vm892, %v857
        %907 = vst.msk [vmem:[#allocation2 + $0x70] sm:$0xff] %vm892, %v860
        %908 = vst.msk [vmem:[#allocation2 + $0x78] sm:$0xff] %vm892, %v863
        %909 = vst.msk [vmem:[#allocation2 + $0x80] sm:$0xff] %vm892, %v866
        %910 = vst.msk [vmem:[#allocation2 + $0x88] sm:$0xff] %vm892, %v869
        %911 = vst.msk [vmem:[#allocation2 + $0x90] sm:$0xff] %vm892, %v872
        %912 = vst.msk [vmem:[#allocation2 + $0x98] sm:$0xff] %vm892, %v875
        %913 = vst.msk [vmem:[#allocation2 + $0xa0] sm:$0xff] %vm892, %v878
        %914 = vst.msk [vmem:[#allocation2 + $0xa8] sm:$0xff] %vm892, %v881
        %915 = vst.msk [vmem:[#allocation2 + $0xb0] sm:$0xff] %vm892, %v884
        %916 = vst.msk [vmem:[#allocation2 + $0xb8] sm:$0xff] %vm892, %v887
        %917 = vst.msk [vmem:[#allocation2 + $0xc0] sm:$0xff] %vm892, %v890
        %v918 = vld [vmem:[#allocation2] sm:$0xf8]
        %v919 = vld [vmem:[#allocation2 + $0x8] sm:$0xff]
        %v920 = vld [vmem:[#allocation2 + $0x10] sm:$0xff]
        %v921 = vld [vmem:[#allocation2 + $0x18] sm:$0xff]
        %v922 = vld [vmem:[#allocation2 + $0x20] sm:$0xff]
        %v923 = vld [vmem:[#allocation2 + $0x28] sm:$0xff]
        %v924 = vld [vmem:[#allocation2 + $0x30] sm:$0xff]
        %v925 = vld [vmem:[#allocation2 + $0x38] sm:$0xff]
        %v926 = vld [vmem:[#allocation2 + $0x40] sm:$0xff]
        %v927 = vld [vmem:[#allocation2 + $0x48] sm:$0xff]
        %v928 = vld [vmem:[#allocation2 + $0x50] sm:$0xff]
        %v929 = vld [vmem:[#allocation2 + $0x58] sm:$0xff]
        %v930 = vld [vmem:[#allocation2 + $0x60] sm:$0xff]
        %v931 = vld [vmem:[#allocation2 + $0x68] sm:$0xff]
        %v932 = vld [vmem:[#allocation2 + $0x70] sm:$0xff]
        %v933 = vld [vmem:[#allocation2 + $0x78] sm:$0xff]
        %v934 = vld [vmem:[#allocation2 + $0x80] sm:$0xff]
        %v935 = vld [vmem:[#allocation2 + $0x88] sm:$0xff]
        %v936 = vld [vmem:[#allocation2 + $0x90] sm:$0xff]
        %v937 = vld [vmem:[#allocation2 + $0x98] sm:$0xff]
        %v938 = vld [vmem:[#allocation2 + $0xa0] sm:$0xff]
        %v939 = vld [vmem:[#allocation2 + $0xa8] sm:$0xff]
        %v940 = vld [vmem:[#allocation2 + $0xb0] sm:$0xff]
        %v941 = vld [vmem:[#allocation2 + $0xb8] sm:$0xff]
        %v942 = vld [vmem:[#allocation2 + $0xc0] sm:$0xf]
        %v943 = vld [vmem:[#allocation10] sm:$0xf]
        %v944 = vld [vmem:[#allocation10 + $0x4] sm:$0xf]
        %v945 = vld [vmem:[#allocation10 + $0x8] sm:$0xf]
        %v946 = vld [vmem:[#allocation2] sm:$0xf0]
        %s947 = scalar_lea.vmem [#allocation10], 12
        %v948 = vld [vmem:[%s947] sm:$0xf]
        %v949 = vld [vmem:[%s947 + $0x4] sm:$0xf]
        %v950 = vld [vmem:[%s947 + $0x8] sm:$0xf]
        %vm976 = vcmask 1043456
        %v977 = vrot.slane %v946, 4
        %v978 = vrot.slane %v919, 4
        %v979 = vsel %vm976, %v977, %v978
        %v980 = vrot.slane %v920, 4
        %v981 = vsel %vm976, %v978, %v980
        %v982 = vrot.slane %v921, 4
        %v983 = vsel %vm976, %v980, %v982
        %v984 = vrot.slane %v922, 4
        %v985 = vsel %vm976, %v982, %v984
        %v986 = vrot.slane %v923, 4
        %v987 = vsel %vm976, %v984, %v986
        %v988 = vrot.slane %v924, 4
        %v989 = vsel %vm976, %v986, %v988
        %v990 = vrot.slane %v925, 4
        %v991 = vsel %vm976, %v988, %v990
        %v992 = vrot.slane %v926, 4
        %v993 = vsel %vm976, %v990, %v992
        %v994 = vrot.slane %v927, 4
        %v995 = vsel %vm976, %v992, %v994
        %v996 = vrot.slane %v928, 4
        %v997 = vsel %vm976, %v994, %v996
        %v998 = vrot.slane %v929, 4
        %v999 = vsel %vm976, %v996, %v998
        %v1000 = vrot.slane %v930, 4
        %v1001 = vsel %vm976, %v998, %v1000
        %v1002 = vrot.slane %v931, 4
        %v1003 = vsel %vm976, %v1000, %v1002
        %v1004 = vrot.slane %v932, 4
        %v1005 = vsel %vm976, %v1002, %v1004
        %v1006 = vrot.slane %v933, 4
        %v1007 = vsel %vm976, %v1004, %v1006
        %v1008 = vrot.slane %v934, 4
        %v1009 = vsel %vm976, %v1006, %v1008
        %v1010 = vrot.slane %v935, 4
        %v1011 = vsel %vm976, %v1008, %v1010
        %v1012 = vrot.slane %v936, 4
        %v1013 = vsel %vm976, %v1010, %v1012
        %v1014 = vrot.slane %v937, 4
        %v1015 = vsel %vm976, %v1012, %v1014
        %v1016 = vrot.slane %v938, 4
        %v1017 = vsel %vm976, %v1014, %v1016
        %v1018 = vrot.slane %v939, 4
        %v1019 = vsel %vm976, %v1016, %v1018
        %v1020 = vrot.slane %v940, 4
        %v1021 = vsel %vm976, %v1018, %v1020
        %v1022 = vrot.slane %v941, 4
        %v1023 = vsel %vm976, %v1020, %v1022
        %v1024 = vrot.slane %v942, 4
        %v1025 = vsel %vm976, %v1022, %v1024
        %v1029 = vunpack.c.l.b16 %v948
        %v1030 = vunpack.c.l.b16 %v949
        %v1031 = vunpack.c.l.b16 %v950
        %v1032 = vpack.c.b16 %v1030, %v1029
        %v1033 = vpack.c.b16 %v1031, %v1031
        %v1036 = vsel %vm892, %v979, 0
        %v1039 = vsel %vm892, %v981, 0
        %v1042 = vsel %vm892, %v983, 0
        %v1045 = vsel %vm892, %v985, 0
        %v1048 = vsel %vm892, %v987, 0
        %v1051 = vsel %vm892, %v989, 0
        %v1054 = vsel %vm892, %v991, 0
        %v1057 = vsel %vm892, %v993, 0
        %v1060 = vsel %vm892, %v995, 0
        %v1063 = vsel %vm892, %v997, 0
        %v1066 = vsel %vm892, %v999, 0
        %v1069 = vsel %vm892, %v1001, 0
        %v1072 = vsel %vm892, %v1003, 0
        %v1075 = vsel %vm892, %v1005, 0
        %v1078 = vsel %vm892, %v1007, 0
        %v1081 = vsel %vm892, %v1009, 0
        %v1084 = vsel %vm892, %v1011, 0
        %v1087 = vsel %vm892, %v1013, 0
        %v1090 = vsel %vm892, %v1015, 0
        %v1093 = vsel %vm892, %v1017, 0
        %v1096 = vsel %vm892, %v1019, 0
        %v1099 = vsel %vm892, %v1021, 0
        %v1102 = vsel %vm892, %v1023, 0
        %v1105 = vsel %vm892, %v1025, 0
        %vm1107 = vcmask 1043456
        %v1109 = vsel %vm1107, %v1033, 0
        %1111 = vmatprep.subr.bf16.mxu0 0
        %1112 = vmatpush1.bf16.msra.mxu0 %v1032
        %1113 = vmatprep.subr.bf16.mxu0 0
        %1114 = vmatpush1.bf16.msra.mxu0 %v1109
        %1115 = vmatprep.subr.bf16.mxu0 0
        %1116 = vmatpush1.bf16.msra.mxu0 0
        %1117 = vmatprep.subr.bf16.mxu0 0
        %1118 = vmatpush1.bf16.msra.mxu0 0
        %1119 = vmatprep.subr.bf16.mxu0 0
        %1120 = vmatpush1.bf16.msra.mxu0 0
        %1121 = vmatprep.subr.bf16.mxu0 0
        %1122 = vmatpush1.bf16.msra.mxu0 0
        %1123 = vmatprep.subr.bf16.mxu0 0
        %1124 = vmatpush1.bf16.msra.mxu0 0
        %1125 = vmatprep.subr.bf16.mxu0 0
        %1126 = vmatpush1.bf16.msra.mxu0 0
        %1127 = vmatprep.subr.bf16.mxu0 0
        %1128 = vmatpush1.bf16.msra.mxu0 0
        %1129 = vmatprep.subr.bf16.mxu0 0
        %1130 = vmatpush1.bf16.msra.mxu0 0
        %1131 = vmatprep.subr.bf16.mxu0 0
        %1132 = vmatpush1.bf16.msra.mxu0 0
        %1133 = vmatprep.subr.bf16.mxu0 0
        %1134 = vmatpush1.bf16.msra.mxu0 0
        %1135 = vmatprep.subr.bf16.mxu0 0
        %1136 = vmatpush1.bf16.msra.mxu0 0
        %1137 = vmatprep.subr.bf16.mxu0 0
        %1138 = vmatpush1.bf16.msra.mxu0 0
        %1139 = vmatprep.subr.bf16.mxu0 0
        %1140 = vmatpush1.bf16.msra.mxu0 0
        %1141 = vmatprep.subr.bf16.mxu0 0
        %1142 = vmatpush1.bf16.msra.mxu0 0
        %1143 = vmatprep.mubr.bf16.mxu0 0
        %1144 = vmatmul.mubr.bf16.gmra.mrb[0].mxu0 %v1036
        %v1145 = vpop.f32.mrb[0].mxu0
        %v1146 = vadd.f32 0.0, %v1145
        %v1147 = vpop.f32.mrb[0].mxu0
        %v1148 = vpop.f32.mrb[0].mxu0
        %v1149 = vadd.f32 0.0, %v1148
        %v1150 = vpop.f32.mrb[0].mxu0
        %1151 = vmatprep.mubr.bf16.mxu0 0
        %1152 = vmatmul.mubr.bf16.gmra.mrb[0].mxu0 %v1039
        %v1153 = vpop.f32.mrb[0].mxu0
        %v1154 = vadd.f32 0.0, %v1153
        %v1155 = vpop.f32.mrb[0].mxu0
        %v1156 = vpop.f32.mrb[0].mxu0
        %v1157 = vadd.f32 0.0, %v1156
        %v1158 = vpop.f32.mrb[0].mxu0
        %1159 = vmatprep.mubr.bf16.mxu0 0
        %1160 = vmatmul.mubr.bf16.gmra.mrb[0].mxu0 %v1042
        %v1161 = vpop.f32.mrb[0].mxu0
        %v1162 = vadd.f32 0.0, %v1161
        %v1163 = vpop.f32.mrb[0].mxu0
        %v1164 = vpop.f32.mrb[0].mxu0
        %v1165 = vadd.f32 0.0, %v1164
        %v1166 = vpop.f32.mrb[0].mxu0
        %1167 = vmatprep.mubr.bf16.mxu0 0
        %1168 = vmatmul.mubr.bf16.gmra.mrb[0].mxu0 %v1045
        %v1169 = vpop.f32.mrb[0].mxu0
        %v1170 = vadd.f32 0.0, %v1169
        %v1171 = vpop.f32.mrb[0].mxu0
        %v1172 = vpop.f32.mrb[0].mxu0
        %v1173 = vadd.f32 0.0, %v1172
        %v1174 = vpop.f32.mrb[0].mxu0
        %1175 = vmatprep.mubr.bf16.mxu0 0
        %1176 = vmatmul.mubr.bf16.gmra.mrb[0].mxu0 %v1048
        %v1177 = vpop.f32.mrb[0].mxu0
        %v1178 = vadd.f32 0.0, %v1177
        %v1179 = vpop.f32.mrb[0].mxu0
        %v1180 = vpop.f32.mrb[0].mxu0
        %v1181 = vadd.f32 0.0, %v1180
        %v1182 = vpop.f32.mrb[0].mxu0
        %1183 = vmatprep.mubr.bf16.mxu0 0
        %1184 = vmatmul.mubr.bf16.gmra.mrb[0].mxu0 %v1051
        %v1185 = vpop.f32.mrb[0].mxu0
        %v1186 = vadd.f32 0.0, %v1185
        %v1187 = vpop.f32.mrb[0].mxu0
        %v1188 = vpop.f32.mrb[0].mxu0
        %v1189 = vadd.f32 0.0, %v1188
        %v1190 = vpop.f32.mrb[0].mxu0
        %1191 = vmatprep.mubr.bf16.mxu0 0
        %1192 = vmatmul.mubr.bf16.gmra.mrb[0].mxu0 %v1054
        %v1193 = vpop.f32.mrb[0].mxu0
        %v1194 = vadd.f32 0.0, %v1193
        %v1195 = vpop.f32.mrb[0].mxu0
        %v1196 = vpop.f32.mrb[0].mxu0
        %v1197 = vadd.f32 0.0, %v1196
        %v1198 = vpop.f32.mrb[0].mxu0
        %1199 = vmatprep.mubr.bf16.mxu0 0
        %1200 = vmatmul.mubr.bf16.gmra.mrb[0].mxu0 %v1057
        %v1201 = vpop.f32.mrb[0].mxu0
        %v1202 = vadd.f32 0.0, %v1201
        %v1203 = vpop.f32.mrb[0].mxu0
        %v1204 = vpop.f32.mrb[0].mxu0
        %v1205 = vadd.f32 0.0, %v1204
        %v1206 = vpop.f32.mrb[0].mxu0
        %1207 = vmatprep.mubr.bf16.mxu0 0
        %1208 = vmatmul.mubr.bf16.gmra.mrb[0].mxu0 %v1060
        %v1209 = vpop.f32.mrb[0].mxu0
        %v1210 = vadd.f32 0.0, %v1209
        %v1211 = vpop.f32.mrb[0].mxu0
        %v1212 = vpop.f32.mrb[0].mxu0
        %v1213 = vadd.f32 0.0, %v1212
        %v1214 = vpop.f32.mrb[0].mxu0
        %1215 = vmatprep.mubr.bf16.mxu0 0
        %1216 = vmatmul.mubr.bf16.gmra.mrb[0].mxu0 %v1063
        %v1217 = vpop.f32.mrb[0].mxu0
        %v1218 = vadd.f32 0.0, %v1217
        %v1219 = vpop.f32.mrb[0].mxu0
        %v1220 = vpop.f32.mrb[0].mxu0
        %v1221 = vadd.f32 0.0, %v1220
        %v1222 = vpop.f32.mrb[0].mxu0
        %1223 = vmatprep.mubr.bf16.mxu0 0
        %1224 = vmatmul.mubr.bf16.gmra.mrb[0].mxu0 %v1066
        %v1225 = vpop.f32.mrb[0].mxu0
        %v1226 = vadd.f32 0.0, %v1225
        %v1227 = vpop.f32.mrb[0].mxu0
        %v1228 = vpop.f32.mrb[0].mxu0
        %v1229 = vadd.f32 0.0, %v1228
        %v1230 = vpop.f32.mrb[0].mxu0
        %1231 = vmatprep.mubr.bf16.mxu0 0
        %1232 = vmatmul.mubr.bf16.gmra.mrb[0].mxu0 %v1069
        %v1233 = vpop.f32.mrb[0].mxu0
        %v1234 = vadd.f32 0.0, %v1233
        %v1235 = vpop.f32.mrb[0].mxu0
        %v1236 = vpop.f32.mrb[0].mxu0
        %v1237 = vadd.f32 0.0, %v1236
        %v1238 = vpop.f32.mrb[0].mxu0
        %1239 = vmatprep.mubr.bf16.mxu0 0
        %1240 = vmatmul.mubr.bf16.gmra.mrb[0].mxu0 %v1072
        %v1241 = vpop.f32.mrb[0].mxu0
        %v1242 = vadd.f32 0.0, %v1241
        %v1243 = vpop.f32.mrb[0].mxu0
        %v1244 = vpop.f32.mrb[0].mxu0
        %v1245 = vadd.f32 0.0, %v1244
        %v1246 = vpop.f32.mrb[0].mxu0
        %1247 = vmatprep.mubr.bf16.mxu0 0
        %1248 = vmatmul.mubr.bf16.gmra.mrb[0].mxu0 %v1075
        %v1249 = vpop.f32.mrb[0].mxu0
        %v1250 = vadd.f32 0.0, %v1249
        %v1251 = vpop.f32.mrb[0].mxu0
        %v1252 = vpop.f32.mrb[0].mxu0
        %v1253 = vadd.f32 0.0, %v1252
        %v1254 = vpop.f32.mrb[0].mxu0
        %1255 = vmatprep.mubr.bf16.mxu0 0
        %1256 = vmatmul.mubr.bf16.gmra.mrb[0].mxu0 %v1078
        %v1257 = vpop.f32.mrb[0].mxu0
        %v1258 = vadd.f32 0.0, %v1257
        %v1259 = vpop.f32.mrb[0].mxu0
        %v1260 = vpop.f32.mrb[0].mxu0
        %v1261 = vadd.f32 0.0, %v1260
        %v1262 = vpop.f32.mrb[0].mxu0
        %1263 = vmatprep.mubr.bf16.mxu0 0
        %1264 = vmatmul.mubr.bf16.gmra.mrb[0].mxu0 %v1081
        %v1265 = vpop.f32.mrb[0].mxu0
        %v1266 = vadd.f32 0.0, %v1265
        %v1267 = vpop.f32.mrb[0].mxu0
        %v1268 = vpop.f32.mrb[0].mxu0
        %v1269 = vadd.f32 0.0, %v1268
        %v1270 = vpop.f32.mrb[0].mxu0
        %1271 = vmatprep.mubr.bf16.mxu0 0
        %1272 = vmatmul.mubr.bf16.gmra.mrb[0].mxu0 %v1084
        %v1273 = vpop.f32.mrb[0].mxu0
        %v1274 = vadd.f32 0.0, %v1273
        %v1275 = vpop.f32.mrb[0].mxu0
        %v1276 = vpop.f32.mrb[0].mxu0
        %v1277 = vadd.f32 0.0, %v1276
        %v1278 = vpop.f32.mrb[0].mxu0
        %1279 = vmatprep.mubr.bf16.mxu0 0
        %1280 = vmatmul.mubr.bf16.gmra.mrb[0].mxu0 %v1087
        %v1281 = vpop.f32.mrb[0].mxu0
        %v1282 = vadd.f32 0.0, %v1281
        %v1283 = vpop.f32.mrb[0].mxu0
        %v1284 = vpop.f32.mrb[0].mxu0
        %v1285 = vadd.f32 0.0, %v1284
        %v1286 = vpop.f32.mrb[0].mxu0
        %1287 = vmatprep.mubr.bf16.mxu0 0
        %1288 = vmatmul.mubr.bf16.gmra.mrb[0].mxu0 %v1090
        %v1289 = vpop.f32.mrb[0].mxu0
        %v1290 = vadd.f32 0.0, %v1289
        %v1291 = vpop.f32.mrb[0].mxu0
        %v1292 = vpop.f32.mrb[0].mxu0
        %v1293 = vadd.f32 0.0, %v1292
        %v1294 = vpop.f32.mrb[0].mxu0
        %1295 = vmatprep.mubr.bf16.mxu0 0
        %1296 = vmatmul.mubr.bf16.gmra.mrb[0].mxu0 %v1093
        %v1297 = vpop.f32.mrb[0].mxu0
        %v1298 = vadd.f32 0.0, %v1297
        %v1299 = vpop.f32.mrb[0].mxu0
        %v1300 = vpop.f32.mrb[0].mxu0
        %v1301 = vadd.f32 0.0, %v1300
        %v1302 = vpop.f32.mrb[0].mxu0
        %1303 = vmatprep.mubr.bf16.mxu0 0
        %1304 = vmatmul.mubr.bf16.gmra.mrb[0].mxu0 %v1096
        %v1305 = vpop.f32.mrb[0].mxu0
        %v1306 = vadd.f32 0.0, %v1305
        %v1307 = vpop.f32.mrb[0].mxu0
        %v1308 = vpop.f32.mrb[0].mxu0
        %v1309 = vadd.f32 0.0, %v1308
        %v1310 = vpop.f32.mrb[0].mxu0
        %1311 = vmatprep.mubr.bf16.mxu0 0
        %1312 = vmatmul.mubr.bf16.gmra.mrb[0].mxu0 %v1099
        %v1313 = vpop.f32.mrb[0].mxu0
        %v1314 = vadd.f32 0.0, %v1313
        %v1315 = vpop.f32.mrb[0].mxu0
        %v1316 = vpop.f32.mrb[0].mxu0
        %v1317 = vadd.f32 0.0, %v1316
        %v1318 = vpop.f32.mrb[0].mxu0
        %1319 = vmatprep.mubr.bf16.mxu0 0
        %1320 = vmatmul.mubr.bf16.gmra.mrb[0].mxu0 %v1102
        %v1321 = vpop.f32.mrb[0].mxu0
        %v1322 = vadd.f32 0.0, %v1321
        %v1323 = vpop.f32.mrb[0].mxu0
        %v1324 = vpop.f32.mrb[0].mxu0
        %v1325 = vadd.f32 0.0, %v1324
        %v1326 = vpop.f32.mrb[0].mxu0
        %1327 = vmatprep.mubr.bf16.mxu0 0
        %1328 = vmatmul.mubr.bf16.gmra.mrb[0].mxu0 %v1105
        %v1329 = vpop.f32.mrb[0].mxu0
        %v1330 = vadd.f32 0.0, %v1329
        %v1331 = vpop.f32.mrb[0].mxu0
        %v1332 = vpop.f32.mrb[0].mxu0
        %v1333 = vadd.f32 0.0, %v1332
        %v1334 = vpop.f32.mrb[0].mxu0
        %1335 = vdwg.mxu0
        %vm1336 = vsmask.f32 4352
        %v1338 = vshrl.u32 %v918, 16
        %v1340 = vrot.slane %v1338, 3
        %v1341 = vshll.u32 %v918, 16
        %v1343 = vrot.slane %v1341, 4
        %v1344 = vor.u32 %v1340, %v1343
        %v1346 = vshrl.u32 %v919, 16
        %v1348 = vrot.slane %v1346, 3
        %v1349 = vshll.u32 %v919, 16
        %v1351 = vrot.slane %v1349, 4
        %v1352 = vor.u32 %v1348, %v1351
        %v1353 = vsel %vm1336, %v1344, %v1352
        %v1355 = vshrl.u32 %v920, 16
        %v1357 = vrot.slane %v1355, 3
        %v1358 = vshll.u32 %v920, 16
        %v1360 = vrot.slane %v1358, 4
        %v1361 = vor.u32 %v1357, %v1360
        %v1362 = vsel %vm1336, %v1352, %v1361
        %v1364 = vshrl.u32 %v921, 16
        %v1366 = vrot.slane %v1364, 3
        %v1367 = vshll.u32 %v921, 16
        %v1369 = vrot.slane %v1367, 4
        %v1370 = vor.u32 %v1366, %v1369
        %v1371 = vsel %vm1336, %v1361, %v1370
        %v1373 = vshrl.u32 %v922, 16
        %v1375 = vrot.slane %v1373, 3
        %v1376 = vshll.u32 %v922, 16
        %v1378 = vrot.slane %v1376, 4
        %v1379 = vor.u32 %v1375, %v1378
        %v1380 = vsel %vm1336, %v1370, %v1379
        %v1382 = vshrl.u32 %v923, 16
        %v1384 = vrot.slane %v1382, 3
        %v1385 = vshll.u32 %v923, 16
        %v1387 = vrot.slane %v1385, 4
        %v1388 = vor.u32 %v1384, %v1387
        %v1389 = vsel %vm1336, %v1379, %v1388
        %v1391 = vshrl.u32 %v924, 16
        %v1393 = vrot.slane %v1391, 3
        %v1394 = vshll.u32 %v924, 16
        %v1396 = vrot.slane %v1394, 4
        %v1397 = vor.u32 %v1393, %v1396
        %v1398 = vsel %vm1336, %v1388, %v1397
        %v1400 = vshrl.u32 %v925, 16
        %v1402 = vrot.slane %v1400, 3
        %v1403 = vshll.u32 %v925, 16
        %v1405 = vrot.slane %v1403, 4
        %v1406 = vor.u32 %v1402, %v1405
        %v1407 = vsel %vm1336, %v1397, %v1406
        %v1409 = vshrl.u32 %v926, 16
        %v1411 = vrot.slane %v1409, 3
        %v1412 = vshll.u32 %v926, 16
        %v1414 = vrot.slane %v1412, 4
        %v1415 = vor.u32 %v1411, %v1414
        %v1416 = vsel %vm1336, %v1406, %v1415
        %v1418 = vshrl.u32 %v927, 16
        %v1420 = vrot.slane %v1418, 3
        %v1421 = vshll.u32 %v927, 16
        %v1423 = vrot.slane %v1421, 4
        %v1424 = vor.u32 %v1420, %v1423
        %v1425 = vsel %vm1336, %v1415, %v1424
        %v1427 = vshrl.u32 %v928, 16
        %v1429 = vrot.slane %v1427, 3
        %v1430 = vshll.u32 %v928, 16
        %v1432 = vrot.slane %v1430, 4
        %v1433 = vor.u32 %v1429, %v1432
        %v1434 = vsel %vm1336, %v1424, %v1433
        %v1436 = vshrl.u32 %v929, 16
        %v1438 = vrot.slane %v1436, 3
        %v1439 = vshll.u32 %v929, 16
        %v1441 = vrot.slane %v1439, 4
        %v1442 = vor.u32 %v1438, %v1441
        %v1443 = vsel %vm1336, %v1433, %v1442
        %v1445 = vshrl.u32 %v930, 16
        %v1447 = vrot.slane %v1445, 3
        %v1448 = vshll.u32 %v930, 16
        %v1450 = vrot.slane %v1448, 4
        %v1451 = vor.u32 %v1447, %v1450
        %v1452 = vsel %vm1336, %v1442, %v1451
        %v1454 = vshrl.u32 %v931, 16
        %v1456 = vrot.slane %v1454, 3
        %v1457 = vshll.u32 %v931, 16
        %v1459 = vrot.slane %v1457, 4
        %v1460 = vor.u32 %v1456, %v1459
        %v1461 = vsel %vm1336, %v1451, %v1460
        %v1463 = vshrl.u32 %v932, 16
        %v1465 = vrot.slane %v1463, 3
        %v1466 = vshll.u32 %v932, 16
        %v1468 = vrot.slane %v1466, 4
        %v1469 = vor.u32 %v1465, %v1468
        %v1470 = vsel %vm1336, %v1460, %v1469
        %v1472 = vshrl.u32 %v933, 16
        %v1474 = vrot.slane %v1472, 3
        %v1475 = vshll.u32 %v933, 16
        %v1477 = vrot.slane %v1475, 4
        %v1478 = vor.u32 %v1474, %v1477
        %v1479 = vsel %vm1336, %v1469, %v1478
        %v1481 = vshrl.u32 %v934, 16
        %v1483 = vrot.slane %v1481, 3
        %v1484 = vshll.u32 %v934, 16
        %v1486 = vrot.slane %v1484, 4
        %v1487 = vor.u32 %v1483, %v1486
        %v1488 = vsel %vm1336, %v1478, %v1487
        %v1490 = vshrl.u32 %v935, 16
        %v1492 = vrot.slane %v1490, 3
        %v1493 = vshll.u32 %v935, 16
        %v1495 = vrot.slane %v1493, 4
        %v1496 = vor.u32 %v1492, %v1495
        %v1497 = vsel %vm1336, %v1487, %v1496
        %v1499 = vshrl.u32 %v936, 16
        %v1501 = vrot.slane %v1499, 3
        %v1502 = vshll.u32 %v936, 16
        %v1504 = vrot.slane %v1502, 4
        %v1505 = vor.u32 %v1501, %v1504
        %v1506 = vsel %vm1336, %v1496, %v1505
        %v1508 = vshrl.u32 %v937, 16
        %v1510 = vrot.slane %v1508, 3
        %v1511 = vshll.u32 %v937, 16
        %v1513 = vrot.slane %v1511, 4
        %v1514 = vor.u32 %v1510, %v1513
        %v1515 = vsel %vm1336, %v1505, %v1514
        %v1517 = vshrl.u32 %v938, 16
        %v1519 = vrot.slane %v1517, 3
        %v1520 = vshll.u32 %v938, 16
        %v1522 = vrot.slane %v1520, 4
        %v1523 = vor.u32 %v1519, %v1522
        %v1524 = vsel %vm1336, %v1514, %v1523
        %v1526 = vshrl.u32 %v939, 16
        %v1528 = vrot.slane %v1526, 3
        %v1529 = vshll.u32 %v939, 16
        %v1531 = vrot.slane %v1529, 4
        %v1532 = vor.u32 %v1528, %v1531
        %v1533 = vsel %vm1336, %v1523, %v1532
        %v1535 = vshrl.u32 %v940, 16
        %v1537 = vrot.slane %v1535, 3
        %v1538 = vshll.u32 %v940, 16
        %v1540 = vrot.slane %v1538, 4
        %v1541 = vor.u32 %v1537, %v1540
        %v1542 = vsel %vm1336, %v1532, %v1541
        %v1544 = vshrl.u32 %v941, 16
        %v1546 = vrot.slane %v1544, 3
        %v1547 = vshll.u32 %v941, 16
        %v1549 = vrot.slane %v1547, 4
        %v1550 = vor.u32 %v1546, %v1549
        %v1551 = vsel %vm1336, %v1541, %v1550
        %v1553 = vshrl.u32 %v942, 16
        %v1555 = vrot.slane %v1553, 3
        %v1556 = vshll.u32 %v942, 16
        %v1558 = vrot.slane %v1556, 4
        %v1559 = vor.u32 %v1555, %v1558
        %v1560 = vsel %vm1336, %v1550, %v1559
        %v1564 = vunpack.c.l.b16 %v943
        %v1565 = vunpack.c.l.b16 %v944
        %v1566 = vunpack.c.l.b16 %v945
        %v1567 = vpack.c.b16 %v1565, %v1564
        %v1568 = vpack.c.b16 %v1566, %v1566
        %v1571 = vsel %vm892, %v1353, 0
        %v1574 = vsel %vm892, %v1362, 0
        %v1577 = vsel %vm892, %v1371, 0
        %v1580 = vsel %vm892, %v1380, 0
        %v1583 = vsel %vm892, %v1389, 0
        %v1586 = vsel %vm892, %v1398, 0
        %v1589 = vsel %vm892, %v1407, 0
        %v1592 = vsel %vm892, %v1416, 0
        %v1595 = vsel %vm892, %v1425, 0
        %v1598 = vsel %vm892, %v1434, 0
        %v1601 = vsel %vm892, %v1443, 0
        %v1604 = vsel %vm892, %v1452, 0
        %v1607 = vsel %vm892, %v1461, 0
        %v1610 = vsel %vm892, %v1470, 0
        %v1613 = vsel %vm892, %v1479, 0
        %v1616 = vsel %vm892, %v1488, 0
        %v1619 = vsel %vm892, %v1497, 0
        %v1622 = vsel %vm892, %v1506, 0
        %v1625 = vsel %vm892, %v1515, 0
        %v1628 = vsel %vm892, %v1524, 0
        %v1631 = vsel %vm892, %v1533, 0
        %v1634 = vsel %vm892, %v1542, 0
        %v1637 = vsel %vm892, %v1551, 0
        %v1640 = vsel %vm892, %v1560, 0
        %v1643 = vsel %vm1107, %v1568, 0
        %1645 = vmatprep.subr.bf16.mxu0 0
        %1646 = vmatpush1.bf16.msra.mxu0 %v1567
        %1647 = vmatprep.subr.bf16.mxu0 0
        %1648 = vmatpush1.bf16.msra.mxu0 %v1643
        %1649 = vmatprep.subr.bf16.mxu0 0
        %1650 = vmatpush1.bf16.msra.mxu0 0
        %1651 = vmatprep.subr.bf16.mxu0 0
        %1652 = vmatpush1.bf16.msra.mxu0 0
        %1653 = vmatprep.subr.bf16.mxu0 0
        %1654 = vmatpush1.bf16.msra.mxu0 0
        %1655 = vmatprep.subr.bf16.mxu0 0
        %1656 = vmatpush1.bf16.msra.mxu0 0
        %1657 = vmatprep.subr.bf16.mxu0 0
        %1658 = vmatpush1.bf16.msra.mxu0 0
        %1659 = vmatprep.subr.bf16.mxu0 0
        %1660 = vmatpush1.bf16.msra.mxu0 0
        %1661 = vmatprep.subr.bf16.mxu0 0
        %1662 = vmatpush1.bf16.msra.mxu0 0
        %1663 = vmatprep.subr.bf16.mxu0 0
        %1664 = vmatpush1.bf16.msra.mxu0 0
        %1665 = vmatprep.subr.bf16.mxu0 0
        %1666 = vmatpush1.bf16.msra.mxu0 0
        %1667 = vmatprep.subr.bf16.mxu0 0
        %1668 = vmatpush1.bf16.msra.mxu0 0
        %1669 = vmatprep.subr.bf16.mxu0 0
        %1670 = vmatpush1.bf16.msra.mxu0 0
        %1671 = vmatprep.subr.bf16.mxu0 0
        %1672 = vmatpush1.bf16.msra.mxu0 0
        %1673 = vmatprep.subr.bf16.mxu0 0
        %1674 = vmatpush1.bf16.msra.mxu0 0
        %1675 = vmatprep.subr.bf16.mxu0 0
        %1676 = vmatpush1.bf16.msra.mxu0 0
        %1677 = vmatprep.mubr.bf16.mxu0 0
        %1678 = vmatmul.mubr.bf16.gmra.mrb[0].mxu0 %v1571
        %v1679 = vpop.f32.mrb[0].mxu0
        %v1680 = vadd.f32 %v1146, %v1679
        %v1681 = vpop.f32.mrb[0].mxu0
        %v1682 = vpop.f32.mrb[0].mxu0
        %v1683 = vadd.f32 %v1149, %v1682
        %v1684 = vpop.f32.mrb[0].mxu0
        %1685 = vmatprep.mubr.bf16.mxu0 0
        %1686 = vmatmul.mubr.bf16.gmra.mrb[0].mxu0 %v1574
        %v1687 = vpop.f32.mrb[0].mxu0
        %v1688 = vadd.f32 %v1154, %v1687
        %v1689 = vpop.f32.mrb[0].mxu0
        %v1690 = vpop.f32.mrb[0].mxu0
        %v1691 = vadd.f32 %v1157, %v1690
        %v1692 = vpop.f32.mrb[0].mxu0
        %1693 = vmatprep.mubr.bf16.mxu0 0
        %1694 = vmatmul.mubr.bf16.gmra.mrb[0].mxu0 %v1577
        %v1695 = vpop.f32.mrb[0].mxu0
        %v1696 = vadd.f32 %v1162, %v1695
        %v1697 = vpop.f32.mrb[0].mxu0
        %v1698 = vpop.f32.mrb[0].mxu0
        %v1699 = vadd.f32 %v1165, %v1698
        %v1700 = vpop.f32.mrb[0].mxu0
        %1701 = vmatprep.mubr.bf16.mxu0 0
        %1702 = vmatmul.mubr.bf16.gmra.mrb[0].mxu0 %v1580
        %v1703 = vpop.f32.mrb[0].mxu0
        %v1704 = vadd.f32 %v1170, %v1703
        %v1705 = vpop.f32.mrb[0].mxu0
        %v1706 = vpop.f32.mrb[0].mxu0
        %v1707 = vadd.f32 %v1173, %v1706
        %v1708 = vpop.f32.mrb[0].mxu0
        %1709 = vmatprep.mubr.bf16.mxu0 0
        %1710 = vmatmul.mubr.bf16.gmra.mrb[0].mxu0 %v1583
        %v1711 = vpop.f32.mrb[0].mxu0
        %v1712 = vadd.f32 %v1178, %v1711
        %v1713 = vpop.f32.mrb[0].mxu0
        %v1714 = vpop.f32.mrb[0].mxu0
        %v1715 = vadd.f32 %v1181, %v1714
        %v1716 = vpop.f32.mrb[0].mxu0
        %1717 = vmatprep.mubr.bf16.mxu0 0
        %1718 = vmatmul.mubr.bf16.gmra.mrb[0].mxu0 %v1586
        %v1719 = vpop.f32.mrb[0].mxu0
        %v1720 = vadd.f32 %v1186, %v1719
        %v1721 = vpop.f32.mrb[0].mxu0
        %v1722 = vpop.f32.mrb[0].mxu0
        %v1723 = vadd.f32 %v1189, %v1722
        %v1724 = vpop.f32.mrb[0].mxu0
        %1725 = vmatprep.mubr.bf16.mxu0 0
        %1726 = vmatmul.mubr.bf16.gmra.mrb[0].mxu0 %v1589
        %v1727 = vpop.f32.mrb[0].mxu0
        %v1728 = vadd.f32 %v1194, %v1727
        %v1729 = vpop.f32.mrb[0].mxu0
        %v1730 = vpop.f32.mrb[0].mxu0
        %v1731 = vadd.f32 %v1197, %v1730
        %v1732 = vpop.f32.mrb[0].mxu0
        %1733 = vmatprep.mubr.bf16.mxu0 0
        %1734 = vmatmul.mubr.bf16.gmra.mrb[0].mxu0 %v1592
        %v1735 = vpop.f32.mrb[0].mxu0
        %v1736 = vadd.f32 %v1202, %v1735
        %v1737 = vpop.f32.mrb[0].mxu0
        %v1738 = vpop.f32.mrb[0].mxu0
        %v1739 = vadd.f32 %v1205, %v1738
        %v1740 = vpop.f32.mrb[0].mxu0
        %1741 = vmatprep.mubr.bf16.mxu0 0
        %1742 = vmatmul.mubr.bf16.gmra.mrb[0].mxu0 %v1595
        %v1743 = vpop.f32.mrb[0].mxu0
        %v1744 = vadd.f32 %v1210, %v1743
        %v1745 = vpop.f32.mrb[0].mxu0
        %v1746 = vpop.f32.mrb[0].mxu0
        %v1747 = vadd.f32 %v1213, %v1746
        %v1748 = vpop.f32.mrb[0].mxu0
        %1749 = vmatprep.mubr.bf16.mxu0 0
        %1750 = vmatmul.mubr.bf16.gmra.mrb[0].mxu0 %v1598
        %v1751 = vpop.f32.mrb[0].mxu0
        %v1752 = vadd.f32 %v1218, %v1751
        %v1753 = vpop.f32.mrb[0].mxu0
        %v1754 = vpop.f32.mrb[0].mxu0
        %v1755 = vadd.f32 %v1221, %v1754
        %v1756 = vpop.f32.mrb[0].mxu0
        %1757 = vmatprep.mubr.bf16.mxu0 0
        %1758 = vmatmul.mubr.bf16.gmra.mrb[0].mxu0 %v1601
        %v1759 = vpop.f32.mrb[0].mxu0
        %v1760 = vadd.f32 %v1226, %v1759
        %v1761 = vpop.f32.mrb[0].mxu0
        %v1762 = vpop.f32.mrb[0].mxu0
        %v1763 = vadd.f32 %v1229, %v1762
        %v1764 = vpop.f32.mrb[0].mxu0
        %1765 = vmatprep.mubr.bf16.mxu0 0
        %1766 = vmatmul.mubr.bf16.gmra.mrb[0].mxu0 %v1604
        %v1767 = vpop.f32.mrb[0].mxu0
        %v1768 = vadd.f32 %v1234, %v1767
        %v1769 = vpop.f32.mrb[0].mxu0
        %v1770 = vpop.f32.mrb[0].mxu0
        %v1771 = vadd.f32 %v1237, %v1770
        %v1772 = vpop.f32.mrb[0].mxu0
        %1773 = vmatprep.mubr.bf16.mxu0 0
        %1774 = vmatmul.mubr.bf16.gmra.mrb[0].mxu0 %v1607
        %v1775 = vpop.f32.mrb[0].mxu0
        %v1776 = vadd.f32 %v1242, %v1775
        %v1777 = vpop.f32.mrb[0].mxu0
        %v1778 = vpop.f32.mrb[0].mxu0
        %v1779 = vadd.f32 %v1245, %v1778
        %v1780 = vpop.f32.mrb[0].mxu0
        %1781 = vmatprep.mubr.bf16.mxu0 0
        %1782 = vmatmul.mubr.bf16.gmra.mrb[0].mxu0 %v1610
        %v1783 = vpop.f32.mrb[0].mxu0
        %v1784 = vadd.f32 %v1250, %v1783
        %v1785 = vpop.f32.mrb[0].mxu0
        %v1786 = vpop.f32.mrb[0].mxu0
        %v1787 = vadd.f32 %v1253, %v1786
        %v1788 = vpop.f32.mrb[0].mxu0
        %1789 = vmatprep.mubr.bf16.mxu0 0
        %1790 = vmatmul.mubr.bf16.gmra.mrb[0].mxu0 %v1613
        %v1791 = vpop.f32.mrb[0].mxu0
        %v1792 = vadd.f32 %v1258, %v1791
        %v1793 = vpop.f32.mrb[0].mxu0
        %v1794 = vpop.f32.mrb[0].mxu0
        %v1795 = vadd.f32 %v1261, %v1794
        %v1796 = vpop.f32.mrb[0].mxu0
        %1797 = vmatprep.mubr.bf16.mxu0 0
        %1798 = vmatmul.mubr.bf16.gmra.mrb[0].mxu0 %v1616
        %v1799 = vpop.f32.mrb[0].mxu0
        %v1800 = vadd.f32 %v1266, %v1799
        %v1801 = vpop.f32.mrb[0].mxu0
        %v1802 = vpop.f32.mrb[0].mxu0
        %v1803 = vadd.f32 %v1269, %v1802
        %v1804 = vpop.f32.mrb[0].mxu0
        %1805 = vmatprep.mubr.bf16.mxu0 0
        %1806 = vmatmul.mubr.bf16.gmra.mrb[0].mxu0 %v1619
        %v1807 = vpop.f32.mrb[0].mxu0
        %v1808 = vadd.f32 %v1274, %v1807
        %v1809 = vpop.f32.mrb[0].mxu0
        %v1810 = vpop.f32.mrb[0].mxu0
        %v1811 = vadd.f32 %v1277, %v1810
        %v1812 = vpop.f32.mrb[0].mxu0
        %1813 = vmatprep.mubr.bf16.mxu0 0
        %1814 = vmatmul.mubr.bf16.gmra.mrb[0].mxu0 %v1622
        %v1815 = vpop.f32.mrb[0].mxu0
        %v1816 = vadd.f32 %v1282, %v1815
        %v1817 = vpop.f32.mrb[0].mxu0
        %v1818 = vpop.f32.mrb[0].mxu0
        %v1819 = vadd.f32 %v1285, %v1818
        %v1820 = vpop.f32.mrb[0].mxu0
        %1821 = vmatprep.mubr.bf16.mxu0 0
        %1822 = vmatmul.mubr.bf16.gmra.mrb[0].mxu0 %v1625
        %v1823 = vpop.f32.mrb[0].mxu0
        %v1824 = vadd.f32 %v1290, %v1823
        %v1825 = vpop.f32.mrb[0].mxu0
        %v1826 = vpop.f32.mrb[0].mxu0
        %v1827 = vadd.f32 %v1293, %v1826
        %v1828 = vpop.f32.mrb[0].mxu0
        %1829 = vmatprep.mubr.bf16.mxu0 0
        %1830 = vmatmul.mubr.bf16.gmra.mrb[0].mxu0 %v1628
        %v1831 = vpop.f32.mrb[0].mxu0
        %v1832 = vadd.f32 %v1298, %v1831
        %v1833 = vpop.f32.mrb[0].mxu0
        %v1834 = vpop.f32.mrb[0].mxu0
        %v1835 = vadd.f32 %v1301, %v1834
        %v1836 = vpop.f32.mrb[0].mxu0
        %1837 = vmatprep.mubr.bf16.mxu0 0
        %1838 = vmatmul.mubr.bf16.gmra.mrb[0].mxu0 %v1631
        %v1839 = vpop.f32.mrb[0].mxu0
        %v1840 = vadd.f32 %v1306, %v1839
        %v1841 = vpop.f32.mrb[0].mxu0
        %v1842 = vpop.f32.mrb[0].mxu0
        %v1843 = vadd.f32 %v1309, %v1842
        %v1844 = vpop.f32.mrb[0].mxu0
        %1845 = vmatprep.mubr.bf16.mxu0 0
        %1846 = vmatmul.mubr.bf16.gmra.mrb[0].mxu0 %v1634
        %v1847 = vpop.f32.mrb[0].mxu0
        %v1848 = vadd.f32 %v1314, %v1847
        %v1849 = vpop.f32.mrb[0].mxu0
        %v1850 = vpop.f32.mrb[0].mxu0
        %v1851 = vadd.f32 %v1317, %v1850
        %v1852 = vpop.f32.mrb[0].mxu0
        %1853 = vmatprep.mubr.bf16.mxu0 0
        %1854 = vmatmul.mubr.bf16.gmra.mrb[0].mxu0 %v1637
        %v1855 = vpop.f32.mrb[0].mxu0
        %v1856 = vadd.f32 %v1322, %v1855
        %v1857 = vpop.f32.mrb[0].mxu0
        %v1858 = vpop.f32.mrb[0].mxu0
        %v1859 = vadd.f32 %v1325, %v1858
        %v1860 = vpop.f32.mrb[0].mxu0
        %1861 = vmatprep.mubr.bf16.mxu0 0
        %1862 = vmatmul.mubr.bf16.gmra.mrb[0].mxu0 %v1640
        %v1863 = vpop.f32.mrb[0].mxu0
        %v1864 = vadd.f32 %v1330, %v1863
        %v1865 = vpop.f32.mrb[0].mxu0
        %v1866 = vpop.f32.mrb[0].mxu0
        %v1867 = vadd.f32 %v1333, %v1866
        %v1868 = vpop.f32.mrb[0].mxu0
        %1869 = vdwg.mxu0
        %v1870 = vld [vmem:[#allocation2 + $0xc0] sm:$0x1f]
        %s1871 = scalar_lea.vmem [#allocation10], 24
        %v1872 = vld [vmem:[%s1871] sm:$0xf]
        %v1873 = vld [vmem:[%s1871 + $0x4] sm:$0xf]
        %v1874 = vld [vmem:[%s1871 + $0x8] sm:$0xf]
        %vm1875 = vsmask.f32 3328
        %v1877 = vshrl.u32 %v946, 16
        %v1879 = vrot.slane %v1877, 4
        %v1880 = vshll.u32 %v946, 16
        %v1882 = vrot.slane %v1880, 5
        %v1883 = vor.u32 %v1879, %v1882
        %v1884 = vrot.slane %v1346, 4
        %v1885 = vrot.slane %v1349, 5
        %v1886 = vor.u32 %v1884, %v1885
        %v1887 = vsel %vm1875, %v1883, %v1886
        %v1888 = vrot.slane %v1355, 4
        %v1889 = vrot.slane %v1358, 5
        %v1890 = vor.u32 %v1888, %v1889
        %v1891 = vsel %vm1875, %v1886, %v1890
        %v1892 = vrot.slane %v1364, 4
        %v1893 = vrot.slane %v1367, 5
        %v1894 = vor.u32 %v1892, %v1893
        %v1895 = vsel %vm1875, %v1890, %v1894
        %v1896 = vrot.slane %v1373, 4
        %v1897 = vrot.slane %v1376, 5
        %v1898 = vor.u32 %v1896, %v1897
        %v1899 = vsel %vm1875, %v1894, %v1898
        %v1900 = vrot.slane %v1382, 4
        %v1901 = vrot.slane %v1385, 5
        %v1902 = vor.u32 %v1900, %v1901
        %v1903 = vsel %vm1875, %v1898, %v1902
        %v1904 = vrot.slane %v1391, 4
        %v1905 = vrot.slane %v1394, 5
        %v1906 = vor.u32 %v1904, %v1905
        %v1907 = vsel %vm1875, %v1902, %v1906
        %v1908 = vrot.slane %v1400, 4
        %v1909 = vrot.slane %v1403, 5
        %v1910 = vor.u32 %v1908, %v1909
        %v1911 = vsel %vm1875, %v1906, %v1910
        %v1912 = vrot.slane %v1409, 4
        %v1913 = vrot.slane %v1412, 5
        %v1914 = vor.u32 %v1912, %v1913
        %v1915 = vsel %vm1875, %v1910, %v1914
        %v1916 = vrot.slane %v1418, 4
        %v1917 = vrot.slane %v1421, 5
        %v1918 = vor.u32 %v1916, %v1917
        %v1919 = vsel %vm1875, %v1914, %v1918
        %v1920 = vrot.slane %v1427, 4
        %v1921 = vrot.slane %v1430, 5
        %v1922 = vor.u32 %v1920, %v1921
        %v1923 = vsel %vm1875, %v1918, %v1922
        %v1924 = vrot.slane %v1436, 4
        %v1925 = vrot.slane %v1439, 5
        %v1926 = vor.u32 %v1924, %v1925
        %v1927 = vsel %vm1875, %v1922, %v1926
        %v1928 = vrot.slane %v1445, 4
        %v1929 = vrot.slane %v1448, 5
        %v1930 = vor.u32 %v1928, %v1929
        %v1931 = vsel %vm1875, %v1926, %v1930
        %v1932 = vrot.slane %v1454, 4
        %v1933 = vrot.slane %v1457, 5
        %v1934 = vor.u32 %v1932, %v1933
        %v1935 = vsel %vm1875, %v1930, %v1934
        %v1936 = vrot.slane %v1463, 4
        %v1937 = vrot.slane %v1466, 5
        %v1938 = vor.u32 %v1936, %v1937
        %v1939 = vsel %vm1875, %v1934, %v1938
        %v1940 = vrot.slane %v1472, 4
        %v1941 = vrot.slane %v1475, 5
        %v1942 = vor.u32 %v1940, %v1941
        %v1943 = vsel %vm1875, %v1938, %v1942
        %v1944 = vrot.slane %v1481, 4
        %v1945 = vrot.slane %v1484, 5
        %v1946 = vor.u32 %v1944, %v1945
        %v1947 = vsel %vm1875, %v1942, %v1946
        %v1948 = vrot.slane %v1490, 4
        %v1949 = vrot.slane %v1493, 5
        %v1950 = vor.u32 %v1948, %v1949
        %v1951 = vsel %vm1875, %v1946, %v1950
        %v1952 = vrot.slane %v1499, 4
        %v1953 = vrot.slane %v1502, 5
        %v1954 = vor.u32 %v1952, %v1953
        %v1955 = vsel %vm1875, %v1950, %v1954
        %v1956 = vrot.slane %v1508, 4
        %v1957 = vrot.slane %v1511, 5
        %v1958 = vor.u32 %v1956, %v1957
        %v1959 = vsel %vm1875, %v1954, %v1958
        %v1960 = vrot.slane %v1517, 4
        %v1961 = vrot.slane %v1520, 5
        %v1962 = vor.u32 %v1960, %v1961
        %v1963 = vsel %vm1875, %v1958, %v1962
        %v1964 = vrot.slane %v1526, 4
        %v1965 = vrot.slane %v1529, 5
        %v1966 = vor.u32 %v1964, %v1965
        %v1967 = vsel %vm1875, %v1962, %v1966
        %v1968 = vrot.slane %v1535, 4
        %v1969 = vrot.slane %v1538, 5
        %v1970 = vor.u32 %v1968, %v1969
        %v1971 = vsel %vm1875, %v1966, %v1970
        %v1972 = vrot.slane %v1544, 4
        %v1973 = vrot.slane %v1547, 5
        %v1974 = vor.u32 %v1972, %v1973
        %v1975 = vsel %vm1875, %v1970, %v1974
        %v1977 = vshrl.u32 %v1870, 16
        %v1979 = vrot.slane %v1977, 4
        %v1980 = vshll.u32 %v1870, 16
        %v1982 = vrot.slane %v1980, 5
        %v1983 = vor.u32 %v1979, %v1982
        %v1984 = vsel %vm1875, %v1974, %v1983
        %v1988 = vunpack.c.l.b16 %v1872
        %v1989 = vunpack.c.l.b16 %v1873
        %v1990 = vunpack.c.l.b16 %v1874
        %v1991 = vpack.c.b16 %v1989, %v1988
        %v1992 = vpack.c.b16 %v1990, %v1990
        %v1995 = vsel %vm892, %v1887, 0
        %v1998 = vsel %vm892, %v1891, 0
        %v2001 = vsel %vm892, %v1895, 0
        %v2004 = vsel %vm892, %v1899, 0
        %v2007 = vsel %vm892, %v1903, 0
        %v2010 = vsel %vm892, %v1907, 0
        %v2013 = vsel %vm892, %v1911, 0
        %v2016 = vsel %vm892, %v1915, 0
        %v2019 = vsel %vm892, %v1919, 0
        %v2022 = vsel %vm892, %v1923, 0
        %v2025 = vsel %vm892, %v1927, 0
        %v2028 = vsel %vm892, %v1931, 0
        %v2031 = vsel %vm892, %v1935, 0
        %v2034 = vsel %vm892, %v1939, 0
        %v2037 = vsel %vm892, %v1943, 0
        %v2040 = vsel %vm892, %v1947, 0
        %v2043 = vsel %vm892, %v1951, 0
        %v2046 = vsel %vm892, %v1955, 0
        %v2049 = vsel %vm892, %v1959, 0
        %v2052 = vsel %vm892, %v1963, 0
        %v2055 = vsel %vm892, %v1967, 0
        %v2058 = vsel %vm892, %v1971, 0
        %v2061 = vsel %vm892, %v1975, 0
        %v2064 = vsel %vm892, %v1984, 0
        %v2067 = vsel %vm1107, %v1992, 0
        %2069 = vmatprep.subr.bf16.mxu0 0
        %2070 = vmatpush1.bf16.msra.mxu0 %v1991
        %2071 = vmatprep.subr.bf16.mxu0 0
        %2072 = vmatpush1.bf16.msra.mxu0 %v2067
        %2073 = vmatprep.subr.bf16.mxu0 0
        %2074 = vmatpush1.bf16.msra.mxu0 0
        %2075 = vmatprep.subr.bf16.mxu0 0
        %2076 = vmatpush1.bf16.msra.mxu0 0
        %2077 = vmatprep.subr.bf16.mxu0 0
        %2078 = vmatpush1.bf16.msra.mxu0 0
        %2079 = vmatprep.subr.bf16.mxu0 0
        %2080 = vmatpush1.bf16.msra.mxu0 0
        %2081 = vmatprep.subr.bf16.mxu0 0
        %2082 = vmatpush1.bf16.msra.mxu0 0
        %2083 = vmatprep.subr.bf16.mxu0 0
        %2084 = vmatpush1.bf16.msra.mxu0 0
        %2085 = vmatprep.subr.bf16.mxu0 0
        %2086 = vmatpush1.bf16.msra.mxu0 0
        %2087 = vmatprep.subr.bf16.mxu0 0
        %2088 = vmatpush1.bf16.msra.mxu0 0
        %2089 = vmatprep.subr.bf16.mxu0 0
        %2090 = vmatpush1.bf16.msra.mxu0 0
        %2091 = vmatprep.subr.bf16.mxu0 0
        %2092 = vmatpush1.bf16.msra.mxu0 0
        %2093 = vmatprep.subr.bf16.mxu0 0
        %2094 = vmatpush1.bf16.msra.mxu0 0
        %2095 = vmatprep.subr.bf16.mxu0 0
        %2096 = vmatpush1.bf16.msra.mxu0 0
        %2097 = vmatprep.subr.bf16.mxu0 0
        %2098 = vmatpush1.bf16.msra.mxu0 0
        %2099 = vmatprep.subr.bf16.mxu0 0
        %2100 = vmatpush1.bf16.msra.mxu0 0
        %2101 = vmatprep.mubr.bf16.mxu0 0
        %2102 = vmatmul.mubr.bf16.gmra.mrb[0].mxu0 %v1995
        %v2103 = vpop.f32.mrb[0].mxu0
        %v2104 = vadd.f32 0.0, %v2103
        %v2105 = vpop.f32.mrb[0].mxu0
        %v2106 = vpop.f32.mrb[0].mxu0
        %v2107 = vadd.f32 0.0, %v2106
        %v2108 = vpop.f32.mrb[0].mxu0
        %2109 = vmatprep.mubr.bf16.mxu0 0
        %2110 = vmatmul.mubr.bf16.gmra.mrb[0].mxu0 %v1998
        %v2111 = vpop.f32.mrb[0].mxu0
        %v2112 = vadd.f32 0.0, %v2111
        %v2113 = vpop.f32.mrb[0].mxu0
        %v2114 = vpop.f32.mrb[0].mxu0
        %v2115 = vadd.f32 0.0, %v2114
        %v2116 = vpop.f32.mrb[0].mxu0
        %2117 = vmatprep.mubr.bf16.mxu0 0
        %2118 = vmatmul.mubr.bf16.gmra.mrb[0].mxu0 %v2001
        %v2119 = vpop.f32.mrb[0].mxu0
        %v2120 = vadd.f32 0.0, %v2119
        %v2121 = vpop.f32.mrb[0].mxu0
        %v2122 = vpop.f32.mrb[0].mxu0
        %v2123 = vadd.f32 0.0, %v2122
        %v2124 = vpop.f32.mrb[0].mxu0
        %2125 = vmatprep.mubr.bf16.mxu0 0
        %2126 = vmatmul.mubr.bf16.gmra.mrb[0].mxu0 %v2004
        %v2127 = vpop.f32.mrb[0].mxu0
        %v2128 = vadd.f32 0.0, %v2127
        %v2129 = vpop.f32.mrb[0].mxu0
        %v2130 = vpop.f32.mrb[0].mxu0
        %v2131 = vadd.f32 0.0, %v2130
        %v2132 = vpop.f32.mrb[0].mxu0
        %2133 = vmatprep.mubr.bf16.mxu0 0
        %2134 = vmatmul.mubr.bf16.gmra.mrb[0].mxu0 %v2007
        %v2135 = vpop.f32.mrb[0].mxu0
        %v2136 = vadd.f32 0.0, %v2135
        %v2137 = vpop.f32.mrb[0].mxu0
        %v2138 = vpop.f32.mrb[0].mxu0
        %v2139 = vadd.f32 0.0, %v2138
        %v2140 = vpop.f32.mrb[0].mxu0
        %2141 = vmatprep.mubr.bf16.mxu0 0
        %2142 = vmatmul.mubr.bf16.gmra.mrb[0].mxu0 %v2010
        %v2143 = vpop.f32.mrb[0].mxu0
        %v2144 = vadd.f32 0.0, %v2143
        %v2145 = vpop.f32.mrb[0].mxu0
        %v2146 = vpop.f32.mrb[0].mxu0
        %v2147 = vadd.f32 0.0, %v2146
        %v2148 = vpop.f32.mrb[0].mxu0
        %2149 = vmatprep.mubr.bf16.mxu0 0
        %2150 = vmatmul.mubr.bf16.gmra.mrb[0].mxu0 %v2013
        %v2151 = vpop.f32.mrb[0].mxu0
        %v2152 = vadd.f32 0.0, %v2151
        %v2153 = vpop.f32.mrb[0].mxu0
        %v2154 = vpop.f32.mrb[0].mxu0
        %v2155 = vadd.f32 0.0, %v2154
        %v2156 = vpop.f32.mrb[0].mxu0
        %2157 = vmatprep.mubr.bf16.mxu0 0
        %2158 = vmatmul.mubr.bf16.gmra.mrb[0].mxu0 %v2016
        %v2159 = vpop.f32.mrb[0].mxu0
        %v2160 = vadd.f32 0.0, %v2159
        %v2161 = vpop.f32.mrb[0].mxu0
        %v2162 = vpop.f32.mrb[0].mxu0
        %v2163 = vadd.f32 0.0, %v2162
        %v2164 = vpop.f32.mrb[0].mxu0
        %2165 = vmatprep.mubr.bf16.mxu0 0
        %2166 = vmatmul.mubr.bf16.gmra.mrb[0].mxu0 %v2019
        %v2167 = vpop.f32.mrb[0].mxu0
        %v2168 = vadd.f32 0.0, %v2167
        %v2169 = vpop.f32.mrb[0].mxu0
        %v2170 = vpop.f32.mrb[0].mxu0
        %v2171 = vadd.f32 0.0, %v2170
        %v2172 = vpop.f32.mrb[0].mxu0
        %2173 = vmatprep.mubr.bf16.mxu0 0
        %2174 = vmatmul.mubr.bf16.gmra.mrb[0].mxu0 %v2022
        %v2175 = vpop.f32.mrb[0].mxu0
        %v2176 = vadd.f32 0.0, %v2175
        %v2177 = vpop.f32.mrb[0].mxu0
        %v2178 = vpop.f32.mrb[0].mxu0
        %v2179 = vadd.f32 0.0, %v2178
        %v2180 = vpop.f32.mrb[0].mxu0
        %2181 = vmatprep.mubr.bf16.mxu0 0
        %2182 = vmatmul.mubr.bf16.gmra.mrb[0].mxu0 %v2025
        %v2183 = vpop.f32.mrb[0].mxu0
        %v2184 = vadd.f32 0.0, %v2183
        %v2185 = vpop.f32.mrb[0].mxu0
        %v2186 = vpop.f32.mrb[0].mxu0
        %v2187 = vadd.f32 0.0, %v2186
        %v2188 = vpop.f32.mrb[0].mxu0
        %2189 = vmatprep.mubr.bf16.mxu0 0
        %2190 = vmatmul.mubr.bf16.gmra.mrb[0].mxu0 %v2028
        %v2191 = vpop.f32.mrb[0].mxu0
        %v2192 = vadd.f32 0.0, %v2191
        %v2193 = vpop.f32.mrb[0].mxu0
        %v2194 = vpop.f32.mrb[0].mxu0
        %v2195 = vadd.f32 0.0, %v2194
        %v2196 = vpop.f32.mrb[0].mxu0
        %2197 = vmatprep.mubr.bf16.mxu0 0
        %2198 = vmatmul.mubr.bf16.gmra.mrb[0].mxu0 %v2031
        %v2199 = vpop.f32.mrb[0].mxu0
        %v2200 = vadd.f32 0.0, %v2199
        %v2201 = vpop.f32.mrb[0].mxu0
        %v2202 = vpop.f32.mrb[0].mxu0
        %v2203 = vadd.f32 0.0, %v2202
        %v2204 = vpop.f32.mrb[0].mxu0
        %2205 = vmatprep.mubr.bf16.mxu0 0
        %2206 = vmatmul.mubr.bf16.gmra.mrb[0].mxu0 %v2034
        %v2207 = vpop.f32.mrb[0].mxu0
        %v2208 = vadd.f32 0.0, %v2207
        %v2209 = vpop.f32.mrb[0].mxu0
        %v2210 = vpop.f32.mrb[0].mxu0
        %v2211 = vadd.f32 0.0, %v2210
        %v2212 = vpop.f32.mrb[0].mxu0
        %2213 = vmatprep.mubr.bf16.mxu0 0
        %2214 = vmatmul.mubr.bf16.gmra.mrb[0].mxu0 %v2037
        %v2215 = vpop.f32.mrb[0].mxu0
        %v2216 = vadd.f32 0.0, %v2215
        %v2217 = vpop.f32.mrb[0].mxu0
        %v2218 = vpop.f32.mrb[0].mxu0
        %v2219 = vadd.f32 0.0, %v2218
        %v2220 = vpop.f32.mrb[0].mxu0
        %2221 = vmatprep.mubr.bf16.mxu0 0
        %2222 = vmatmul.mubr.bf16.gmra.mrb[0].mxu0 %v2040
        %v2223 = vpop.f32.mrb[0].mxu0
        %v2224 = vadd.f32 0.0, %v2223
        %v2225 = vpop.f32.mrb[0].mxu0
        %v2226 = vpop.f32.mrb[0].mxu0
        %v2227 = vadd.f32 0.0, %v2226
        %v2228 = vpop.f32.mrb[0].mxu0
        %2229 = vmatprep.mubr.bf16.mxu0 0
        %2230 = vmatmul.mubr.bf16.gmra.mrb[0].mxu0 %v2043
        %v2231 = vpop.f32.mrb[0].mxu0
        %v2232 = vadd.f32 0.0, %v2231
        %v2233 = vpop.f32.mrb[0].mxu0
        %v2234 = vpop.f32.mrb[0].mxu0
        %v2235 = vadd.f32 0.0, %v2234
        %v2236 = vpop.f32.mrb[0].mxu0
        %2237 = vmatprep.mubr.bf16.mxu0 0
        %2238 = vmatmul.mubr.bf16.gmra.mrb[0].mxu0 %v2046
        %v2239 = vpop.f32.mrb[0].mxu0
        %v2240 = vadd.f32 0.0, %v2239
        %v2241 = vpop.f32.mrb[0].mxu0
        %v2242 = vpop.f32.mrb[0].mxu0
        %v2243 = vadd.f32 0.0, %v2242
        %v2244 = vpop.f32.mrb[0].mxu0
        %2245 = vmatprep.mubr.bf16.mxu0 0
        %2246 = vmatmul.mubr.bf16.gmra.mrb[0].mxu0 %v2049
        %v2247 = vpop.f32.mrb[0].mxu0
        %v2248 = vadd.f32 0.0, %v2247
        %v2249 = vpop.f32.mrb[0].mxu0
        %v2250 = vpop.f32.mrb[0].mxu0
        %v2251 = vadd.f32 0.0, %v2250
        %v2252 = vpop.f32.mrb[0].mxu0
        %2253 = vmatprep.mubr.bf16.mxu0 0
        %2254 = vmatmul.mubr.bf16.gmra.mrb[0].mxu0 %v2052
        %v2255 = vpop.f32.mrb[0].mxu0
        %v2256 = vadd.f32 0.0, %v2255
        %v2257 = vpop.f32.mrb[0].mxu0
        %v2258 = vpop.f32.mrb[0].mxu0
        %v2259 = vadd.f32 0.0, %v2258
        %v2260 = vpop.f32.mrb[0].mxu0
        %2261 = vmatprep.mubr.bf16.mxu0 0
        %2262 = vmatmul.mubr.bf16.gmra.mrb[0].mxu0 %v2055
        %v2263 = vpop.f32.mrb[0].mxu0
        %v2264 = vadd.f32 0.0, %v2263
        %v2265 = vpop.f32.mrb[0].mxu0
        %v2266 = vpop.f32.mrb[0].mxu0
        %v2267 = vadd.f32 0.0, %v2266
        %v2268 = vpop.f32.mrb[0].mxu0
        %2269 = vmatprep.mubr.bf16.mxu0 0
        %2270 = vmatmul.mubr.bf16.gmra.mrb[0].mxu0 %v2058
        %v2271 = vpop.f32.mrb[0].mxu0
        %v2272 = vadd.f32 0.0, %v2271
        %v2273 = vpop.f32.mrb[0].mxu0
        %v2274 = vpop.f32.mrb[0].mxu0
        %v2275 = vadd.f32 0.0, %v2274
        %v2276 = vpop.f32.mrb[0].mxu0
        %2277 = vmatprep.mubr.bf16.mxu0 0
        %2278 = vmatmul.mubr.bf16.gmra.mrb[0].mxu0 %v2061
        %v2279 = vpop.f32.mrb[0].mxu0
        %v2280 = vadd.f32 0.0, %v2279
        %v2281 = vpop.f32.mrb[0].mxu0
        %v2282 = vpop.f32.mrb[0].mxu0
        %v2283 = vadd.f32 0.0, %v2282
        %v2284 = vpop.f32.mrb[0].mxu0
        %2285 = vmatprep.mubr.bf16.mxu0 0
        %2286 = vmatmul.mubr.bf16.gmra.mrb[0].mxu0 %v2064
        %v2287 = vpop.f32.mrb[0].mxu0
        %v2288 = vadd.f32 0.0, %v2287
        %v2289 = vpop.f32.mrb[0].mxu0
        %v2290 = vpop.f32.mrb[0].mxu0
        %v2291 = vadd.f32 0.0, %v2290
        %v2292 = vpop.f32.mrb[0].mxu0
        %2293 = vdwg.mxu0
        %v2294 = vadd.f32 %v1680, %v2104
        %v2295 = vadd.f32 %v1683, %v2107
        %v2296 = vadd.f32 %v1688, %v2112
        %v2297 = vadd.f32 %v1691, %v2115
        %v2298 = vadd.f32 %v1696, %v2120
        %v2299 = vadd.f32 %v1699, %v2123
        %v2300 = vadd.f32 %v1704, %v2128
        %v2301 = vadd.f32 %v1707, %v2131
        %v2302 = vadd.f32 %v1712, %v2136
        %v2303 = vadd.f32 %v1715, %v2139
        %v2304 = vadd.f32 %v1720, %v2144
        %v2305 = vadd.f32 %v1723, %v2147
        %v2306 = vadd.f32 %v1728, %v2152
        %v2307 = vadd.f32 %v1731, %v2155
        %v2308 = vadd.f32 %v1736, %v2160
        %v2309 = vadd.f32 %v1739, %v2163
        %v2310 = vadd.f32 %v1744, %v2168
        %v2311 = vadd.f32 %v1747, %v2171
        %v2312 = vadd.f32 %v1752, %v2176
        %v2313 = vadd.f32 %v1755, %v2179
        %v2314 = vadd.f32 %v1760, %v2184
        %v2315 = vadd.f32 %v1763, %v2187
        %v2316 = vadd.f32 %v1768, %v2192
        %v2317 = vadd.f32 %v1771, %v2195
        %v2318 = vadd.f32 %v1776, %v2200
        %v2319 = vadd.f32 %v1779, %v2203
        %v2320 = vadd.f32 %v1784, %v2208
        %v2321 = vadd.f32 %v1787, %v2211
        %v2322 = vadd.f32 %v1792, %v2216
        %v2323 = vadd.f32 %v1795, %v2219
        %v2324 = vadd.f32 %v1800, %v2224
        %v2325 = vadd.f32 %v1803, %v2227
        %v2326 = vadd.f32 %v1808, %v2232
        %v2327 = vadd.f32 %v1811, %v2235
        %v2328 = vadd.f32 %v1816, %v2240
        %v2329 = vadd.f32 %v1819, %v2243
        %v2330 = vadd.f32 %v1824, %v2248
        %v2331 = vadd.f32 %v1827, %v2251
        %v2332 = vadd.f32 %v1832, %v2256
        %v2333 = vadd.f32 %v1835, %v2259
        %v2334 = vadd.f32 %v1840, %v2264
        %v2335 = vadd.f32 %v1843, %v2267
        %v2336 = vadd.f32 %v1848, %v2272
        %v2337 = vadd.f32 %v1851, %v2275
        %v2338 = vadd.f32 %v1856, %v2280
        %v2339 = vadd.f32 %v1859, %v2283
        %v2340 = vadd.f32 %v1864, %v2288
        %v2341 = vadd.f32 %v1867, %v2291
        %v2342 = vld [vmem:[#allocation11] sm:$0x1]
        %v2344 = vlaneseq
        %v2345 = vshrl.u32 %v2344, 7
        %v2346 = vsub.s32 0, %v2345
        %v2347 = vrot.slane %v2342, %v2346
        %v2349 = vadd.f32 %v2294, %v2347
        %v2350 = vadd.f32 %v2295, %v2347
        %v2351 = vadd.f32 %v2296, %v2347
        %v2352 = vadd.f32 %v2297, %v2347
        %v2353 = vadd.f32 %v2298, %v2347
        %v2354 = vadd.f32 %v2299, %v2347
        %v2355 = vadd.f32 %v2300, %v2347
        %v2356 = vadd.f32 %v2301, %v2347
        %v2357 = vadd.f32 %v2302, %v2347
        %v2358 = vadd.f32 %v2303, %v2347
        %v2359 = vadd.f32 %v2304, %v2347
        %v2360 = vadd.f32 %v2305, %v2347
        %v2361 = vadd.f32 %v2306, %v2347
        %v2362 = vadd.f32 %v2307, %v2347
        %v2363 = vadd.f32 %v2308, %v2347
        %v2364 = vadd.f32 %v2309, %v2347
        %v2365 = vadd.f32 %v2310, %v2347
        %v2366 = vadd.f32 %v2311, %v2347
        %v2367 = vadd.f32 %v2312, %v2347
        %v2368 = vadd.f32 %v2313, %v2347
        %v2369 = vadd.f32 %v2314, %v2347
        %v2370 = vadd.f32 %v2315, %v2347
        %v2371 = vadd.f32 %v2316, %v2347
        %v2372 = vadd.f32 %v2317, %v2347
        %v2373 = vadd.f32 %v2318, %v2347
        %v2374 = vadd.f32 %v2319, %v2347
        %v2375 = vadd.f32 %v2320, %v2347
        %v2376 = vadd.f32 %v2321, %v2347
        %v2377 = vadd.f32 %v2322, %v2347
        %v2378 = vadd.f32 %v2323, %v2347
        %v2379 = vadd.f32 %v2324, %v2347
        %v2380 = vadd.f32 %v2325, %v2347
        %v2381 = vadd.f32 %v2326, %v2347
        %v2382 = vadd.f32 %v2327, %v2347
        %v2383 = vadd.f32 %v2328, %v2347
        %v2384 = vadd.f32 %v2329, %v2347
        %v2385 = vadd.f32 %v2330, %v2347
        %v2386 = vadd.f32 %v2331, %v2347
        %v2387 = vadd.f32 %v2332, %v2347
        %v2388 = vadd.f32 %v2333, %v2347
        %v2389 = vadd.f32 %v2334, %v2347
        %v2390 = vadd.f32 %v2335, %v2347
        %v2391 = vadd.f32 %v2336, %v2347
        %v2392 = vadd.f32 %v2337, %v2347
        %v2393 = vadd.f32 %v2338, %v2347
        %v2394 = vadd.f32 %v2339, %v2347
        %v2395 = vadd.f32 %v2340, %v2347
        %v2396 = vadd.f32 %v2341, %v2347
        %v2397 = vld [vmem:[#allocation8] sm:$0xff]
        %v2398 = vld [vmem:[#allocation8 + $0x8] sm:$0xff]
        %v2399 = vld [vmem:[#allocation8 + $0x10] sm:$0xff]
        %v2400 = vld [vmem:[#allocation8 + $0x18] sm:$0xff]
        %v2401 = vld [vmem:[#allocation8 + $0x20] sm:$0xff]
        %v2402 = vld [vmem:[#allocation8 + $0x28] sm:$0xff]
        %v2403 = vld [vmem:[#allocation8 + $0x30] sm:$0xff]
        %v2404 = vld [vmem:[#allocation8 + $0x38] sm:$0xff]
        %v2405 = vld [vmem:[#allocation8 + $0x40] sm:$0xff]
        %v2406 = vld [vmem:[#allocation8 + $0x48] sm:$0xff]
        %v2407 = vld [vmem:[#allocation8 + $0x50] sm:$0xff]
        %v2408 = vld [vmem:[#allocation8 + $0x58] sm:$0xff]
        %v2409 = vld [vmem:[#allocation8 + $0x60] sm:$0xff]
        %v2410 = vld [vmem:[#allocation8 + $0x68] sm:$0xff]
        %v2411 = vld [vmem:[#allocation8 + $0x70] sm:$0xff]
        %v2412 = vld [vmem:[#allocation8 + $0x78] sm:$0xff]
        %v2413 = vld [vmem:[#allocation8 + $0x80] sm:$0xff]
        %v2414 = vld [vmem:[#allocation8 + $0x88] sm:$0xff]
        %v2415 = vld [vmem:[#allocation8 + $0x90] sm:$0xff]
        %v2416 = vld [vmem:[#allocation8 + $0x98] sm:$0xff]
        %v2417 = vld [vmem:[#allocation8 + $0xa0] sm:$0xff]
        %v2418 = vld [vmem:[#allocation8 + $0xa8] sm:$0xff]
        %v2419 = vld [vmem:[#allocation8 + $0xb0] sm:$0xff]
        %v2420 = vld [vmem:[#allocation8 + $0xb8] sm:$0xff]
        %v2421 = vld [vmem:[#allocation8 + $0xc0] sm:$0xff]
        %v2422 = vld [vmem:[#allocation8 + $0xc8] sm:$0xff]
        %v2423 = vld [vmem:[#allocation8 + $0xd0] sm:$0xff]
        %v2424 = vld [vmem:[#allocation8 + $0xd8] sm:$0xff]
        %v2425 = vld [vmem:[#allocation8 + $0xe0] sm:$0xff]
        %v2426 = vld [vmem:[#allocation8 + $0xe8] sm:$0xff]
        %v2427 = vld [vmem:[#allocation8 + $0xf0] sm:$0xff]
        %v2428 = vld [vmem:[#allocation8 + $0xf8] sm:$0xff]
        %v2429 = vld [vmem:[#allocation8 + $0x100] sm:$0xff]
        %v2430 = vld [vmem:[#allocation8 + $0x108] sm:$0xff]
        %v2431 = vld [vmem:[#allocation8 + $0x110] sm:$0xff]
        %v2432 = vld [vmem:[#allocation8 + $0x118] sm:$0xff]
        %v2433 = vld [vmem:[#allocation8 + $0x120] sm:$0xff]
        %v2434 = vld [vmem:[#allocation8 + $0x128] sm:$0xff]
        %v2435 = vld [vmem:[#allocation8 + $0x130] sm:$0xff]
        %v2436 = vld [vmem:[#allocation8 + $0x138] sm:$0xff]
        %v2437 = vld [vmem:[#allocation8 + $0x140] sm:$0xff]
        %v2438 = vld [vmem:[#allocation8 + $0x148] sm:$0xff]
        %v2439 = vld [vmem:[#allocation8 + $0x150] sm:$0xff]
        %v2440 = vld [vmem:[#allocation8 + $0x158] sm:$0xff]
        %v2441 = vld [vmem:[#allocation8 + $0x160] sm:$0xff]
        %v2442 = vld [vmem:[#allocation8 + $0x168] sm:$0xff]
        %v2443 = vld [vmem:[#allocation8 + $0x170] sm:$0xff]
        %v2444 = vld [vmem:[#allocation8 + $0x178] sm:$0xff]
        %2446 = vset.pattern.permute.xlu0 0
        %2447 = vperm.xlu0 %2446, %v2397
        %v2448 = vpop.permute.xlu0 %2447
        %2451 = vset.pattern.permute.xlu0 0
        %2452 = vperm.xlu0 %2451, %v2398
        %v2453 = vpop.permute.xlu0 %2452
        %2456 = vset.pattern.permute.xlu0 0
        %2457 = vperm.xlu0 %2456, %v2399
        %v2458 = vpop.permute.xlu0 %2457
        %2461 = vset.pattern.permute.xlu0 0
        %2462 = vperm.xlu0 %2461, %v2400
        %v2463 = vpop.permute.xlu0 %2462
        %2466 = vset.pattern.permute.xlu0 0
        %2467 = vperm.xlu0 %2466, %v2401
        %v2468 = vpop.permute.xlu0 %2467
        %2471 = vset.pattern.permute.xlu0 0
        %2472 = vperm.xlu0 %2471, %v2402
        %v2473 = vpop.permute.xlu0 %2472
        %2476 = vset.pattern.permute.xlu0 0
        %2477 = vperm.xlu0 %2476, %v2403
        %v2478 = vpop.permute.xlu0 %2477
        %2481 = vset.pattern.permute.xlu0 0
        %2482 = vperm.xlu0 %2481, %v2404
        %v2483 = vpop.permute.xlu0 %2482
        %2486 = vset.pattern.permute.xlu0 0
        %2487 = vperm.xlu0 %2486, %v2405
        %v2488 = vpop.permute.xlu0 %2487
        %2491 = vset.pattern.permute.xlu0 0
        %2492 = vperm.xlu0 %2491, %v2406
        %v2493 = vpop.permute.xlu0 %2492
        %2496 = vset.pattern.permute.xlu0 0
        %2497 = vperm.xlu0 %2496, %v2407
        %v2498 = vpop.permute.xlu0 %2497
        %2501 = vset.pattern.permute.xlu0 0
        %2502 = vperm.xlu0 %2501, %v2408
        %v2503 = vpop.permute.xlu0 %2502
        %2506 = vset.pattern.permute.xlu0 0
        %2507 = vperm.xlu0 %2506, %v2409
        %v2508 = vpop.permute.xlu0 %2507
        %2511 = vset.pattern.permute.xlu0 0
        %2512 = vperm.xlu0 %2511, %v2410
        %v2513 = vpop.permute.xlu0 %2512
        %2516 = vset.pattern.permute.xlu0 0
        %2517 = vperm.xlu0 %2516, %v2411
        %v2518 = vpop.permute.xlu0 %2517
        %2521 = vset.pattern.permute.xlu0 0
        %2522 = vperm.xlu0 %2521, %v2412
        %v2523 = vpop.permute.xlu0 %2522
        %2526 = vset.pattern.permute.xlu0 0
        %2527 = vperm.xlu0 %2526, %v2413
        %v2528 = vpop.permute.xlu0 %2527
        %2531 = vset.pattern.permute.xlu0 0
        %2532 = vperm.xlu0 %2531, %v2414
        %v2533 = vpop.permute.xlu0 %2532
        %2536 = vset.pattern.permute.xlu0 0
        %2537 = vperm.xlu0 %2536, %v2415
        %v2538 = vpop.permute.xlu0 %2537
        %2541 = vset.pattern.permute.xlu0 0
        %2542 = vperm.xlu0 %2541, %v2416
        %v2543 = vpop.permute.xlu0 %2542
        %2546 = vset.pattern.permute.xlu0 0
        %2547 = vperm.xlu0 %2546, %v2417
        %v2548 = vpop.permute.xlu0 %2547
        %2551 = vset.pattern.permute.xlu0 0
        %2552 = vperm.xlu0 %2551, %v2418
        %v2553 = vpop.permute.xlu0 %2552
        %2556 = vset.pattern.permute.xlu0 0
        %2557 = vperm.xlu0 %2556, %v2419
        %v2558 = vpop.permute.xlu0 %2557
        %2561 = vset.pattern.permute.xlu0 0
        %2562 = vperm.xlu0 %2561, %v2420
        %v2563 = vpop.permute.xlu0 %2562
        %2566 = vset.pattern.permute.xlu0 0
        %2567 = vperm.xlu0 %2566, %v2421
        %v2568 = vpop.permute.xlu0 %2567
        %2571 = vset.pattern.permute.xlu0 0
        %2572 = vperm.xlu0 %2571, %v2422
        %v2573 = vpop.permute.xlu0 %2572
        %2576 = vset.pattern.permute.xlu0 0
        %2577 = vperm.xlu0 %2576, %v2423
        %v2578 = vpop.permute.xlu0 %2577
        %2581 = vset.pattern.permute.xlu0 0
        %2582 = vperm.xlu0 %2581, %v2424
        %v2583 = vpop.permute.xlu0 %2582
        %2586 = vset.pattern.permute.xlu0 0
        %2587 = vperm.xlu0 %2586, %v2425
        %v2588 = vpop.permute.xlu0 %2587
        %2591 = vset.pattern.permute.xlu0 0
        %2592 = vperm.xlu0 %2591, %v2426
        %v2593 = vpop.permute.xlu0 %2592
        %2596 = vset.pattern.permute.xlu0 0
        %2597 = vperm.xlu0 %2596, %v2427
        %v2598 = vpop.permute.xlu0 %2597
        %2601 = vset.pattern.permute.xlu0 0
        %2602 = vperm.xlu0 %2601, %v2428
        %v2603 = vpop.permute.xlu0 %2602
        %2606 = vset.pattern.permute.xlu0 0
        %2607 = vperm.xlu0 %2606, %v2429
        %v2608 = vpop.permute.xlu0 %2607
        %2611 = vset.pattern.permute.xlu0 0
        %2612 = vperm.xlu0 %2611, %v2430
        %v2613 = vpop.permute.xlu0 %2612
        %2616 = vset.pattern.permute.xlu0 0
        %2617 = vperm.xlu0 %2616, %v2431
        %v2618 = vpop.permute.xlu0 %2617
        %2621 = vset.pattern.permute.xlu0 0
        %2622 = vperm.xlu0 %2621, %v2432
        %v2623 = vpop.permute.xlu0 %2622
        %2626 = vset.pattern.permute.xlu0 0
        %2627 = vperm.xlu0 %2626, %v2433
        %v2628 = vpop.permute.xlu0 %2627
        %2631 = vset.pattern.permute.xlu0 0
        %2632 = vperm.xlu0 %2631, %v2434
        %v2633 = vpop.permute.xlu0 %2632
        %2636 = vset.pattern.permute.xlu0 0
        %2637 = vperm.xlu0 %2636, %v2435
        %v2638 = vpop.permute.xlu0 %2637
        %2641 = vset.pattern.permute.xlu0 0
        %2642 = vperm.xlu0 %2641, %v2436
        %v2643 = vpop.permute.xlu0 %2642
        %2646 = vset.pattern.permute.xlu0 0
        %2647 = vperm.xlu0 %2646, %v2437
        %v2648 = vpop.permute.xlu0 %2647
        %2651 = vset.pattern.permute.xlu0 0
        %2652 = vperm.xlu0 %2651, %v2438
        %v2653 = vpop.permute.xlu0 %2652
        %2656 = vset.pattern.permute.xlu0 0
        %2657 = vperm.xlu0 %2656, %v2439
        %v2658 = vpop.permute.xlu0 %2657
        %2661 = vset.pattern.permute.xlu0 0
        %2662 = vperm.xlu0 %2661, %v2440
        %v2663 = vpop.permute.xlu0 %2662
        %2666 = vset.pattern.permute.xlu0 0
        %2667 = vperm.xlu0 %2666, %v2441
        %v2668 = vpop.permute.xlu0 %2667
        %2671 = vset.pattern.permute.xlu0 0
        %2672 = vperm.xlu0 %2671, %v2442
        %v2673 = vpop.permute.xlu0 %2672
        %2676 = vset.pattern.permute.xlu0 0
        %2677 = vperm.xlu0 %2676, %v2443
        %v2678 = vpop.permute.xlu0 %2677
        %2681 = vset.pattern.permute.xlu0 0
        %2682 = vperm.xlu0 %2681, %v2444
        %v2683 = vpop.permute.xlu0 %2682
        %v2685 = vmul.f32 %v2349, %v2448
        %v2686 = vmul.f32 %v2350, %v2453
        %v2687 = vmul.f32 %v2351, %v2458
        %v2688 = vmul.f32 %v2352, %v2463
        %v2689 = vmul.f32 %v2353, %v2468
        %v2690 = vmul.f32 %v2354, %v2473
        %v2691 = vmul.f32 %v2355, %v2478
        %v2692 = vmul.f32 %v2356, %v2483
        %v2693 = vmul.f32 %v2357, %v2488
        %v2694 = vmul.f32 %v2358, %v2493
        %v2695 = vmul.f32 %v2359, %v2498
        %v2696 = vmul.f32 %v2360, %v2503
        %v2697 = vmul.f32 %v2361, %v2508
        %v2698 = vmul.f32 %v2362, %v2513
        %v2699 = vmul.f32 %v2363, %v2518
        %v2700 = vmul.f32 %v2364, %v2523
        %v2701 = vmul.f32 %v2365, %v2528
        %v2702 = vmul.f32 %v2366, %v2533
        %v2703 = vmul.f32 %v2367, %v2538
        %v2704 = vmul.f32 %v2368, %v2543
        %v2705 = vmul.f32 %v2369, %v2548
        %v2706 = vmul.f32 %v2370, %v2553
        %v2707 = vmul.f32 %v2371, %v2558
        %v2708 = vmul.f32 %v2372, %v2563
        %v2709 = vmul.f32 %v2373, %v2568
        %v2710 = vmul.f32 %v2374, %v2573
        %v2711 = vmul.f32 %v2375, %v2578
        %v2712 = vmul.f32 %v2376, %v2583
        %v2713 = vmul.f32 %v2377, %v2588
        %v2714 = vmul.f32 %v2378, %v2593
        %v2715 = vmul.f32 %v2379, %v2598
        %v2716 = vmul.f32 %v2380, %v2603
        %v2717 = vmul.f32 %v2381, %v2608
        %v2718 = vmul.f32 %v2382, %v2613
        %v2719 = vmul.f32 %v2383, %v2618
        %v2720 = vmul.f32 %v2384, %v2623
        %v2721 = vmul.f32 %v2385, %v2628
        %v2722 = vmul.f32 %v2386, %v2633
        %v2723 = vmul.f32 %v2387, %v2638
        %v2724 = vmul.f32 %v2388, %v2643
        %v2725 = vmul.f32 %v2389, %v2648
        %v2726 = vmul.f32 %v2390, %v2653
        %v2727 = vmul.f32 %v2391, %v2658
        %v2728 = vmul.f32 %v2392, %v2663
        %v2729 = vmul.f32 %v2393, %v2668
        %v2730 = vmul.f32 %v2394, %v2673
        %v2731 = vmul.f32 %v2395, %v2678
        %v2732 = vmul.f32 %v2396, %v2683
        %2733 = vst.msk [vmem:[#allocation3] sm:$0xff] %vm740, 0
        %2734 = vst.msk [vmem:[#allocation3 + $0x8] sm:$0xff] %vm740, 0
        %2735 = vst.msk [vmem:[#allocation3 + $0x10] sm:$0xff] %vm740, 0
        %2736 = vst.msk [vmem:[#allocation3 + $0x18] sm:$0xff] %vm740, 0
        %2737 = vst.msk [vmem:[#allocation3 + $0x20] sm:$0xff] %vm740, 0
        %2738 = vst.msk [vmem:[#allocation3 + $0x28] sm:$0xff] %vm740, 0
        %2739 = vst.msk [vmem:[#allocation3 + $0x30] sm:$0xff] %vm740, 0
        %2740 = vst.msk [vmem:[#allocation3 + $0x38] sm:$0xff] %vm740, 0
        %2741 = vst.msk [vmem:[#allocation3 + $0x40] sm:$0xff] %vm740, 0
        %2742 = vst.msk [vmem:[#allocation3 + $0x48] sm:$0xff] %vm740, 0
        %2743 = vst.msk [vmem:[#allocation3 + $0x50] sm:$0xff] %vm740, 0
        %2744 = vst.msk [vmem:[#allocation3 + $0x58] sm:$0xff] %vm740, 0
        %2745 = vst.msk [vmem:[#allocation3 + $0x60] sm:$0xff] %vm740, 0
        %2746 = vst.msk [vmem:[#allocation3 + $0x68] sm:$0xff] %vm740, 0
        %2747 = vst.msk [vmem:[#allocation3 + $0x70] sm:$0xff] %vm740, 0
        %2748 = vst.msk [vmem:[#allocation3 + $0x78] sm:$0xff] %vm740, 0
        %2749 = vst.msk [vmem:[#allocation3 + $0x80] sm:$0xff] %vm740, 0
        %2750 = vst.msk [vmem:[#allocation3 + $0x88] sm:$0xff] %vm740, 0
        %2751 = vst.msk [vmem:[#allocation3 + $0x90] sm:$0xff] %vm740, 0
        %2752 = vst.msk [vmem:[#allocation3 + $0x98] sm:$0xff] %vm740, 0
        %2753 = vst.msk [vmem:[#allocation3 + $0xa0] sm:$0xff] %vm740, 0
        %2754 = vst.msk [vmem:[#allocation3 + $0xa8] sm:$0xff] %vm740, 0
        %2755 = vst.msk [vmem:[#allocation3 + $0xb0] sm:$0xff] %vm740, 0
        %2756 = vst.msk [vmem:[#allocation3 + $0xb8] sm:$0xff] %vm740, 0
        %2757 = vst.msk [vmem:[#allocation3 + $0xc0] sm:$0xff] %vm740, 0
        %2758 = vst.msk [vmem:[#allocation3 + $0xc8] sm:$0xff] %vm740, 0
        %2759 = vst.msk [vmem:[#allocation3 + $0xd0] sm:$0xff] %vm740, 0
        %2760 = vst.msk [vmem:[#allocation3 + $0xd8] sm:$0xff] %vm740, 0
        %2761 = vst.msk [vmem:[#allocation3 + $0xe0] sm:$0xff] %vm740, 0
        %2762 = vst.msk [vmem:[#allocation3 + $0xe8] sm:$0xff] %vm740, 0
        %2763 = vst.msk [vmem:[#allocation3 + $0xf0] sm:$0xff] %vm740, 0
        %2764 = vst.msk [vmem:[#allocation3 + $0xf8] sm:$0xff] %vm740, 0
        %2765 = vst.msk [vmem:[#allocation3 + $0x100] sm:$0xff] %vm740, 0
        %2766 = vst.msk [vmem:[#allocation3 + $0x108] sm:$0xff] %vm740, 0
        %2767 = vst.msk [vmem:[#allocation3 + $0x110] sm:$0xff] %vm740, 0
        %2768 = vst.msk [vmem:[#allocation3 + $0x118] sm:$0xff] %vm740, 0
        %v2769 = vpack.c.bf16 %v2686, %v2685
        %v2770 = vpack.c.bf16 %v2688, %v2687
        %v2771 = vpack.c.bf16 %v2690, %v2689
        %v2772 = vpack.c.bf16 %v2692, %v2691
        %v2773 = vpack.c.bf16 %v2694, %v2693
        %v2774 = vpack.c.bf16 %v2696, %v2695
        %v2775 = vpack.c.bf16 %v2698, %v2697
        %v2776 = vpack.c.bf16 %v2700, %v2699
        %v2777 = vpack.c.bf16 %v2702, %v2701
        %v2778 = vpack.c.bf16 %v2704, %v2703
        %v2779 = vpack.c.bf16 %v2706, %v2705
        %v2780 = vpack.c.bf16 %v2708, %v2707
        %v2781 = vpack.c.bf16 %v2710, %v2709
        %v2782 = vpack.c.bf16 %v2712, %v2711
        %v2783 = vpack.c.bf16 %v2714, %v2713
        %v2784 = vpack.c.bf16 %v2716, %v2715
        %v2785 = vpack.c.bf16 %v2718, %v2717
        %v2786 = vpack.c.bf16 %v2720, %v2719
        %v2787 = vpack.c.bf16 %v2722, %v2721
        %v2788 = vpack.c.bf16 %v2724, %v2723
        %v2789 = vpack.c.bf16 %v2726, %v2725
        %v2790 = vpack.c.bf16 %v2728, %v2727
        %v2791 = vpack.c.bf16 %v2730, %v2729
        %v2792 = vpack.c.bf16 %v2732, %v2731
        %2793 = vst.msk [vmem:[#allocation3 + $0x30] sm:$0xff] %vm740, %v2769
        %2794 = vst.msk [vmem:[#allocation3 + $0x38] sm:$0xff] %vm740, %v2770
        %2795 = vst.msk [vmem:[#allocation3 + $0x40] sm:$0xff] %vm740, %v2771
        %2796 = vst.msk [vmem:[#allocation3 + $0x48] sm:$0xff] %vm740, %v2772
        %2797 = vst.msk [vmem:[#allocation3 + $0x50] sm:$0xff] %vm740, %v2773
        %2798 = vst.msk [vmem:[#allocation3 + $0x58] sm:$0xff] %vm740, %v2774
        %2799 = vst.msk [vmem:[#allocation3 + $0x60] sm:$0xff] %vm740, %v2775
        %2800 = vst.msk [vmem:[#allocation3 + $0x68] sm:$0xff] %vm740, %v2776
        %2801 = vst.msk [vmem:[#allocation3 + $0x70] sm:$0xff] %vm740, %v2777
        %2802 = vst.msk [vmem:[#allocation3 + $0x78] sm:$0xff] %vm740, %v2778
        %2803 = vst.msk [vmem:[#allocation3 + $0x80] sm:$0xff] %vm740, %v2779
        %2804 = vst.msk [vmem:[#allocation3 + $0x88] sm:$0xff] %vm740, %v2780
        %2805 = vst.msk [vmem:[#allocation3 + $0x90] sm:$0xff] %vm740, %v2781
        %2806 = vst.msk [vmem:[#allocation3 + $0x98] sm:$0xff] %vm740, %v2782
        %2807 = vst.msk [vmem:[#allocation3 + $0xa0] sm:$0xff] %vm740, %v2783
        %2808 = vst.msk [vmem:[#allocation3 + $0xa8] sm:$0xff] %vm740, %v2784
        %2809 = vst.msk [vmem:[#allocation3 + $0xb0] sm:$0xff] %vm740, %v2785
        %2810 = vst.msk [vmem:[#allocation3 + $0xb8] sm:$0xff] %vm740, %v2786
        %2811 = vst.msk [vmem:[#allocation3 + $0xc0] sm:$0xff] %vm740, %v2787
        %2812 = vst.msk [vmem:[#allocation3 + $0xc8] sm:$0xff] %vm740, %v2788
        %2813 = vst.msk [vmem:[#allocation3 + $0xd0] sm:$0xff] %vm740, %v2789
        %2814 = vst.msk [vmem:[#allocation3 + $0xd8] sm:$0xff] %vm740, %v2790
        %2815 = vst.msk [vmem:[#allocation3 + $0xe0] sm:$0xff] %vm740, %v2791
        %2816 = vst.msk [vmem:[#allocation3 + $0xe8] sm:$0xff] %vm740, %v2792
        %v2817 = vld [vmem:[#allocation3 + $0x8] sm:$0xf0]
        %v2818 = vld [vmem:[#allocation3 + $0x10] sm:$0xff]
        %v2819 = vld [vmem:[#allocation3 + $0x18] sm:$0xff]
        %v2820 = vld [vmem:[#allocation3 + $0x20] sm:$0xff]
        %v2821 = vld [vmem:[#allocation3 + $0x28] sm:$0xff]
        %v2822 = vld [vmem:[#allocation3 + $0x30] sm:$0xff]
        %v2823 = vld [vmem:[#allocation3 + $0x38] sm:$0xff]
        %v2824 = vld [vmem:[#allocation3 + $0x40] sm:$0xff]
        %v2825 = vld [vmem:[#allocation3 + $0x48] sm:$0xff]
        %v2826 = vld [vmem:[#allocation3 + $0x50] sm:$0xff]
        %v2827 = vld [vmem:[#allocation3 + $0x58] sm:$0xff]
        %v2828 = vld [vmem:[#allocation3 + $0x60] sm:$0xff]
        %v2829 = vld [vmem:[#allocation3 + $0x68] sm:$0xff]
        %v2830 = vld [vmem:[#allocation3 + $0x70] sm:$0xff]
        %v2831 = vld [vmem:[#allocation3 + $0x78] sm:$0xff]
        %v2832 = vld [vmem:[#allocation3 + $0x80] sm:$0xff]
        %v2833 = vld [vmem:[#allocation3 + $0x88] sm:$0xff]
        %v2834 = vld [vmem:[#allocation3 + $0x90] sm:$0xff]
        %v2835 = vld [vmem:[#allocation3 + $0x98] sm:$0xff]
        %v2836 = vld [vmem:[#allocation3 + $0xa0] sm:$0xff]
        %v2837 = vld [vmem:[#allocation3 + $0xa8] sm:$0xff]
        %v2838 = vld [vmem:[#allocation3 + $0xb0] sm:$0xff]
        %v2839 = vld [vmem:[#allocation3 + $0xb8] sm:$0xff]
        %v2840 = vld [vmem:[#allocation3 + $0xc0] sm:$0xff]
        %v2841 = vld [vmem:[#allocation3 + $0xc8] sm:$0xff]
        %v2842 = vld [vmem:[#allocation3 + $0xd0] sm:$0xff]
        %v2843 = vld [vmem:[#allocation3 + $0xd8] sm:$0xff]
        %v2844 = vld [vmem:[#allocation3 + $0xe0] sm:$0xff]
        %v2845 = vld [vmem:[#allocation3 + $0xe8] sm:$0xff]
        %v2846 = vld [vmem:[#allocation3 + $0xf0] sm:$0xf]
        %v2847 = vld [vmem:[#allocation3 + $0x50] sm:$0xf0]
        %v2848 = vld [vmem:[#allocation3 + $0xf0] sm:$0xff]
        %v2849 = vld [vmem:[#allocation3 + $0xf8] sm:$0xff]
        %v2850 = vld [vmem:[#allocation3 + $0x100] sm:$0xff]
        %v2851 = vld [vmem:[#allocation3 + $0x108] sm:$0xff]
        %v2852 = vld [vmem:[#allocation3 + $0x110] sm:$0xff]
        %v2878 = vrot.slane %v2822, 4
        %v2879 = vrot.slane %v2823, 4
        %v2880 = vsel %vm976, %v2878, %v2879
        %v2881 = vrot.slane %v2824, 4
        %v2882 = vsel %vm976, %v2879, %v2881
        %v2883 = vrot.slane %v2825, 4
        %v2884 = vsel %vm976, %v2881, %v2883
        %v2885 = vrot.slane %v2826, 4
        %v2886 = vsel %vm976, %v2883, %v2885
        %v2887 = vrot.slane %v2827, 4
        %v2888 = vsel %vm976, %v2885, %v2887
        %v2889 = vrot.slane %v2828, 4
        %v2890 = vsel %vm976, %v2887, %v2889
        %v2891 = vrot.slane %v2829, 4
        %v2892 = vsel %vm976, %v2889, %v2891
        %v2893 = vrot.slane %v2830, 4
        %v2894 = vsel %vm976, %v2891, %v2893
        %v2895 = vrot.slane %v2831, 4
        %v2896 = vsel %vm976, %v2893, %v2895
        %v2897 = vrot.slane %v2832, 4
        %v2898 = vsel %vm976, %v2895, %v2897
        %v2899 = vrot.slane %v2833, 4
        %v2900 = vsel %vm976, %v2897, %v2899
        %v2901 = vrot.slane %v2834, 4
        %v2902 = vsel %vm976, %v2899, %v2901
        %v2903 = vrot.slane %v2835, 4
        %v2904 = vsel %vm976, %v2901, %v2903
        %v2905 = vrot.slane %v2836, 4
        %v2906 = vsel %vm976, %v2903, %v2905
        %v2907 = vrot.slane %v2837, 4
        %v2908 = vsel %vm976, %v2905, %v2907
        %v2909 = vrot.slane %v2838, 4
        %v2910 = vsel %vm976, %v2907, %v2909
        %v2911 = vrot.slane %v2839, 4
        %v2912 = vsel %vm976, %v2909, %v2911
        %v2913 = vrot.slane %v2840, 4
        %v2914 = vsel %vm976, %v2911, %v2913
        %v2915 = vrot.slane %v2841, 4
        %v2916 = vsel %vm976, %v2913, %v2915
        %v2917 = vrot.slane %v2842, 4
        %v2918 = vsel %vm976, %v2915, %v2917
        %v2919 = vrot.slane %v2843, 4
        %v2920 = vsel %vm976, %v2917, %v2919
        %v2921 = vrot.slane %v2844, 4
        %v2922 = vsel %vm976, %v2919, %v2921
        %v2923 = vrot.slane %v2845, 4
        %v2924 = vsel %vm976, %v2921, %v2923
        %v2925 = vrot.slane %v2846, 4
        %v2926 = vsel %vm976, %v2923, %v2925
        %2927 = vrot.lane.b32.xlu0 %v2878, 8
        %v2928 = vpop.permute.xlu0 %2927
        %2929 = vrot.lane.b32.xlu0 %v2880, 8
        %v2930 = vpop.permute.xlu0 %2929
        %2931 = vrot.lane.b32.xlu0 %v2882, 8
        %v2932 = vpop.permute.xlu0 %2931
        %2933 = vrot.lane.b32.xlu0 %v2884, 8
        %v2934 = vpop.permute.xlu0 %2933
        %2935 = vrot.lane.b32.xlu0 %v2886, 8
        %v2936 = vpop.permute.xlu0 %2935
        %2937 = vrot.lane.b32.xlu0 %v2888, 8
        %v2938 = vpop.permute.xlu0 %2937
        %2939 = vrot.lane.b32.xlu0 %v2890, 8
        %v2940 = vpop.permute.xlu0 %2939
        %2941 = vrot.lane.b32.xlu0 %v2892, 8
        %v2942 = vpop.permute.xlu0 %2941
        %2943 = vrot.lane.b32.xlu0 %v2894, 8
        %v2944 = vpop.permute.xlu0 %2943
        %2945 = vrot.lane.b32.xlu0 %v2896, 8
        %v2946 = vpop.permute.xlu0 %2945
        %2947 = vrot.lane.b32.xlu0 %v2898, 8
        %v2948 = vpop.permute.xlu0 %2947
        %2949 = vrot.lane.b32.xlu0 %v2900, 8
        %v2950 = vpop.permute.xlu0 %2949
        %2951 = vrot.lane.b32.xlu0 %v2902, 8
        %v2952 = vpop.permute.xlu0 %2951
        %2953 = vrot.lane.b32.xlu0 %v2904, 8
        %v2954 = vpop.permute.xlu0 %2953
        %2955 = vrot.lane.b32.xlu0 %v2906, 8
        %v2956 = vpop.permute.xlu0 %2955
        %2957 = vrot.lane.b32.xlu0 %v2908, 8
        %v2958 = vpop.permute.xlu0 %2957
        %2959 = vrot.lane.b32.xlu0 %v2910, 8
        %v2960 = vpop.permute.xlu0 %2959
        %2961 = vrot.lane.b32.xlu0 %v2912, 8
        %v2962 = vpop.permute.xlu0 %2961
        %2963 = vrot.lane.b32.xlu0 %v2914, 8
        %v2964 = vpop.permute.xlu0 %2963
        %2965 = vrot.lane.b32.xlu0 %v2916, 8
        %v2966 = vpop.permute.xlu0 %2965
        %2967 = vrot.lane.b32.xlu0 %v2918, 8
        %v2968 = vpop.permute.xlu0 %2967
        %2969 = vrot.lane.b32.xlu0 %v2920, 8
        %v2970 = vpop.permute.xlu0 %2969
        %2971 = vrot.lane.b32.xlu0 %v2922, 8
        %v2972 = vpop.permute.xlu0 %2971
        %2973 = vrot.lane.b32.xlu0 %v2924, 8
        %v2974 = vpop.permute.xlu0 %2973
        %2975 = vrot.lane.b32.xlu0 %v2926, 8
        %v2976 = vpop.permute.xlu0 %2975
        %2983 = vrot.lane.b32.xlu0 %v2847, 16
        %v2984 = vpop.permute.xlu0 %2983
        %2985 = vrot.lane.b32.xlu0 %v2827, 16
        %v2986 = vpop.permute.xlu0 %2985
        %2987 = vrot.lane.b32.xlu0 %v2828, 16
        %v2988 = vpop.permute.xlu0 %2987
        %2989 = vrot.lane.b32.xlu0 %v2829, 16
        %v2990 = vpop.permute.xlu0 %2989
        %2991 = vrot.lane.b32.xlu0 %v2830, 16
        %v2992 = vpop.permute.xlu0 %2991
        %2993 = vrot.lane.b32.xlu0 %v2831, 16
        %v2994 = vpop.permute.xlu0 %2993
        %2995 = vrot.lane.b32.xlu0 %v2832, 16
        %v2996 = vpop.permute.xlu0 %2995
        %2997 = vrot.lane.b32.xlu0 %v2833, 16
        %v2998 = vpop.permute.xlu0 %2997
        %2999 = vrot.lane.b32.xlu0 %v2834, 16
        %v3000 = vpop.permute.xlu0 %2999
        %3001 = vrot.lane.b32.xlu0 %v2835, 16
        %v3002 = vpop.permute.xlu0 %3001
        %3003 = vrot.lane.b32.xlu0 %v2836, 16
        %v3004 = vpop.permute.xlu0 %3003
        %3005 = vrot.lane.b32.xlu0 %v2837, 16
        %v3006 = vpop.permute.xlu0 %3005
        %3007 = vrot.lane.b32.xlu0 %v2838, 16
        %v3008 = vpop.permute.xlu0 %3007
        %3009 = vrot.lane.b32.xlu0 %v2839, 16
        %v3010 = vpop.permute.xlu0 %3009
        %3011 = vrot.lane.b32.xlu0 %v2840, 16
        %v3012 = vpop.permute.xlu0 %3011
        %3013 = vrot.lane.b32.xlu0 %v2841, 16
        %v3014 = vpop.permute.xlu0 %3013
        %3015 = vrot.lane.b32.xlu0 %v2842, 16
        %v3016 = vpop.permute.xlu0 %3015
        %3017 = vrot.lane.b32.xlu0 %v2843, 16
        %v3018 = vpop.permute.xlu0 %3017
        %3019 = vrot.lane.b32.xlu0 %v2844, 16
        %v3020 = vpop.permute.xlu0 %3019
        %3021 = vrot.lane.b32.xlu0 %v2845, 16
        %v3022 = vpop.permute.xlu0 %3021
        %3023 = vrot.lane.b32.xlu0 %v2848, 16
        %v3024 = vpop.permute.xlu0 %3023
        %3025 = vrot.lane.b32.xlu0 %v2849, 16
        %v3026 = vpop.permute.xlu0 %3025
        %3027 = vrot.lane.b32.xlu0 %v2850, 16
        %v3028 = vpop.permute.xlu0 %3027
        %3029 = vrot.lane.b32.xlu0 %v2851, 16
        %v3030 = vpop.permute.xlu0 %3029
        %3031 = vrot.lane.b32.xlu0 %v2852, 16
        %v3032 = vpop.permute.xlu0 %3031
        %v3035 = vsel %vm740, %v2817, %v2928
        %v3038 = vsel %vm740, %v2818, %v2930
        %v3041 = vsel %vm740, %v2819, %v2932
        %v3044 = vsel %vm740, %v2820, %v2934
        %v3047 = vsel %vm740, %v2821, %v2936
        %v3050 = vsel %vm740, %v2822, %v2938
        %v3053 = vsel %vm740, %v2823, %v2940
        %v3056 = vsel %vm740, %v2824, %v2942
        %v3059 = vsel %vm740, %v2825, %v2944
        %v3062 = vsel %vm740, %v2826, %v2946
        %v3065 = vsel %vm740, %v2827, %v2948
        %v3068 = vsel %vm740, %v2828, %v2950
        %v3071 = vsel %vm740, %v2829, %v2952
        %v3074 = vsel %vm740, %v2830, %v2954
        %v3077 = vsel %vm740, %v2831, %v2956
        %v3080 = vsel %vm740, %v2832, %v2958
        %v3083 = vsel %vm740, %v2833, %v2960
        %v3086 = vsel %vm740, %v2834, %v2962
        %v3089 = vsel %vm740, %v2835, %v2964
        %v3092 = vsel %vm740, %v2836, %v2966
        %v3095 = vsel %vm740, %v2837, %v2968
        %v3098 = vsel %vm740, %v2838, %v2970
        %v3101 = vsel %vm740, %v2839, %v2972
        %v3104 = vsel %vm740, %v2840, %v2974
        %v3107 = vsel %vm740, %v2841, %v2976
        %v3109 = vsel %vm816, %v3035, %v2984
        %v3111 = vsel %vm816, %v3038, %v2986
        %v3113 = vsel %vm816, %v3041, %v2988
        %v3115 = vsel %vm816, %v3044, %v2990
        %v3117 = vsel %vm816, %v3047, %v2992
        %v3119 = vsel %vm816, %v3050, %v2994
        %v3121 = vsel %vm816, %v3053, %v2996
        %v3123 = vsel %vm816, %v3056, %v2998
        %v3125 = vsel %vm816, %v3059, %v3000
        %v3127 = vsel %vm816, %v3062, %v3002
        %v3129 = vsel %vm816, %v3065, %v3004
        %v3131 = vsel %vm816, %v3068, %v3006
        %v3133 = vsel %vm816, %v3071, %v3008
        %v3135 = vsel %vm816, %v3074, %v3010
        %v3137 = vsel %vm816, %v3077, %v3012
        %v3139 = vsel %vm816, %v3080, %v3014
        %v3141 = vsel %vm816, %v3083, %v3016
        %v3143 = vsel %vm816, %v3086, %v3018
        %v3145 = vsel %vm816, %v3089, %v3020
        %v3147 = vsel %vm816, %v3092, %v3022
        %v3149 = vsel %vm816, %v3095, %v3024
        %v3151 = vsel %vm816, %v3098, %v3026
        %v3153 = vsel %vm816, %v3101, %v3028
        %v3155 = vsel %vm816, %v3104, %v3030
        %v3157 = vsel %vm816, %v3107, %v3032
        %v3183 = vunpack.c.h.b16 %v3109
        %v3184 = vunpack.c.l.b16 %v3111
        %v3185 = vunpack.c.h.b16 %v3111
        %v3186 = vunpack.c.l.b16 %v3113
        %v3187 = vunpack.c.h.b16 %v3113
        %v3188 = vunpack.c.l.b16 %v3115
        %v3189 = vunpack.c.h.b16 %v3115
        %v3190 = vunpack.c.l.b16 %v3117
        %v3191 = vunpack.c.h.b16 %v3117
        %v3192 = vunpack.c.l.b16 %v3119
        %v3193 = vunpack.c.h.b16 %v3119
        %v3194 = vunpack.c.l.b16 %v3121
        %v3195 = vunpack.c.h.b16 %v3121
        %v3196 = vunpack.c.l.b16 %v3123
        %v3197 = vunpack.c.h.b16 %v3123
        %v3198 = vunpack.c.l.b16 %v3125
        %v3199 = vunpack.c.h.b16 %v3125
        %v3200 = vunpack.c.l.b16 %v3127
        %v3201 = vunpack.c.h.b16 %v3127
        %v3202 = vunpack.c.l.b16 %v3129
        %v3203 = vunpack.c.h.b16 %v3129
        %v3204 = vunpack.c.l.b16 %v3131
        %v3205 = vunpack.c.h.b16 %v3131
        %v3206 = vunpack.c.l.b16 %v3133
        %v3207 = vunpack.c.h.b16 %v3133
        %v3208 = vunpack.c.l.b16 %v3135
        %v3209 = vunpack.c.h.b16 %v3135
        %v3210 = vunpack.c.l.b16 %v3137
        %v3211 = vunpack.c.h.b16 %v3137
        %v3212 = vunpack.c.l.b16 %v3139
        %v3213 = vunpack.c.h.b16 %v3139
        %v3214 = vunpack.c.l.b16 %v3141
        %v3215 = vunpack.c.h.b16 %v3141
        %v3216 = vunpack.c.l.b16 %v3143
        %v3217 = vunpack.c.h.b16 %v3143
        %v3218 = vunpack.c.l.b16 %v3145
        %v3219 = vunpack.c.h.b16 %v3145
        %v3220 = vunpack.c.l.b16 %v3147
        %v3221 = vunpack.c.h.b16 %v3147
        %v3222 = vunpack.c.l.b16 %v3149
        %v3223 = vunpack.c.h.b16 %v3149
        %v3224 = vunpack.c.l.b16 %v3151
        %v3225 = vunpack.c.h.b16 %v3151
        %v3226 = vunpack.c.l.b16 %v3153
        %v3227 = vunpack.c.h.b16 %v3153
        %v3228 = vunpack.c.l.b16 %v3155
        %v3229 = vunpack.c.h.b16 %v3155
        %v3230 = vunpack.c.l.b16 %v3157
        %v3231 = vunpack.c.h.b16 %v3157
        %v3232 = vpack.c.b16 %v3183, %v3183
        %v3233 = vpack.c.b16 %v3184, %v3184
        %v3234 = vpack.c.b16 %v3185, %v3185
        %v3235 = vpack.c.b16 %v3186, %v3186
        %v3236 = vpack.c.b16 %v3187, %v3187
        %v3237 = vpack.c.b16 %v3188, %v3188
        %v3238 = vpack.c.b16 %v3189, %v3189
        %v3239 = vpack.c.b16 %v3190, %v3190
        %v3240 = vpack.c.b16 %v3191, %v3191
        %v3241 = vpack.c.b16 %v3192, %v3192
        %v3242 = vpack.c.b16 %v3193, %v3193
        %v3243 = vpack.c.b16 %v3194, %v3194
        %v3244 = vpack.c.b16 %v3195, %v3195
        %v3245 = vpack.c.b16 %v3196, %v3196
        %v3246 = vpack.c.b16 %v3197, %v3197
        %v3247 = vpack.c.b16 %v3198, %v3198
        %v3248 = vpack.c.b16 %v3199, %v3199
        %v3249 = vpack.c.b16 %v3200, %v3200
        %v3250 = vpack.c.b16 %v3201, %v3201
        %v3251 = vpack.c.b16 %v3202, %v3202
        %v3252 = vpack.c.b16 %v3203, %v3203
        %v3253 = vpack.c.b16 %v3204, %v3204
        %v3254 = vpack.c.b16 %v3205, %v3205
        %v3255 = vpack.c.b16 %v3206, %v3206
        %v3256 = vpack.c.b16 %v3207, %v3207
        %v3257 = vpack.c.b16 %v3208, %v3208
        %v3258 = vpack.c.b16 %v3209, %v3209
        %v3259 = vpack.c.b16 %v3210, %v3210
        %v3260 = vpack.c.b16 %v3211, %v3211
        %v3261 = vpack.c.b16 %v3212, %v3212
        %v3262 = vpack.c.b16 %v3213, %v3213
        %v3263 = vpack.c.b16 %v3214, %v3214
        %v3264 = vpack.c.b16 %v3215, %v3215
        %v3265 = vpack.c.b16 %v3216, %v3216
        %v3266 = vpack.c.b16 %v3217, %v3217
        %v3267 = vpack.c.b16 %v3218, %v3218
        %v3268 = vpack.c.b16 %v3219, %v3219
        %v3269 = vpack.c.b16 %v3220, %v3220
        %v3270 = vpack.c.b16 %v3221, %v3221
        %v3271 = vpack.c.b16 %v3222, %v3222
        %v3272 = vpack.c.b16 %v3223, %v3223
        %v3273 = vpack.c.b16 %v3224, %v3224
        %v3274 = vpack.c.b16 %v3225, %v3225
        %v3275 = vpack.c.b16 %v3226, %v3226
        %v3276 = vpack.c.b16 %v3227, %v3227
        %v3277 = vpack.c.b16 %v3228, %v3228
        %v3278 = vpack.c.b16 %v3229, %v3229
        %v3279 = vpack.c.b16 %v3230, %v3230
        %v3280 = vpack.c.b16 %v3231, %v3231
        %vm3330 = vcmask 191488
        %3331 = vst.msk [vmem:[#allocation4] sm:$0xf] %vm3330, %v3232
        %3332 = vst.msk [vmem:[#allocation4 + $0x4] sm:$0xf] %vm3330, %v3233
        %3333 = vst.msk [vmem:[#allocation4 + $0x8] sm:$0xf] %vm3330, %v3234
        %3334 = vst.msk [vmem:[#allocation4 + $0xc] sm:$0xf] %vm3330, %v3235
        %3335 = vst.msk [vmem:[#allocation4 + $0x10] sm:$0xf] %vm3330, %v3236
        %3336 = vst.msk [vmem:[#allocation4 + $0x14] sm:$0xf] %vm3330, %v3237
        %3337 = vst.msk [vmem:[#allocation4 + $0x18] sm:$0xf] %vm3330, %v3238
        %3338 = vst.msk [vmem:[#allocation4 + $0x1c] sm:$0xf] %vm3330, %v3239
        %3339 = vst.msk [vmem:[#allocation4 + $0x20] sm:$0xf] %vm3330, %v3240
        %3340 = vst.msk [vmem:[#allocation4 + $0x24] sm:$0xf] %vm3330, %v3241
        %3341 = vst.msk [vmem:[#allocation4 + $0x28] sm:$0xf] %vm3330, %v3242
        %3342 = vst.msk [vmem:[#allocation4 + $0x2c] sm:$0xf] %vm3330, %v3243
        %3343 = vst.msk [vmem:[#allocation4 + $0x30] sm:$0xf] %vm3330, %v3244
        %3344 = vst.msk [vmem:[#allocation4 + $0x34] sm:$0xf] %vm3330, %v3245
        %3345 = vst.msk [vmem:[#allocation4 + $0x38] sm:$0xf] %vm3330, %v3246
        %3346 = vst.msk [vmem:[#allocation4 + $0x3c] sm:$0xf] %vm3330, %v3247
        %3347 = vst.msk [vmem:[#allocation4 + $0x40] sm:$0xf] %vm3330, %v3248
        %3348 = vst.msk [vmem:[#allocation4 + $0x44] sm:$0xf] %vm3330, %v3249
        %3349 = vst.msk [vmem:[#allocation4 + $0x48] sm:$0xf] %vm3330, %v3250
        %3350 = vst.msk [vmem:[#allocation4 + $0x4c] sm:$0xf] %vm3330, %v3251
        %3351 = vst.msk [vmem:[#allocation4 + $0x50] sm:$0xf] %vm3330, %v3252
        %3352 = vst.msk [vmem:[#allocation4 + $0x54] sm:$0xf] %vm3330, %v3253
        %3353 = vst.msk [vmem:[#allocation4 + $0x58] sm:$0xf] %vm3330, %v3254
        %3354 = vst.msk [vmem:[#allocation4 + $0x5c] sm:$0xf] %vm3330, %v3255
        %3355 = vst.msk [vmem:[#allocation4 + $0x60] sm:$0xf] %vm3330, %v3256
        %3356 = vst.msk [vmem:[#allocation4 + $0x64] sm:$0xf] %vm3330, %v3257
        %3357 = vst.msk [vmem:[#allocation4 + $0x68] sm:$0xf] %vm3330, %v3258
        %3358 = vst.msk [vmem:[#allocation4 + $0x6c] sm:$0xf] %vm3330, %v3259
        %3359 = vst.msk [vmem:[#allocation4 + $0x70] sm:$0xf] %vm3330, %v3260
        %3360 = vst.msk [vmem:[#allocation4 + $0x74] sm:$0xf] %vm3330, %v3261
        %3361 = vst.msk [vmem:[#allocation4 + $0x78] sm:$0xf] %vm3330, %v3262
        %3362 = vst.msk [vmem:[#allocation4 + $0x7c] sm:$0xf] %vm3330, %v3263
        %3363 = vst.msk [vmem:[#allocation4 + $0x80] sm:$0xf] %vm3330, %v3264
        %3364 = vst.msk [vmem:[#allocation4 + $0x84] sm:$0xf] %vm3330, %v3265
        %3365 = vst.msk [vmem:[#allocation4 + $0x88] sm:$0xf] %vm3330, %v3266
        %3366 = vst.msk [vmem:[#allocation4 + $0x8c] sm:$0xf] %vm3330, %v3267
        %3367 = vst.msk [vmem:[#allocation4 + $0x90] sm:$0xf] %vm3330, %v3268
        %3368 = vst.msk [vmem:[#allocation4 + $0x94] sm:$0xf] %vm3330, %v3269
        %3369 = vst.msk [vmem:[#allocation4 + $0x98] sm:$0xf] %vm3330, %v3270
        %3370 = vst.msk [vmem:[#allocation4 + $0x9c] sm:$0xf] %vm3330, %v3271
        %3371 = vst.msk [vmem:[#allocation4 + $0xa0] sm:$0xf] %vm3330, %v3272
        %3372 = vst.msk [vmem:[#allocation4 + $0xa4] sm:$0xf] %vm3330, %v3273
        %3373 = vst.msk [vmem:[#allocation4 + $0xa8] sm:$0xf] %vm3330, %v3274
        %3374 = vst.msk [vmem:[#allocation4 + $0xac] sm:$0xf] %vm3330, %v3275
        %3375 = vst.msk [vmem:[#allocation4 + $0xb0] sm:$0xf] %vm3330, %v3276
        %3376 = vst.msk [vmem:[#allocation4 + $0xb4] sm:$0xf] %vm3330, %v3277
        %3377 = vst.msk [vmem:[#allocation4 + $0xb8] sm:$0xf] %vm3330, %v3278
        %3378 = vst.msk [vmem:[#allocation4 + $0xbc] sm:$0xf] %vm3330, %v3279
        %3379 = vst.msk [vmem:[#allocation4 + $0xc0] sm:$0xf] %vm3330, %v3280
        %v3380 = vld [vmem:[#allocation4] sm:$0xf]
        %v3381 = vld [vmem:[#allocation4 + $0x4] sm:$0xf]
        %v3382 = vld [vmem:[#allocation4 + $0x8] sm:$0xf]
        %v3383 = vld [vmem:[#allocation4 + $0xc] sm:$0xf]
        %v3384 = vld [vmem:[#allocation4 + $0x10] sm:$0xf]
        %v3385 = vld [vmem:[#allocation4 + $0x14] sm:$0xf]
        %v3386 = vld [vmem:[#allocation4 + $0x18] sm:$0xf]
        %v3387 = vld [vmem:[#allocation4 + $0x1c] sm:$0xf]
        %v3388 = vld [vmem:[#allocation4 + $0x20] sm:$0xf]
        %v3389 = vld [vmem:[#allocation4 + $0x24] sm:$0xf]
        %v3390 = vld [vmem:[#allocation4 + $0x28] sm:$0xf]
        %v3391 = vld [vmem:[#allocation4 + $0x2c] sm:$0xf]
        %v3392 = vld [vmem:[#allocation4 + $0x30] sm:$0xf]
        %v3393 = vld [vmem:[#allocation4 + $0x34] sm:$0xf]
        %v3394 = vld [vmem:[#allocation4 + $0x38] sm:$0xf]
        %v3395 = vld [vmem:[#allocation4 + $0x3c] sm:$0xf]
        %v3396 = vld [vmem:[#allocation4 + $0x40] sm:$0xf]
        %v3397 = vld [vmem:[#allocation4 + $0x44] sm:$0xf]
        %v3398 = vld [vmem:[#allocation4 + $0x48] sm:$0xf]
        %v3399 = vld [vmem:[#allocation4 + $0x4c] sm:$0xf]
        %v3400 = vld [vmem:[#allocation4 + $0x50] sm:$0xf]
        %v3401 = vld [vmem:[#allocation4 + $0x54] sm:$0xf]
        %v3402 = vld [vmem:[#allocation4 + $0x58] sm:$0xf]
        %v3403 = vld [vmem:[#allocation4 + $0x5c] sm:$0xf]
        %v3404 = vld [vmem:[#allocation4 + $0x60] sm:$0xf]
        %v3405 = vld [vmem:[#allocation4 + $0x64] sm:$0xf]
        %v3406 = vld [vmem:[#allocation4 + $0x68] sm:$0xf]
        %v3407 = vld [vmem:[#allocation4 + $0x6c] sm:$0xf]
        %v3408 = vld [vmem:[#allocation4 + $0x70] sm:$0xf]
        %v3409 = vld [vmem:[#allocation4 + $0x74] sm:$0xf]
        %v3410 = vld [vmem:[#allocation4 + $0x78] sm:$0xf]
        %v3411 = vld [vmem:[#allocation4 + $0x7c] sm:$0xf]
        %v3412 = vld [vmem:[#allocation4 + $0x80] sm:$0xf]
        %v3413 = vld [vmem:[#allocation4 + $0x84] sm:$0xf]
        %v3414 = vld [vmem:[#allocation4 + $0x88] sm:$0xf]
        %v3415 = vld [vmem:[#allocation4 + $0x8c] sm:$0xf]
        %v3416 = vld [vmem:[#allocation4 + $0x90] sm:$0xf]
        %v3417 = vld [vmem:[#allocation4 + $0x94] sm:$0xf]
        %v3418 = vld [vmem:[#allocation4 + $0x98] sm:$0xf]
        %v3419 = vld [vmem:[#allocation4 + $0x9c] sm:$0xf]
        %v3420 = vld [vmem:[#allocation4 + $0xa0] sm:$0xf]
        %v3421 = vld [vmem:[#allocation4 + $0xa4] sm:$0xf]
        %v3422 = vld [vmem:[#allocation4 + $0xa8] sm:$0xf]
        %v3423 = vld [vmem:[#allocation4 + $0xac] sm:$0xf]
        %v3424 = vld [vmem:[#allocation4 + $0xb0] sm:$0xf]
        %v3425 = vld [vmem:[#allocation4 + $0xb4] sm:$0xf]
        %v3426 = vld [vmem:[#allocation4 + $0xb8] sm:$0xf]
        %v3427 = vld [vmem:[#allocation4 + $0xbc] sm:$0xf]
        %v3428 = vld [vmem:[#allocation13] sm:$0xf]
        %v3429 = vld [vmem:[#allocation13 + $0x4] sm:$0xf]
        %v3430 = vld [vmem:[#allocation13 + $0x8] sm:$0xf]
        %v3431 = vld [vmem:[#allocation4] sm:$0xe]
        %v3432 = vld [vmem:[#allocation4 + $0xc0] sm:$0x3]
        %s3433 = scalar_lea.vmem [#allocation13], 12
        %v3434 = vld [vmem:[%s3433] sm:$0xf]
        %v3435 = vld [vmem:[%s3433 + $0x4] sm:$0xf]
        %v3436 = vld [vmem:[%s3433 + $0x8] sm:$0xf]
        %v3486 = vunpack.c.l.b16 %v3431
        %v3487 = vunpack.c.l.b16 %v3381
        %v3488 = vunpack.c.l.b16 %v3382
        %v3489 = vunpack.c.l.b16 %v3383
        %v3490 = vunpack.c.l.b16 %v3384
        %v3491 = vunpack.c.l.b16 %v3385
        %v3492 = vunpack.c.l.b16 %v3386
        %v3493 = vunpack.c.l.b16 %v3387
        %v3494 = vunpack.c.l.b16 %v3388
        %v3495 = vunpack.c.l.b16 %v3389
        %v3496 = vunpack.c.l.b16 %v3390
        %v3497 = vunpack.c.l.b16 %v3391
        %v3498 = vunpack.c.l.b16 %v3392
        %v3499 = vunpack.c.l.b16 %v3393
        %v3500 = vunpack.c.l.b16 %v3394
        %v3501 = vunpack.c.l.b16 %v3395
        %v3502 = vunpack.c.l.b16 %v3396
        %v3503 = vunpack.c.l.b16 %v3397
        %v3504 = vunpack.c.l.b16 %v3398
        %v3505 = vunpack.c.l.b16 %v3399
        %v3506 = vunpack.c.l.b16 %v3400
        %v3507 = vunpack.c.l.b16 %v3401
        %v3508 = vunpack.c.l.b16 %v3402
        %v3509 = vunpack.c.l.b16 %v3403
        %v3510 = vunpack.c.l.b16 %v3404
        %v3511 = vunpack.c.l.b16 %v3405
        %v3512 = vunpack.c.l.b16 %v3406
        %v3513 = vunpack.c.l.b16 %v3407
        %v3514 = vunpack.c.l.b16 %v3408
        %v3515 = vunpack.c.l.b16 %v3409
        %v3516 = vunpack.c.l.b16 %v3410
        %v3517 = vunpack.c.l.b16 %v3411
        %v3518 = vunpack.c.l.b16 %v3412
        %v3519 = vunpack.c.l.b16 %v3413
        %v3520 = vunpack.c.l.b16 %v3414
        %v3521 = vunpack.c.l.b16 %v3415
        %v3522 = vunpack.c.l.b16 %v3416
        %v3523 = vunpack.c.l.b16 %v3417
        %v3524 = vunpack.c.l.b16 %v3418
        %v3525 = vunpack.c.l.b16 %v3419
        %v3526 = vunpack.c.l.b16 %v3420
        %v3527 = vunpack.c.l.b16 %v3421
        %v3528 = vunpack.c.l.b16 %v3422
        %v3529 = vunpack.c.l.b16 %v3423
        %v3530 = vunpack.c.l.b16 %v3424
        %v3531 = vunpack.c.l.b16 %v3425
        %v3532 = vunpack.c.l.b16 %v3426
        %v3533 = vunpack.c.l.b16 %v3427
        %v3534 = vunpack.c.l.b16 %v3432
        %v3535 = vpack.c.b16 %v3487, %v3486
        %v3536 = vpack.c.b16 %v3489, %v3488
        %v3537 = vpack.c.b16 %v3491, %v3490
        %v3538 = vpack.c.b16 %v3493, %v3492
        %v3539 = vpack.c.b16 %v3495, %v3494
        %v3540 = vpack.c.b16 %v3497, %v3496
        %v3541 = vpack.c.b16 %v3499, %v3498
        %v3542 = vpack.c.b16 %v3501, %v3500
        %v3543 = vpack.c.b16 %v3503, %v3502
        %v3544 = vpack.c.b16 %v3505, %v3504
        %v3545 = vpack.c.b16 %v3507, %v3506
        %v3546 = vpack.c.b16 %v3509, %v3508
        %v3547 = vpack.c.b16 %v3511, %v3510
        %v3548 = vpack.c.b16 %v3513, %v3512
        %v3549 = vpack.c.b16 %v3515, %v3514
        %v3550 = vpack.c.b16 %v3517, %v3516
        %v3551 = vpack.c.b16 %v3519, %v3518
        %v3552 = vpack.c.b16 %v3521, %v3520
        %v3553 = vpack.c.b16 %v3523, %v3522
        %v3554 = vpack.c.b16 %v3525, %v3524
        %v3555 = vpack.c.b16 %v3527, %v3526
        %v3556 = vpack.c.b16 %v3529, %v3528
        %v3557 = vpack.c.b16 %v3531, %v3530
        %v3558 = vpack.c.b16 %v3533, %v3532
        %v3559 = vpack.c.b16 %v3534, %v3534
        %vm3560 = vsmask.f32 6400
        %v3562 = vshrl.u32 %v3535, 16
        %v3564 = vrot.slane %v3562, 1
        %v3565 = vshll.u32 %v3535, 16
        %v3567 = vrot.slane %v3565, 2
        %v3568 = vor.u32 %v3564, %v3567
        %v3570 = vshrl.u32 %v3536, 16
        %v3572 = vrot.slane %v3570, 1
        %v3573 = vshll.u32 %v3536, 16
        %v3575 = vrot.slane %v3573, 2
        %v3576 = vor.u32 %v3572, %v3575
        %v3577 = vsel %vm3560, %v3568, %v3576
        %v3579 = vshrl.u32 %v3537, 16
        %v3581 = vrot.slane %v3579, 1
        %v3582 = vshll.u32 %v3537, 16
        %v3584 = vrot.slane %v3582, 2
        %v3585 = vor.u32 %v3581, %v3584
        %v3586 = vsel %vm3560, %v3576, %v3585
        %v3588 = vshrl.u32 %v3538, 16
        %v3590 = vrot.slane %v3588, 1
        %v3591 = vshll.u32 %v3538, 16
        %v3593 = vrot.slane %v3591, 2
        %v3594 = vor.u32 %v3590, %v3593
        %v3595 = vsel %vm3560, %v3585, %v3594
        %v3597 = vshrl.u32 %v3539, 16
        %v3599 = vrot.slane %v3597, 1
        %v3600 = vshll.u32 %v3539, 16
        %v3602 = vrot.slane %v3600, 2
        %v3603 = vor.u32 %v3599, %v3602
        %v3604 = vsel %vm3560, %v3594, %v3603
        %v3606 = vshrl.u32 %v3540, 16
        %v3608 = vrot.slane %v3606, 1
        %v3609 = vshll.u32 %v3540, 16
        %v3611 = vrot.slane %v3609, 2
        %v3612 = vor.u32 %v3608, %v3611
        %v3613 = vsel %vm3560, %v3603, %v3612
        %v3615 = vshrl.u32 %v3541, 16
        %v3617 = vrot.slane %v3615, 1
        %v3618 = vshll.u32 %v3541, 16
        %v3620 = vrot.slane %v3618, 2
        %v3621 = vor.u32 %v3617, %v3620
        %v3622 = vsel %vm3560, %v3612, %v3621
        %v3624 = vshrl.u32 %v3542, 16
        %v3626 = vrot.slane %v3624, 1
        %v3627 = vshll.u32 %v3542, 16
        %v3629 = vrot.slane %v3627, 2
        %v3630 = vor.u32 %v3626, %v3629
        %v3631 = vsel %vm3560, %v3621, %v3630
        %v3633 = vshrl.u32 %v3543, 16
        %v3635 = vrot.slane %v3633, 1
        %v3636 = vshll.u32 %v3543, 16
        %v3638 = vrot.slane %v3636, 2
        %v3639 = vor.u32 %v3635, %v3638
        %v3640 = vsel %vm3560, %v3630, %v3639
        %v3642 = vshrl.u32 %v3544, 16
        %v3644 = vrot.slane %v3642, 1
        %v3645 = vshll.u32 %v3544, 16
        %v3647 = vrot.slane %v3645, 2
        %v3648 = vor.u32 %v3644, %v3647
        %v3649 = vsel %vm3560, %v3639, %v3648
        %v3651 = vshrl.u32 %v3545, 16
        %v3653 = vrot.slane %v3651, 1
        %v3654 = vshll.u32 %v3545, 16
        %v3656 = vrot.slane %v3654, 2
        %v3657 = vor.u32 %v3653, %v3656
        %v3658 = vsel %vm3560, %v3648, %v3657
        %v3660 = vshrl.u32 %v3546, 16
        %v3662 = vrot.slane %v3660, 1
        %v3663 = vshll.u32 %v3546, 16
        %v3665 = vrot.slane %v3663, 2
        %v3666 = vor.u32 %v3662, %v3665
        %v3667 = vsel %vm3560, %v3657, %v3666
        %v3669 = vshrl.u32 %v3547, 16
        %v3671 = vrot.slane %v3669, 1
        %v3672 = vshll.u32 %v3547, 16
        %v3674 = vrot.slane %v3672, 2
        %v3675 = vor.u32 %v3671, %v3674
        %v3676 = vsel %vm3560, %v3666, %v3675
        %v3678 = vshrl.u32 %v3548, 16
        %v3680 = vrot.slane %v3678, 1
        %v3681 = vshll.u32 %v3548, 16
        %v3683 = vrot.slane %v3681, 2
        %v3684 = vor.u32 %v3680, %v3683
        %v3685 = vsel %vm3560, %v3675, %v3684
        %v3687 = vshrl.u32 %v3549, 16
        %v3689 = vrot.slane %v3687, 1
        %v3690 = vshll.u32 %v3549, 16
        %v3692 = vrot.slane %v3690, 2
        %v3693 = vor.u32 %v3689, %v3692
        %v3694 = vsel %vm3560, %v3684, %v3693
        %v3696 = vshrl.u32 %v3550, 16
        %v3698 = vrot.slane %v3696, 1
        %v3699 = vshll.u32 %v3550, 16
        %v3701 = vrot.slane %v3699, 2
        %v3702 = vor.u32 %v3698, %v3701
        %v3703 = vsel %vm3560, %v3693, %v3702
        %v3705 = vshrl.u32 %v3551, 16
        %v3707 = vrot.slane %v3705, 1
        %v3708 = vshll.u32 %v3551, 16
        %v3710 = vrot.slane %v3708, 2
        %v3711 = vor.u32 %v3707, %v3710
        %v3712 = vsel %vm3560, %v3702, %v3711
        %v3714 = vshrl.u32 %v3552, 16
        %v3716 = vrot.slane %v3714, 1
        %v3717 = vshll.u32 %v3552, 16
        %v3719 = vrot.slane %v3717, 2
        %v3720 = vor.u32 %v3716, %v3719
        %v3721 = vsel %vm3560, %v3711, %v3720
        %v3723 = vshrl.u32 %v3553, 16
        %v3725 = vrot.slane %v3723, 1
        %v3726 = vshll.u32 %v3553, 16
        %v3728 = vrot.slane %v3726, 2
        %v3729 = vor.u32 %v3725, %v3728
        %v3730 = vsel %vm3560, %v3720, %v3729
        %v3732 = vshrl.u32 %v3554, 16
        %v3734 = vrot.slane %v3732, 1
        %v3735 = vshll.u32 %v3554, 16
        %v3737 = vrot.slane %v3735, 2
        %v3738 = vor.u32 %v3734, %v3737
        %v3739 = vsel %vm3560, %v3729, %v3738
        %v3741 = vshrl.u32 %v3555, 16
        %v3743 = vrot.slane %v3741, 1
        %v3744 = vshll.u32 %v3555, 16
        %v3746 = vrot.slane %v3744, 2
        %v3747 = vor.u32 %v3743, %v3746
        %v3748 = vsel %vm3560, %v3738, %v3747
        %v3750 = vshrl.u32 %v3556, 16
        %v3752 = vrot.slane %v3750, 1
        %v3753 = vshll.u32 %v3556, 16
        %v3755 = vrot.slane %v3753, 2
        %v3756 = vor.u32 %v3752, %v3755
        %v3757 = vsel %vm3560, %v3747, %v3756
        %v3759 = vshrl.u32 %v3557, 16
        %v3761 = vrot.slane %v3759, 1
        %v3762 = vshll.u32 %v3557, 16
        %v3764 = vrot.slane %v3762, 2
        %v3765 = vor.u32 %v3761, %v3764
        %v3766 = vsel %vm3560, %v3756, %v3765
        %v3768 = vshrl.u32 %v3558, 16
        %v3770 = vrot.slane %v3768, 1
        %v3771 = vshll.u32 %v3558, 16
        %v3773 = vrot.slane %v3771, 2
        %v3774 = vor.u32 %v3770, %v3773
        %v3775 = vsel %vm3560, %v3765, %v3774
        %v3777 = vshrl.u32 %v3559, 16
        %v3779 = vrot.slane %v3777, 1
        %v3780 = vshll.u32 %v3559, 16
        %v3782 = vrot.slane %v3780, 2
        %v3783 = vor.u32 %v3779, %v3782
        %v3784 = vsel %vm3560, %v3774, %v3783
        %v3788 = vunpack.c.l.b16 %v3434
        %v3789 = vunpack.c.l.b16 %v3435
        %v3790 = vunpack.c.l.b16 %v3436
        %v3791 = vpack.c.b16 %v3789, %v3788
        %v3792 = vpack.c.b16 %v3790, %v3790
        %v3795 = vsel %vm892, %v3577, 0
        %v3798 = vsel %vm892, %v3586, 0
        %v3801 = vsel %vm892, %v3595, 0
        %v3804 = vsel %vm892, %v3604, 0
        %v3807 = vsel %vm892, %v3613, 0
        %v3810 = vsel %vm892, %v3622, 0
        %v3813 = vsel %vm892, %v3631, 0
        %v3816 = vsel %vm892, %v3640, 0
        %v3819 = vsel %vm892, %v3649, 0
        %v3822 = vsel %vm892, %v3658, 0
        %v3825 = vsel %vm892, %v3667, 0
        %v3828 = vsel %vm892, %v3676, 0
        %v3831 = vsel %vm892, %v3685, 0
        %v3834 = vsel %vm892, %v3694, 0
        %v3837 = vsel %vm892, %v3703, 0
        %v3840 = vsel %vm892, %v3712, 0
        %v3843 = vsel %vm892, %v3721, 0
        %v3846 = vsel %vm892, %v3730, 0
        %v3849 = vsel %vm892, %v3739, 0
        %v3852 = vsel %vm892, %v3748, 0
        %v3855 = vsel %vm892, %v3757, 0
        %v3858 = vsel %vm892, %v3766, 0
        %v3861 = vsel %vm892, %v3775, 0
        %v3864 = vsel %vm892, %v3784, 0
        %v3867 = vsel %vm1107, %v3792, 0
        %3869 = vmatprep.subr.bf16.mxu0 0
        %3870 = vmatpush1.bf16.msra.mxu0 %v3791
        %3871 = vmatprep.subr.bf16.mxu0 0
        %3872 = vmatpush1.bf16.msra.mxu0 %v3867
        %3873 = vmatprep.subr.bf16.mxu0 0
        %3874 = vmatpush1.bf16.msra.mxu0 0
        %3875 = vmatprep.subr.bf16.mxu0 0
        %3876 = vmatpush1.bf16.msra.mxu0 0
        %3877 = vmatprep.subr.bf16.mxu0 0
        %3878 = vmatpush1.bf16.msra.mxu0 0
        %3879 = vmatprep.subr.bf16.mxu0 0
        %3880 = vmatpush1.bf16.msra.mxu0 0
        %3881 = vmatprep.subr.bf16.mxu0 0
        %3882 = vmatpush1.bf16.msra.mxu0 0
        %3883 = vmatprep.subr.bf16.mxu0 0
        %3884 = vmatpush1.bf16.msra.mxu0 0
        %3885 = vmatprep.subr.bf16.mxu0 0
        %3886 = vmatpush1.bf16.msra.mxu0 0
        %3887 = vmatprep.subr.bf16.mxu0 0
        %3888 = vmatpush1.bf16.msra.mxu0 0
        %3889 = vmatprep.subr.bf16.mxu0 0
        %3890 = vmatpush1.bf16.msra.mxu0 0
        %3891 = vmatprep.subr.bf16.mxu0 0
        %3892 = vmatpush1.bf16.msra.mxu0 0
        %3893 = vmatprep.subr.bf16.mxu0 0
        %3894 = vmatpush1.bf16.msra.mxu0 0
        %3895 = vmatprep.subr.bf16.mxu0 0
        %3896 = vmatpush1.bf16.msra.mxu0 0
        %3897 = vmatprep.subr.bf16.mxu0 0
        %3898 = vmatpush1.bf16.msra.mxu0 0
        %3899 = vmatprep.subr.bf16.mxu0 0
        %3900 = vmatpush1.bf16.msra.mxu0 0
        %3901 = vmatprep.mubr.bf16.mxu0 0
        %3902 = vmatmul.mubr.bf16.gmra.mrb[0].mxu0 %v3795
        %v3903 = vpop.f32.mrb[0].mxu0
        %v3904 = vadd.f32 0.0, %v3903
        %v3905 = vpop.f32.mrb[0].mxu0
        %v3906 = vpop.f32.mrb[0].mxu0
        %v3907 = vadd.f32 0.0, %v3906
        %v3908 = vpop.f32.mrb[0].mxu0
        %3909 = vmatprep.mubr.bf16.mxu0 0
        %3910 = vmatmul.mubr.bf16.gmra.mrb[0].mxu0 %v3798
        %v3911 = vpop.f32.mrb[0].mxu0
        %v3912 = vadd.f32 0.0, %v3911
        %v3913 = vpop.f32.mrb[0].mxu0
        %v3914 = vpop.f32.mrb[0].mxu0
        %v3915 = vadd.f32 0.0, %v3914
        %v3916 = vpop.f32.mrb[0].mxu0
        %3917 = vmatprep.mubr.bf16.mxu0 0
        %3918 = vmatmul.mubr.bf16.gmra.mrb[0].mxu0 %v3801
        %v3919 = vpop.f32.mrb[0].mxu0
        %v3920 = vadd.f32 0.0, %v3919
        %v3921 = vpop.f32.mrb[0].mxu0
        %v3922 = vpop.f32.mrb[0].mxu0
        %v3923 = vadd.f32 0.0, %v3922
        %v3924 = vpop.f32.mrb[0].mxu0
        %3925 = vmatprep.mubr.bf16.mxu0 0
        %3926 = vmatmul.mubr.bf16.gmra.mrb[0].mxu0 %v3804
        %v3927 = vpop.f32.mrb[0].mxu0
        %v3928 = vadd.f32 0.0, %v3927
        %v3929 = vpop.f32.mrb[0].mxu0
        %v3930 = vpop.f32.mrb[0].mxu0
        %v3931 = vadd.f32 0.0, %v3930
        %v3932 = vpop.f32.mrb[0].mxu0
        %3933 = vmatprep.mubr.bf16.mxu0 0
        %3934 = vmatmul.mubr.bf16.gmra.mrb[0].mxu0 %v3807
        %v3935 = vpop.f32.mrb[0].mxu0
        %v3936 = vadd.f32 0.0, %v3935
        %v3937 = vpop.f32.mrb[0].mxu0
        %v3938 = vpop.f32.mrb[0].mxu0
        %v3939 = vadd.f32 0.0, %v3938
        %v3940 = vpop.f32.mrb[0].mxu0
        %3941 = vmatprep.mubr.bf16.mxu0 0
        %3942 = vmatmul.mubr.bf16.gmra.mrb[0].mxu0 %v3810
        %v3943 = vpop.f32.mrb[0].mxu0
        %v3944 = vadd.f32 0.0, %v3943
        %v3945 = vpop.f32.mrb[0].mxu0
        %v3946 = vpop.f32.mrb[0].mxu0
        %v3947 = vadd.f32 0.0, %v3946
        %v3948 = vpop.f32.mrb[0].mxu0
        %3949 = vmatprep.mubr.bf16.mxu0 0
        %3950 = vmatmul.mubr.bf16.gmra.mrb[0].mxu0 %v3813
        %v3951 = vpop.f32.mrb[0].mxu0
        %v3952 = vadd.f32 0.0, %v3951
        %v3953 = vpop.f32.mrb[0].mxu0
        %v3954 = vpop.f32.mrb[0].mxu0
        %v3955 = vadd.f32 0.0, %v3954
        %v3956 = vpop.f32.mrb[0].mxu0
        %3957 = vmatprep.mubr.bf16.mxu0 0
        %3958 = vmatmul.mubr.bf16.gmra.mrb[0].mxu0 %v3816
        %v3959 = vpop.f32.mrb[0].mxu0
        %v3960 = vadd.f32 0.0, %v3959
        %v3961 = vpop.f32.mrb[0].mxu0
        %v3962 = vpop.f32.mrb[0].mxu0
        %v3963 = vadd.f32 0.0, %v3962
        %v3964 = vpop.f32.mrb[0].mxu0
        %3965 = vmatprep.mubr.bf16.mxu0 0
        %3966 = vmatmul.mubr.bf16.gmra.mrb[0].mxu0 %v3819
        %v3967 = vpop.f32.mrb[0].mxu0
        %v3968 = vadd.f32 0.0, %v3967
        %v3969 = vpop.f32.mrb[0].mxu0
        %v3970 = vpop.f32.mrb[0].mxu0
        %v3971 = vadd.f32 0.0, %v3970
        %v3972 = vpop.f32.mrb[0].mxu0
        %3973 = vmatprep.mubr.bf16.mxu0 0
        %3974 = vmatmul.mubr.bf16.gmra.mrb[0].mxu0 %v3822
        %v3975 = vpop.f32.mrb[0].mxu0
        %v3976 = vadd.f32 0.0, %v3975
        %v3977 = vpop.f32.mrb[0].mxu0
        %v3978 = vpop.f32.mrb[0].mxu0
        %v3979 = vadd.f32 0.0, %v3978
        %v3980 = vpop.f32.mrb[0].mxu0
        %3981 = vmatprep.mubr.bf16.mxu0 0
        %3982 = vmatmul.mubr.bf16.gmra.mrb[0].mxu0 %v3825
        %v3983 = vpop.f32.mrb[0].mxu0
        %v3984 = vadd.f32 0.0, %v3983
        %v3985 = vpop.f32.mrb[0].mxu0
        %v3986 = vpop.f32.mrb[0].mxu0
        %v3987 = vadd.f32 0.0, %v3986
        %v3988 = vpop.f32.mrb[0].mxu0
        %3989 = vmatprep.mubr.bf16.mxu0 0
        %3990 = vmatmul.mubr.bf16.gmra.mrb[0].mxu0 %v3828
        %v3991 = vpop.f32.mrb[0].mxu0
        %v3992 = vadd.f32 0.0, %v3991
        %v3993 = vpop.f32.mrb[0].mxu0
        %v3994 = vpop.f32.mrb[0].mxu0
        %v3995 = vadd.f32 0.0, %v3994
        %v3996 = vpop.f32.mrb[0].mxu0
        %3997 = vmatprep.mubr.bf16.mxu0 0
        %3998 = vmatmul.mubr.bf16.gmra.mrb[0].mxu0 %v3831
        %v3999 = vpop.f32.mrb[0].mxu0
        %v4000 = vadd.f32 0.0, %v3999
        %v4001 = vpop.f32.mrb[0].mxu0
        %v4002 = vpop.f32.mrb[0].mxu0
        %v4003 = vadd.f32 0.0, %v4002
        %v4004 = vpop.f32.mrb[0].mxu0
        %4005 = vmatprep.mubr.bf16.mxu0 0
        %4006 = vmatmul.mubr.bf16.gmra.mrb[0].mxu0 %v3834
        %v4007 = vpop.f32.mrb[0].mxu0
        %v4008 = vadd.f32 0.0, %v4007
        %v4009 = vpop.f32.mrb[0].mxu0
        %v4010 = vpop.f32.mrb[0].mxu0
        %v4011 = vadd.f32 0.0, %v4010
        %v4012 = vpop.f32.mrb[0].mxu0
        %4013 = vmatprep.mubr.bf16.mxu0 0
        %4014 = vmatmul.mubr.bf16.gmra.mrb[0].mxu0 %v3837
        %v4015 = vpop.f32.mrb[0].mxu0
        %v4016 = vadd.f32 0.0, %v4015
        %v4017 = vpop.f32.mrb[0].mxu0
        %v4018 = vpop.f32.mrb[0].mxu0
        %v4019 = vadd.f32 0.0, %v4018
        %v4020 = vpop.f32.mrb[0].mxu0
        %4021 = vmatprep.mubr.bf16.mxu0 0
        %4022 = vmatmul.mubr.bf16.gmra.mrb[0].mxu0 %v3840
        %v4023 = vpop.f32.mrb[0].mxu0
        %v4024 = vadd.f32 0.0, %v4023
        %v4025 = vpop.f32.mrb[0].mxu0
        %v4026 = vpop.f32.mrb[0].mxu0
        %v4027 = vadd.f32 0.0, %v4026
        %v4028 = vpop.f32.mrb[0].mxu0
        %4029 = vmatprep.mubr.bf16.mxu0 0
        %4030 = vmatmul.mubr.bf16.gmra.mrb[0].mxu0 %v3843
        %v4031 = vpop.f32.mrb[0].mxu0
        %v4032 = vadd.f32 0.0, %v4031
        %v4033 = vpop.f32.mrb[0].mxu0
        %v4034 = vpop.f32.mrb[0].mxu0
        %v4035 = vadd.f32 0.0, %v4034
        %v4036 = vpop.f32.mrb[0].mxu0
        %4037 = vmatprep.mubr.bf16.mxu0 0
        %4038 = vmatmul.mubr.bf16.gmra.mrb[0].mxu0 %v3846
        %v4039 = vpop.f32.mrb[0].mxu0
        %v4040 = vadd.f32 0.0, %v4039
        %v4041 = vpop.f32.mrb[0].mxu0
        %v4042 = vpop.f32.mrb[0].mxu0
        %v4043 = vadd.f32 0.0, %v4042
        %v4044 = vpop.f32.mrb[0].mxu0
        %4045 = vmatprep.mubr.bf16.mxu0 0
        %4046 = vmatmul.mubr.bf16.gmra.mrb[0].mxu0 %v3849
        %v4047 = vpop.f32.mrb[0].mxu0
        %v4048 = vadd.f32 0.0, %v4047
        %v4049 = vpop.f32.mrb[0].mxu0
        %v4050 = vpop.f32.mrb[0].mxu0
        %v4051 = vadd.f32 0.0, %v4050
        %v4052 = vpop.f32.mrb[0].mxu0
        %4053 = vmatprep.mubr.bf16.mxu0 0
        %4054 = vmatmul.mubr.bf16.gmra.mrb[0].mxu0 %v3852
        %v4055 = vpop.f32.mrb[0].mxu0
        %v4056 = vadd.f32 0.0, %v4055
        %v4057 = vpop.f32.mrb[0].mxu0
        %v4058 = vpop.f32.mrb[0].mxu0
        %v4059 = vadd.f32 0.0, %v4058
        %v4060 = vpop.f32.mrb[0].mxu0
        %4061 = vmatprep.mubr.bf16.mxu0 0
        %4062 = vmatmul.mubr.bf16.gmra.mrb[0].mxu0 %v3855
        %v4063 = vpop.f32.mrb[0].mxu0
        %v4064 = vadd.f32 0.0, %v4063
        %v4065 = vpop.f32.mrb[0].mxu0
        %v4066 = vpop.f32.mrb[0].mxu0
        %v4067 = vadd.f32 0.0, %v4066
        %v4068 = vpop.f32.mrb[0].mxu0
        %4069 = vmatprep.mubr.bf16.mxu0 0
        %4070 = vmatmul.mubr.bf16.gmra.mrb[0].mxu0 %v3858
        %v4071 = vpop.f32.mrb[0].mxu0
        %v4072 = vadd.f32 0.0, %v4071
        %v4073 = vpop.f32.mrb[0].mxu0
        %v4074 = vpop.f32.mrb[0].mxu0
        %v4075 = vadd.f32 0.0, %v4074
        %v4076 = vpop.f32.mrb[0].mxu0
        %4077 = vmatprep.mubr.bf16.mxu0 0
        %4078 = vmatmul.mubr.bf16.gmra.mrb[0].mxu0 %v3861
        %v4079 = vpop.f32.mrb[0].mxu0
        %v4080 = vadd.f32 0.0, %v4079
        %v4081 = vpop.f32.mrb[0].mxu0
        %v4082 = vpop.f32.mrb[0].mxu0
        %v4083 = vadd.f32 0.0, %v4082
        %v4084 = vpop.f32.mrb[0].mxu0
        %4085 = vmatprep.mubr.bf16.mxu0 0
        %4086 = vmatmul.mubr.bf16.gmra.mrb[0].mxu0 %v3864
        %v4087 = vpop.f32.mrb[0].mxu0
        %v4088 = vadd.f32 0.0, %v4087
        %v4089 = vpop.f32.mrb[0].mxu0
        %v4090 = vpop.f32.mrb[0].mxu0
        %v4091 = vadd.f32 0.0, %v4090
        %v4092 = vpop.f32.mrb[0].mxu0
        %4093 = vdwg.mxu0
        %v4095 = vunpack.c.l.b16 %v3380
        %v4096 = vpack.c.b16 %v3487, %v4095
        %v4100 = vunpack.c.l.b16 %v3428
        %v4101 = vunpack.c.l.b16 %v3429
        %v4102 = vunpack.c.l.b16 %v3430
        %v4103 = vpack.c.b16 %v4101, %v4100
        %v4104 = vpack.c.b16 %v4102, %v4102
        %v4107 = vsel %vm892, %v4096, 0
        %v4109 = vsel %vm892, %v3536, 0
        %v4111 = vsel %vm892, %v3537, 0
        %v4113 = vsel %vm892, %v3538, 0
        %v4115 = vsel %vm892, %v3539, 0
        %v4117 = vsel %vm892, %v3540, 0
        %v4119 = vsel %vm892, %v3541, 0
        %v4121 = vsel %vm892, %v3542, 0
        %v4123 = vsel %vm892, %v3543, 0
        %v4125 = vsel %vm892, %v3544, 0
        %v4127 = vsel %vm892, %v3545, 0
        %v4129 = vsel %vm892, %v3546, 0
        %v4131 = vsel %vm892, %v3547, 0
        %v4133 = vsel %vm892, %v3548, 0
        %v4135 = vsel %vm892, %v3549, 0
        %v4137 = vsel %vm892, %v3550, 0
        %v4139 = vsel %vm892, %v3551, 0
        %v4141 = vsel %vm892, %v3552, 0
        %v4143 = vsel %vm892, %v3553, 0
        %v4145 = vsel %vm892, %v3554, 0
        %v4147 = vsel %vm892, %v3555, 0
        %v4149 = vsel %vm892, %v3556, 0
        %v4151 = vsel %vm892, %v3557, 0
        %v4153 = vsel %vm892, %v3558, 0
        %v4156 = vsel %vm1107, %v4104, 0
        %4158 = vmatprep.subr.bf16.mxu0 0
        %4159 = vmatpush1.bf16.msra.mxu0 %v4103
        %4160 = vmatprep.subr.bf16.mxu0 0
        %4161 = vmatpush1.bf16.msra.mxu0 %v4156
        %4162 = vmatprep.subr.bf16.mxu0 0
        %4163 = vmatpush1.bf16.msra.mxu0 0
        %4164 = vmatprep.subr.bf16.mxu0 0
        %4165 = vmatpush1.bf16.msra.mxu0 0
        %4166 = vmatprep.subr.bf16.mxu0 0
        %4167 = vmatpush1.bf16.msra.mxu0 0
        %4168 = vmatprep.subr.bf16.mxu0 0
        %4169 = vmatpush1.bf16.msra.mxu0 0
        %4170 = vmatprep.subr.bf16.mxu0 0
        %4171 = vmatpush1.bf16.msra.mxu0 0
        %4172 = vmatprep.subr.bf16.mxu0 0
        %4173 = vmatpush1.bf16.msra.mxu0 0
        %4174 = vmatprep.subr.bf16.mxu0 0
        %4175 = vmatpush1.bf16.msra.mxu0 0
        %4176 = vmatprep.subr.bf16.mxu0 0
        %4177 = vmatpush1.bf16.msra.mxu0 0
        %4178 = vmatprep.subr.bf16.mxu0 0
        %4179 = vmatpush1.bf16.msra.mxu0 0
        %4180 = vmatprep.subr.bf16.mxu0 0
        %4181 = vmatpush1.bf16.msra.mxu0 0
        %4182 = vmatprep.subr.bf16.mxu0 0
        %4183 = vmatpush1.bf16.msra.mxu0 0
        %4184 = vmatprep.subr.bf16.mxu0 0
        %4185 = vmatpush1.bf16.msra.mxu0 0
        %4186 = vmatprep.subr.bf16.mxu0 0
        %4187 = vmatpush1.bf16.msra.mxu0 0
        %4188 = vmatprep.subr.bf16.mxu0 0
        %4189 = vmatpush1.bf16.msra.mxu0 0
        %4190 = vmatprep.mubr.bf16.mxu0 0
        %4191 = vmatmul.mubr.bf16.gmra.mrb[0].mxu0 %v4107
        %v4192 = vpop.f32.mrb[0].mxu0
        %v4193 = vadd.f32 %v3904, %v4192
        %v4194 = vpop.f32.mrb[0].mxu0
        %v4195 = vpop.f32.mrb[0].mxu0
        %v4196 = vadd.f32 %v3907, %v4195
        %v4197 = vpop.f32.mrb[0].mxu0
        %4198 = vmatprep.mubr.bf16.mxu0 0
        %4199 = vmatmul.mubr.bf16.gmra.mrb[0].mxu0 %v4109
        %v4200 = vpop.f32.mrb[0].mxu0
        %v4201 = vadd.f32 %v3912, %v4200
        %v4202 = vpop.f32.mrb[0].mxu0
        %v4203 = vpop.f32.mrb[0].mxu0
        %v4204 = vadd.f32 %v3915, %v4203
        %v4205 = vpop.f32.mrb[0].mxu0
        %4206 = vmatprep.mubr.bf16.mxu0 0
        %4207 = vmatmul.mubr.bf16.gmra.mrb[0].mxu0 %v4111
        %v4208 = vpop.f32.mrb[0].mxu0
        %v4209 = vadd.f32 %v3920, %v4208
        %v4210 = vpop.f32.mrb[0].mxu0
        %v4211 = vpop.f32.mrb[0].mxu0
        %v4212 = vadd.f32 %v3923, %v4211
        %v4213 = vpop.f32.mrb[0].mxu0
        %4214 = vmatprep.mubr.bf16.mxu0 0
        %4215 = vmatmul.mubr.bf16.gmra.mrb[0].mxu0 %v4113
        %v4216 = vpop.f32.mrb[0].mxu0
        %v4217 = vadd.f32 %v3928, %v4216
        %v4218 = vpop.f32.mrb[0].mxu0
        %v4219 = vpop.f32.mrb[0].mxu0
        %v4220 = vadd.f32 %v3931, %v4219
        %v4221 = vpop.f32.mrb[0].mxu0
        %4222 = vmatprep.mubr.bf16.mxu0 0
        %4223 = vmatmul.mubr.bf16.gmra.mrb[0].mxu0 %v4115
        %v4224 = vpop.f32.mrb[0].mxu0
        %v4225 = vadd.f32 %v3936, %v4224
        %v4226 = vpop.f32.mrb[0].mxu0
        %v4227 = vpop.f32.mrb[0].mxu0
        %v4228 = vadd.f32 %v3939, %v4227
        %v4229 = vpop.f32.mrb[0].mxu0
        %4230 = vmatprep.mubr.bf16.mxu0 0
        %4231 = vmatmul.mubr.bf16.gmra.mrb[0].mxu0 %v4117
        %v4232 = vpop.f32.mrb[0].mxu0
        %v4233 = vadd.f32 %v3944, %v4232
        %v4234 = vpop.f32.mrb[0].mxu0
        %v4235 = vpop.f32.mrb[0].mxu0
        %v4236 = vadd.f32 %v3947, %v4235
        %v4237 = vpop.f32.mrb[0].mxu0
        %4238 = vmatprep.mubr.bf16.mxu0 0
        %4239 = vmatmul.mubr.bf16.gmra.mrb[0].mxu0 %v4119
        %v4240 = vpop.f32.mrb[0].mxu0
        %v4241 = vadd.f32 %v3952, %v4240
        %v4242 = vpop.f32.mrb[0].mxu0
        %v4243 = vpop.f32.mrb[0].mxu0
        %v4244 = vadd.f32 %v3955, %v4243
        %v4245 = vpop.f32.mrb[0].mxu0
        %4246 = vmatprep.mubr.bf16.mxu0 0
        %4247 = vmatmul.mubr.bf16.gmra.mrb[0].mxu0 %v4121
        %v4248 = vpop.f32.mrb[0].mxu0
        %v4249 = vadd.f32 %v3960, %v4248
        %v4250 = vpop.f32.mrb[0].mxu0
        %v4251 = vpop.f32.mrb[0].mxu0
        %v4252 = vadd.f32 %v3963, %v4251
        %v4253 = vpop.f32.mrb[0].mxu0
        %4254 = vmatprep.mubr.bf16.mxu0 0
        %4255 = vmatmul.mubr.bf16.gmra.mrb[0].mxu0 %v4123
        %v4256 = vpop.f32.mrb[0].mxu0
        %v4257 = vadd.f32 %v3968, %v4256
        %v4258 = vpop.f32.mrb[0].mxu0
        %v4259 = vpop.f32.mrb[0].mxu0
        %v4260 = vadd.f32 %v3971, %v4259
        %v4261 = vpop.f32.mrb[0].mxu0
        %4262 = vmatprep.mubr.bf16.mxu0 0
        %4263 = vmatmul.mubr.bf16.gmra.mrb[0].mxu0 %v4125
        %v4264 = vpop.f32.mrb[0].mxu0
        %v4265 = vadd.f32 %v3976, %v4264
        %v4266 = vpop.f32.mrb[0].mxu0
        %v4267 = vpop.f32.mrb[0].mxu0
        %v4268 = vadd.f32 %v3979, %v4267
        %v4269 = vpop.f32.mrb[0].mxu0
        %4270 = vmatprep.mubr.bf16.mxu0 0
        %4271 = vmatmul.mubr.bf16.gmra.mrb[0].mxu0 %v4127
        %v4272 = vpop.f32.mrb[0].mxu0
        %v4273 = vadd.f32 %v3984, %v4272
        %v4274 = vpop.f32.mrb[0].mxu0
        %v4275 = vpop.f32.mrb[0].mxu0
        %v4276 = vadd.f32 %v3987, %v4275
        %v4277 = vpop.f32.mrb[0].mxu0
        %4278 = vmatprep.mubr.bf16.mxu0 0
        %4279 = vmatmul.mubr.bf16.gmra.mrb[0].mxu0 %v4129
        %v4280 = vpop.f32.mrb[0].mxu0
        %v4281 = vadd.f32 %v3992, %v4280
        %v4282 = vpop.f32.mrb[0].mxu0
        %v4283 = vpop.f32.mrb[0].mxu0
        %v4284 = vadd.f32 %v3995, %v4283
        %v4285 = vpop.f32.mrb[0].mxu0
        %4286 = vmatprep.mubr.bf16.mxu0 0
        %4287 = vmatmul.mubr.bf16.gmra.mrb[0].mxu0 %v4131
        %v4288 = vpop.f32.mrb[0].mxu0
        %v4289 = vadd.f32 %v4000, %v4288
        %v4290 = vpop.f32.mrb[0].mxu0
        %v4291 = vpop.f32.mrb[0].mxu0
        %v4292 = vadd.f32 %v4003, %v4291
        %v4293 = vpop.f32.mrb[0].mxu0
        %4294 = vmatprep.mubr.bf16.mxu0 0
        %4295 = vmatmul.mubr.bf16.gmra.mrb[0].mxu0 %v4133
        %v4296 = vpop.f32.mrb[0].mxu0
        %v4297 = vadd.f32 %v4008, %v4296
        %v4298 = vpop.f32.mrb[0].mxu0
        %v4299 = vpop.f32.mrb[0].mxu0
        %v4300 = vadd.f32 %v4011, %v4299
        %v4301 = vpop.f32.mrb[0].mxu0
        %4302 = vmatprep.mubr.bf16.mxu0 0
        %4303 = vmatmul.mubr.bf16.gmra.mrb[0].mxu0 %v4135
        %v4304 = vpop.f32.mrb[0].mxu0
        %v4305 = vadd.f32 %v4016, %v4304
        %v4306 = vpop.f32.mrb[0].mxu0
        %v4307 = vpop.f32.mrb[0].mxu0
        %v4308 = vadd.f32 %v4019, %v4307
        %v4309 = vpop.f32.mrb[0].mxu0
        %4310 = vmatprep.mubr.bf16.mxu0 0
        %4311 = vmatmul.mubr.bf16.gmra.mrb[0].mxu0 %v4137
        %v4312 = vpop.f32.mrb[0].mxu0
        %v4313 = vadd.f32 %v4024, %v4312
        %v4314 = vpop.f32.mrb[0].mxu0
        %v4315 = vpop.f32.mrb[0].mxu0
        %v4316 = vadd.f32 %v4027, %v4315
        %v4317 = vpop.f32.mrb[0].mxu0
        %4318 = vmatprep.mubr.bf16.mxu0 0
        %4319 = vmatmul.mubr.bf16.gmra.mrb[0].mxu0 %v4139
        %v4320 = vpop.f32.mrb[0].mxu0
        %v4321 = vadd.f32 %v4032, %v4320
        %v4322 = vpop.f32.mrb[0].mxu0
        %v4323 = vpop.f32.mrb[0].mxu0
        %v4324 = vadd.f32 %v4035, %v4323
        %v4325 = vpop.f32.mrb[0].mxu0
        %4326 = vmatprep.mubr.bf16.mxu0 0
        %4327 = vmatmul.mubr.bf16.gmra.mrb[0].mxu0 %v4141
        %v4328 = vpop.f32.mrb[0].mxu0
        %v4329 = vadd.f32 %v4040, %v4328
        %v4330 = vpop.f32.mrb[0].mxu0
        %v4331 = vpop.f32.mrb[0].mxu0
        %v4332 = vadd.f32 %v4043, %v4331
        %v4333 = vpop.f32.mrb[0].mxu0
        %4334 = vmatprep.mubr.bf16.mxu0 0
        %4335 = vmatmul.mubr.bf16.gmra.mrb[0].mxu0 %v4143
        %v4336 = vpop.f32.mrb[0].mxu0
        %v4337 = vadd.f32 %v4048, %v4336
        %v4338 = vpop.f32.mrb[0].mxu0
        %v4339 = vpop.f32.mrb[0].mxu0
        %v4340 = vadd.f32 %v4051, %v4339
        %v4341 = vpop.f32.mrb[0].mxu0
        %4342 = vmatprep.mubr.bf16.mxu0 0
        %4343 = vmatmul.mubr.bf16.gmra.mrb[0].mxu0 %v4145
        %v4344 = vpop.f32.mrb[0].mxu0
        %v4345 = vadd.f32 %v4056, %v4344
        %v4346 = vpop.f32.mrb[0].mxu0
        %v4347 = vpop.f32.mrb[0].mxu0
        %v4348 = vadd.f32 %v4059, %v4347
        %v4349 = vpop.f32.mrb[0].mxu0
        %4350 = vmatprep.mubr.bf16.mxu0 0
        %4351 = vmatmul.mubr.bf16.gmra.mrb[0].mxu0 %v4147
        %v4352 = vpop.f32.mrb[0].mxu0
        %v4353 = vadd.f32 %v4064, %v4352
        %v4354 = vpop.f32.mrb[0].mxu0
        %v4355 = vpop.f32.mrb[0].mxu0
        %v4356 = vadd.f32 %v4067, %v4355
        %v4357 = vpop.f32.mrb[0].mxu0
        %4358 = vmatprep.mubr.bf16.mxu0 0
        %4359 = vmatmul.mubr.bf16.gmra.mrb[0].mxu0 %v4149
        %v4360 = vpop.f32.mrb[0].mxu0
        %v4361 = vadd.f32 %v4072, %v4360
        %v4362 = vpop.f32.mrb[0].mxu0
        %v4363 = vpop.f32.mrb[0].mxu0
        %v4364 = vadd.f32 %v4075, %v4363
        %v4365 = vpop.f32.mrb[0].mxu0
        %4366 = vmatprep.mubr.bf16.mxu0 0
        %4367 = vmatmul.mubr.bf16.gmra.mrb[0].mxu0 %v4151
        %v4368 = vpop.f32.mrb[0].mxu0
        %v4369 = vadd.f32 %v4080, %v4368
        %v4370 = vpop.f32.mrb[0].mxu0
        %v4371 = vpop.f32.mrb[0].mxu0
        %v4372 = vadd.f32 %v4083, %v4371
        %v4373 = vpop.f32.mrb[0].mxu0
        %4374 = vmatprep.mubr.bf16.mxu0 0
        %4375 = vmatmul.mubr.bf16.gmra.mrb[0].mxu0 %v4153
        %v4376 = vpop.f32.mrb[0].mxu0
        %v4377 = vadd.f32 %v4088, %v4376
        %v4378 = vpop.f32.mrb[0].mxu0
        %v4379 = vpop.f32.mrb[0].mxu0
        %v4380 = vadd.f32 %v4091, %v4379
        %v4381 = vpop.f32.mrb[0].mxu0
        %4382 = vdwg.mxu0
        %v4383 = vld [vmem:[#allocation4] sm:$0x8]
        %v4384 = vld [vmem:[#allocation4 + $0xc0] sm:$0x7]
        %s4385 = scalar_lea.vmem [#allocation13], 24
        %v4386 = vld [vmem:[%s4385] sm:$0xf]
        %v4387 = vld [vmem:[%s4385 + $0x4] sm:$0xf]
        %v4388 = vld [vmem:[%s4385 + $0x8] sm:$0xf]
        %v4391 = vunpack.c.l.b16 %v4383
        %v4392 = vunpack.c.l.b16 %v4384
        %v4393 = vpack.c.b16 %v3487, %v4391
        %v4394 = vpack.c.b16 %v4392, %v4392
        %vm4395 = vcmask 1044480
        %v4396 = vrot.slane %v4393, 3
        %v4397 = vrot.slane %v3536, 3
        %v4398 = vsel %vm4395, %v4396, %v4397
        %v4399 = vrot.slane %v3537, 3
        %v4400 = vsel %vm4395, %v4397, %v4399
        %v4401 = vrot.slane %v3538, 3
        %v4402 = vsel %vm4395, %v4399, %v4401
        %v4403 = vrot.slane %v3539, 3
        %v4404 = vsel %vm4395, %v4401, %v4403
        %v4405 = vrot.slane %v3540, 3
        %v4406 = vsel %vm4395, %v4403, %v4405
        %v4407 = vrot.slane %v3541, 3
        %v4408 = vsel %vm4395, %v4405, %v4407
        %v4409 = vrot.slane %v3542, 3
        %v4410 = vsel %vm4395, %v4407, %v4409
        %v4411 = vrot.slane %v3543, 3
        %v4412 = vsel %vm4395, %v4409, %v4411
        %v4413 = vrot.slane %v3544, 3
        %v4414 = vsel %vm4395, %v4411, %v4413
        %v4415 = vrot.slane %v3545, 3
        %v4416 = vsel %vm4395, %v4413, %v4415
        %v4417 = vrot.slane %v3546, 3
        %v4418 = vsel %vm4395, %v4415, %v4417
        %v4419 = vrot.slane %v3547, 3
        %v4420 = vsel %vm4395, %v4417, %v4419
        %v4421 = vrot.slane %v3548, 3
        %v4422 = vsel %vm4395, %v4419, %v4421
        %v4423 = vrot.slane %v3549, 3
        %v4424 = vsel %vm4395, %v4421, %v4423
        %v4425 = vrot.slane %v3550, 3
        %v4426 = vsel %vm4395, %v4423, %v4425
        %v4427 = vrot.slane %v3551, 3
        %v4428 = vsel %vm4395, %v4425, %v4427
        %v4429 = vrot.slane %v3552, 3
        %v4430 = vsel %vm4395, %v4427, %v4429
        %v4431 = vrot.slane %v3553, 3
        %v4432 = vsel %vm4395, %v4429, %v4431
        %v4433 = vrot.slane %v3554, 3
        %v4434 = vsel %vm4395, %v4431, %v4433
        %v4435 = vrot.slane %v3555, 3
        %v4436 = vsel %vm4395, %v4433, %v4435
        %v4437 = vrot.slane %v3556, 3
        %v4438 = vsel %vm4395, %v4435, %v4437
        %v4439 = vrot.slane %v3557, 3
        %v4440 = vsel %vm4395, %v4437, %v4439
        %v4441 = vrot.slane %v3558, 3
        %v4442 = vsel %vm4395, %v4439, %v4441
        %v4443 = vrot.slane %v4394, 3
        %v4444 = vsel %vm4395, %v4441, %v4443
        %v4448 = vunpack.c.l.b16 %v4386
        %v4449 = vunpack.c.l.b16 %v4387
        %v4450 = vunpack.c.l.b16 %v4388
        %v4451 = vpack.c.b16 %v4449, %v4448
        %v4452 = vpack.c.b16 %v4450, %v4450
        %v4455 = vsel %vm892, %v4398, 0
        %v4458 = vsel %vm892, %v4400, 0
        %v4461 = vsel %vm892, %v4402, 0
        %v4464 = vsel %vm892, %v4404, 0
        %v4467 = vsel %vm892, %v4406, 0
        %v4470 = vsel %vm892, %v4408, 0
        %v4473 = vsel %vm892, %v4410, 0
        %v4476 = vsel %vm892, %v4412, 0
        %v4479 = vsel %vm892, %v4414, 0
        %v4482 = vsel %vm892, %v4416, 0
        %v4485 = vsel %vm892, %v4418, 0
        %v4488 = vsel %vm892, %v4420, 0
        %v4491 = vsel %vm892, %v4422, 0
        %v4494 = vsel %vm892, %v4424, 0
        %v4497 = vsel %vm892, %v4426, 0
        %v4500 = vsel %vm892, %v4428, 0
        %v4503 = vsel %vm892, %v4430, 0
        %v4506 = vsel %vm892, %v4432, 0
        %v4509 = vsel %vm892, %v4434, 0
        %v4512 = vsel %vm892, %v4436, 0
        %v4515 = vsel %vm892, %v4438, 0
        %v4518 = vsel %vm892, %v4440, 0
        %v4521 = vsel %vm892, %v4442, 0
        %v4524 = vsel %vm892, %v4444, 0
        %v4527 = vsel %vm1107, %v4452, 0
        %4529 = vmatprep.subr.bf16.mxu0 0
        %4530 = vmatpush1.bf16.msra.mxu0 %v4451
        %4531 = vmatprep.subr.bf16.mxu0 0
        %4532 = vmatpush1.bf16.msra.mxu0 %v4527
        %4533 = vmatprep.subr.bf16.mxu0 0
        %4534 = vmatpush1.bf16.msra.mxu0 0
        %4535 = vmatprep.subr.bf16.mxu0 0
        %4536 = vmatpush1.bf16.msra.mxu0 0
        %4537 = vmatprep.subr.bf16.mxu0 0
        %4538 = vmatpush1.bf16.msra.mxu0 0
        %4539 = vmatprep.subr.bf16.mxu0 0
        %4540 = vmatpush1.bf16.msra.mxu0 0
        %4541 = vmatprep.subr.bf16.mxu0 0
        %4542 = vmatpush1.bf16.msra.mxu0 0
        %4543 = vmatprep.subr.bf16.mxu0 0
        %4544 = vmatpush1.bf16.msra.mxu0 0
        %4545 = vmatprep.subr.bf16.mxu0 0
        %4546 = vmatpush1.bf16.msra.mxu0 0
        %4547 = vmatprep.subr.bf16.mxu0 0
        %4548 = vmatpush1.bf16.msra.mxu0 0
        %4549 = vmatprep.subr.bf16.mxu0 0
        %4550 = vmatpush1.bf16.msra.mxu0 0
        %4551 = vmatprep.subr.bf16.mxu0 0
        %4552 = vmatpush1.bf16.msra.mxu0 0
        %4553 = vmatprep.subr.bf16.mxu0 0
        %4554 = vmatpush1.bf16.msra.mxu0 0
        %4555 = vmatprep.subr.bf16.mxu0 0
        %4556 = vmatpush1.bf16.msra.mxu0 0
        %4557 = vmatprep.subr.bf16.mxu0 0
        %4558 = vmatpush1.bf16.msra.mxu0 0
        %4559 = vmatprep.subr.bf16.mxu0 0
        %4560 = vmatpush1.bf16.msra.mxu0 0
        %4561 = vmatprep.mubr.bf16.mxu0 0
        %4562 = vmatmul.mubr.bf16.gmra.mrb[0].mxu0 %v4455
        %v4563 = vpop.f32.mrb[0].mxu0
        %v4564 = vadd.f32 0.0, %v4563
        %v4565 = vpop.f32.mrb[0].mxu0
        %v4566 = vpop.f32.mrb[0].mxu0
        %v4567 = vadd.f32 0.0, %v4566
        %v4568 = vpop.f32.mrb[0].mxu0
        %4569 = vmatprep.mubr.bf16.mxu0 0
        %4570 = vmatmul.mubr.bf16.gmra.mrb[0].mxu0 %v4458
        %v4571 = vpop.f32.mrb[0].mxu0
        %v4572 = vadd.f32 0.0, %v4571
        %v4573 = vpop.f32.mrb[0].mxu0
        %v4574 = vpop.f32.mrb[0].mxu0
        %v4575 = vadd.f32 0.0, %v4574
        %v4576 = vpop.f32.mrb[0].mxu0
        %4577 = vmatprep.mubr.bf16.mxu0 0
        %4578 = vmatmul.mubr.bf16.gmra.mrb[0].mxu0 %v4461
        %v4579 = vpop.f32.mrb[0].mxu0
        %v4580 = vadd.f32 0.0, %v4579
        %v4581 = vpop.f32.mrb[0].mxu0
        %v4582 = vpop.f32.mrb[0].mxu0
        %v4583 = vadd.f32 0.0, %v4582
        %v4584 = vpop.f32.mrb[0].mxu0
        %4585 = vmatprep.mubr.bf16.mxu0 0
        %4586 = vmatmul.mubr.bf16.gmra.mrb[0].mxu0 %v4464
        %v4587 = vpop.f32.mrb[0].mxu0
        %v4588 = vadd.f32 0.0, %v4587
        %v4589 = vpop.f32.mrb[0].mxu0
        %v4590 = vpop.f32.mrb[0].mxu0
        %v4591 = vadd.f32 0.0, %v4590
        %v4592 = vpop.f32.mrb[0].mxu0
        %4593 = vmatprep.mubr.bf16.mxu0 0
        %4594 = vmatmul.mubr.bf16.gmra.mrb[0].mxu0 %v4467
        %v4595 = vpop.f32.mrb[0].mxu0
        %v4596 = vadd.f32 0.0, %v4595
        %v4597 = vpop.f32.mrb[0].mxu0
        %v4598 = vpop.f32.mrb[0].mxu0
        %v4599 = vadd.f32 0.0, %v4598
        %v4600 = vpop.f32.mrb[0].mxu0
        %4601 = vmatprep.mubr.bf16.mxu0 0
        %4602 = vmatmul.mubr.bf16.gmra.mrb[0].mxu0 %v4470
        %v4603 = vpop.f32.mrb[0].mxu0
        %v4604 = vadd.f32 0.0, %v4603
        %v4605 = vpop.f32.mrb[0].mxu0
        %v4606 = vpop.f32.mrb[0].mxu0
        %v4607 = vadd.f32 0.0, %v4606
        %v4608 = vpop.f32.mrb[0].mxu0
        %4609 = vmatprep.mubr.bf16.mxu0 0
        %4610 = vmatmul.mubr.bf16.gmra.mrb[0].mxu0 %v4473
        %v4611 = vpop.f32.mrb[0].mxu0
        %v4612 = vadd.f32 0.0, %v4611
        %v4613 = vpop.f32.mrb[0].mxu0
        %v4614 = vpop.f32.mrb[0].mxu0
        %v4615 = vadd.f32 0.0, %v4614
        %v4616 = vpop.f32.mrb[0].mxu0
        %4617 = vmatprep.mubr.bf16.mxu0 0
        %4618 = vmatmul.mubr.bf16.gmra.mrb[0].mxu0 %v4476
        %v4619 = vpop.f32.mrb[0].mxu0
        %v4620 = vadd.f32 0.0, %v4619
        %v4621 = vpop.f32.mrb[0].mxu0
        %v4622 = vpop.f32.mrb[0].mxu0
        %v4623 = vadd.f32 0.0, %v4622
        %v4624 = vpop.f32.mrb[0].mxu0
        %4625 = vmatprep.mubr.bf16.mxu0 0
        %4626 = vmatmul.mubr.bf16.gmra.mrb[0].mxu0 %v4479
        %v4627 = vpop.f32.mrb[0].mxu0
        %v4628 = vadd.f32 0.0, %v4627
        %v4629 = vpop.f32.mrb[0].mxu0
        %v4630 = vpop.f32.mrb[0].mxu0
        %v4631 = vadd.f32 0.0, %v4630
        %v4632 = vpop.f32.mrb[0].mxu0
        %4633 = vmatprep.mubr.bf16.mxu0 0
        %4634 = vmatmul.mubr.bf16.gmra.mrb[0].mxu0 %v4482
        %v4635 = vpop.f32.mrb[0].mxu0
        %v4636 = vadd.f32 0.0, %v4635
        %v4637 = vpop.f32.mrb[0].mxu0
        %v4638 = vpop.f32.mrb[0].mxu0
        %v4639 = vadd.f32 0.0, %v4638
        %v4640 = vpop.f32.mrb[0].mxu0
        %4641 = vmatprep.mubr.bf16.mxu0 0
        %4642 = vmatmul.mubr.bf16.gmra.mrb[0].mxu0 %v4485
        %v4643 = vpop.f32.mrb[0].mxu0
        %v4644 = vadd.f32 0.0, %v4643
        %v4645 = vpop.f32.mrb[0].mxu0
        %v4646 = vpop.f32.mrb[0].mxu0
        %v4647 = vadd.f32 0.0, %v4646
        %v4648 = vpop.f32.mrb[0].mxu0
        %4649 = vmatprep.mubr.bf16.mxu0 0
        %4650 = vmatmul.mubr.bf16.gmra.mrb[0].mxu0 %v4488
        %v4651 = vpop.f32.mrb[0].mxu0
        %v4652 = vadd.f32 0.0, %v4651
        %v4653 = vpop.f32.mrb[0].mxu0
        %v4654 = vpop.f32.mrb[0].mxu0
        %v4655 = vadd.f32 0.0, %v4654
        %v4656 = vpop.f32.mrb[0].mxu0
        %4657 = vmatprep.mubr.bf16.mxu0 0
        %4658 = vmatmul.mubr.bf16.gmra.mrb[0].mxu0 %v4491
        %v4659 = vpop.f32.mrb[0].mxu0
        %v4660 = vadd.f32 0.0, %v4659
        %v4661 = vpop.f32.mrb[0].mxu0
        %v4662 = vpop.f32.mrb[0].mxu0
        %v4663 = vadd.f32 0.0, %v4662
        %v4664 = vpop.f32.mrb[0].mxu0
        %4665 = vmatprep.mubr.bf16.mxu0 0
        %4666 = vmatmul.mubr.bf16.gmra.mrb[0].mxu0 %v4494
        %v4667 = vpop.f32.mrb[0].mxu0
        %v4668 = vadd.f32 0.0, %v4667
        %v4669 = vpop.f32.mrb[0].mxu0
        %v4670 = vpop.f32.mrb[0].mxu0
        %v4671 = vadd.f32 0.0, %v4670
        %v4672 = vpop.f32.mrb[0].mxu0
        %4673 = vmatprep.mubr.bf16.mxu0 0
        %4674 = vmatmul.mubr.bf16.gmra.mrb[0].mxu0 %v4497
        %v4675 = vpop.f32.mrb[0].mxu0
        %v4676 = vadd.f32 0.0, %v4675
        %v4677 = vpop.f32.mrb[0].mxu0
        %v4678 = vpop.f32.mrb[0].mxu0
        %v4679 = vadd.f32 0.0, %v4678
        %v4680 = vpop.f32.mrb[0].mxu0
        %4681 = vmatprep.mubr.bf16.mxu0 0
        %4682 = vmatmul.mubr.bf16.gmra.mrb[0].mxu0 %v4500
        %v4683 = vpop.f32.mrb[0].mxu0
        %v4684 = vadd.f32 0.0, %v4683
        %v4685 = vpop.f32.mrb[0].mxu0
        %v4686 = vpop.f32.mrb[0].mxu0
        %v4687 = vadd.f32 0.0, %v4686
        %v4688 = vpop.f32.mrb[0].mxu0
        %4689 = vmatprep.mubr.bf16.mxu0 0
        %4690 = vmatmul.mubr.bf16.gmra.mrb[0].mxu0 %v4503
        %v4691 = vpop.f32.mrb[0].mxu0
        %v4692 = vadd.f32 0.0, %v4691
        %v4693 = vpop.f32.mrb[0].mxu0
        %v4694 = vpop.f32.mrb[0].mxu0
        %v4695 = vadd.f32 0.0, %v4694
        %v4696 = vpop.f32.mrb[0].mxu0
        %4697 = vmatprep.mubr.bf16.mxu0 0
        %4698 = vmatmul.mubr.bf16.gmra.mrb[0].mxu0 %v4506
        %v4699 = vpop.f32.mrb[0].mxu0
        %v4700 = vadd.f32 0.0, %v4699
        %v4701 = vpop.f32.mrb[0].mxu0
        %v4702 = vpop.f32.mrb[0].mxu0
        %v4703 = vadd.f32 0.0, %v4702
        %v4704 = vpop.f32.mrb[0].mxu0
        %4705 = vmatprep.mubr.bf16.mxu0 0
        %4706 = vmatmul.mubr.bf16.gmra.mrb[0].mxu0 %v4509
        %v4707 = vpop.f32.mrb[0].mxu0
        %v4708 = vadd.f32 0.0, %v4707
        %v4709 = vpop.f32.mrb[0].mxu0
        %v4710 = vpop.f32.mrb[0].mxu0
        %v4711 = vadd.f32 0.0, %v4710
        %v4712 = vpop.f32.mrb[0].mxu0
        %4713 = vmatprep.mubr.bf16.mxu0 0
        %4714 = vmatmul.mubr.bf16.gmra.mrb[0].mxu0 %v4512
        %v4715 = vpop.f32.mrb[0].mxu0
        %v4716 = vadd.f32 0.0, %v4715
        %v4717 = vpop.f32.mrb[0].mxu0
        %v4718 = vpop.f32.mrb[0].mxu0
        %v4719 = vadd.f32 0.0, %v4718
        %v4720 = vpop.f32.mrb[0].mxu0
        %4721 = vmatprep.mubr.bf16.mxu0 0
        %4722 = vmatmul.mubr.bf16.gmra.mrb[0].mxu0 %v4515
        %v4723 = vpop.f32.mrb[0].mxu0
        %v4724 = vadd.f32 0.0, %v4723
        %v4725 = vpop.f32.mrb[0].mxu0
        %v4726 = vpop.f32.mrb[0].mxu0
        %v4727 = vadd.f32 0.0, %v4726
        %v4728 = vpop.f32.mrb[0].mxu0
        %4729 = vmatprep.mubr.bf16.mxu0 0
        %4730 = vmatmul.mubr.bf16.gmra.mrb[0].mxu0 %v4518
        %v4731 = vpop.f32.mrb[0].mxu0
        %v4732 = vadd.f32 0.0, %v4731
        %v4733 = vpop.f32.mrb[0].mxu0
        %v4734 = vpop.f32.mrb[0].mxu0
        %v4735 = vadd.f32 0.0, %v4734
        %v4736 = vpop.f32.mrb[0].mxu0
        %4737 = vmatprep.mubr.bf16.mxu0 0
        %4738 = vmatmul.mubr.bf16.gmra.mrb[0].mxu0 %v4521
        %v4739 = vpop.f32.mrb[0].mxu0
        %v4740 = vadd.f32 0.0, %v4739
        %v4741 = vpop.f32.mrb[0].mxu0
        %v4742 = vpop.f32.mrb[0].mxu0
        %v4743 = vadd.f32 0.0, %v4742
        %v4744 = vpop.f32.mrb[0].mxu0
        %4745 = vmatprep.mubr.bf16.mxu0 0
        %4746 = vmatmul.mubr.bf16.gmra.mrb[0].mxu0 %v4524
        %v4747 = vpop.f32.mrb[0].mxu0
        %v4748 = vadd.f32 0.0, %v4747
        %v4749 = vpop.f32.mrb[0].mxu0
        %v4750 = vpop.f32.mrb[0].mxu0
        %v4751 = vadd.f32 0.0, %v4750
        %v4752 = vpop.f32.mrb[0].mxu0
        %4753 = vdwg.mxu0
        %v4754 = vadd.f32 %v4193, %v4564
        %v4755 = vadd.f32 %v4196, %v4567
        %v4756 = vadd.f32 %v4201, %v4572
        %v4757 = vadd.f32 %v4204, %v4575
        %v4758 = vadd.f32 %v4209, %v4580
        %v4759 = vadd.f32 %v4212, %v4583
        %v4760 = vadd.f32 %v4217, %v4588
        %v4761 = vadd.f32 %v4220, %v4591
        %v4762 = vadd.f32 %v4225, %v4596
        %v4763 = vadd.f32 %v4228, %v4599
        %v4764 = vadd.f32 %v4233, %v4604
        %v4765 = vadd.f32 %v4236, %v4607
        %v4766 = vadd.f32 %v4241, %v4612
        %v4767 = vadd.f32 %v4244, %v4615
        %v4768 = vadd.f32 %v4249, %v4620
        %v4769 = vadd.f32 %v4252, %v4623
        %v4770 = vadd.f32 %v4257, %v4628
        %v4771 = vadd.f32 %v4260, %v4631
        %v4772 = vadd.f32 %v4265, %v4636
        %v4773 = vadd.f32 %v4268, %v4639
        %v4774 = vadd.f32 %v4273, %v4644
        %v4775 = vadd.f32 %v4276, %v4647
        %v4776 = vadd.f32 %v4281, %v4652
        %v4777 = vadd.f32 %v4284, %v4655
        %v4778 = vadd.f32 %v4289, %v4660
        %v4779 = vadd.f32 %v4292, %v4663
        %v4780 = vadd.f32 %v4297, %v4668
        %v4781 = vadd.f32 %v4300, %v4671
        %v4782 = vadd.f32 %v4305, %v4676
        %v4783 = vadd.f32 %v4308, %v4679
        %v4784 = vadd.f32 %v4313, %v4684
        %v4785 = vadd.f32 %v4316, %v4687
        %v4786 = vadd.f32 %v4321, %v4692
        %v4787 = vadd.f32 %v4324, %v4695
        %v4788 = vadd.f32 %v4329, %v4700
        %v4789 = vadd.f32 %v4332, %v4703
        %v4790 = vadd.f32 %v4337, %v4708
        %v4791 = vadd.f32 %v4340, %v4711
        %v4792 = vadd.f32 %v4345, %v4716
        %v4793 = vadd.f32 %v4348, %v4719
        %v4794 = vadd.f32 %v4353, %v4724
        %v4795 = vadd.f32 %v4356, %v4727
        %v4796 = vadd.f32 %v4361, %v4732
        %v4797 = vadd.f32 %v4364, %v4735
        %v4798 = vadd.f32 %v4369, %v4740
        %v4799 = vadd.f32 %v4372, %v4743
        %v4800 = vadd.f32 %v4377, %v4748
        %v4801 = vadd.f32 %v4380, %v4751
        %v4802 = vld [vmem:[#allocation14] sm:$0x1]
        %v4804 = vlaneseq
        %v4805 = vshrl.u32 %v4804, 7
        %v4806 = vsub.s32 0, %v4805
        %v4807 = vrot.slane %v4802, %v4806
        %v4809 = vadd.f32 %v4754, %v4807
        %v4810 = vadd.f32 %v4755, %v4807
        %v4811 = vadd.f32 %v4756, %v4807
        %v4812 = vadd.f32 %v4757, %v4807
        %v4813 = vadd.f32 %v4758, %v4807
        %v4814 = vadd.f32 %v4759, %v4807
        %v4815 = vadd.f32 %v4760, %v4807
        %v4816 = vadd.f32 %v4761, %v4807
        %v4817 = vadd.f32 %v4762, %v4807
        %v4818 = vadd.f32 %v4763, %v4807
        %v4819 = vadd.f32 %v4764, %v4807
        %v4820 = vadd.f32 %v4765, %v4807
        %v4821 = vadd.f32 %v4766, %v4807
        %v4822 = vadd.f32 %v4767, %v4807
        %v4823 = vadd.f32 %v4768, %v4807
        %v4824 = vadd.f32 %v4769, %v4807
        %v4825 = vadd.f32 %v4770, %v4807
        %v4826 = vadd.f32 %v4771, %v4807
        %v4827 = vadd.f32 %v4772, %v4807
        %v4828 = vadd.f32 %v4773, %v4807
        %v4829 = vadd.f32 %v4774, %v4807
        %v4830 = vadd.f32 %v4775, %v4807
        %v4831 = vadd.f32 %v4776, %v4807
        %v4832 = vadd.f32 %v4777, %v4807
        %v4833 = vadd.f32 %v4778, %v4807
        %v4834 = vadd.f32 %v4779, %v4807
        %v4835 = vadd.f32 %v4780, %v4807
        %v4836 = vadd.f32 %v4781, %v4807
        %v4837 = vadd.f32 %v4782, %v4807
        %v4838 = vadd.f32 %v4783, %v4807
        %v4839 = vadd.f32 %v4784, %v4807
        %v4840 = vadd.f32 %v4785, %v4807
        %v4841 = vadd.f32 %v4786, %v4807
        %v4842 = vadd.f32 %v4787, %v4807
        %v4843 = vadd.f32 %v4788, %v4807
        %v4844 = vadd.f32 %v4789, %v4807
        %v4845 = vadd.f32 %v4790, %v4807
        %v4846 = vadd.f32 %v4791, %v4807
        %v4847 = vadd.f32 %v4792, %v4807
        %v4848 = vadd.f32 %v4793, %v4807
        %v4849 = vadd.f32 %v4794, %v4807
        %v4850 = vadd.f32 %v4795, %v4807
        %v4851 = vadd.f32 %v4796, %v4807
        %v4852 = vadd.f32 %v4797, %v4807
        %v4853 = vadd.f32 %v4798, %v4807
        %v4854 = vadd.f32 %v4799, %v4807
        %v4855 = vadd.f32 %v4800, %v4807
        %v4856 = vadd.f32 %v4801, %v4807
        %v4857 = vpack.c.bf16 %v4810, %v4809
        %v4858 = vpack.c.bf16 %v4812, %v4811
        %v4859 = vpack.c.bf16 %v4814, %v4813
        %v4860 = vpack.c.bf16 %v4816, %v4815
        %v4861 = vpack.c.bf16 %v4818, %v4817
        %v4862 = vpack.c.bf16 %v4820, %v4819
        %v4863 = vpack.c.bf16 %v4822, %v4821
        %v4864 = vpack.c.bf16 %v4824, %v4823
        %v4865 = vpack.c.bf16 %v4826, %v4825
        %v4866 = vpack.c.bf16 %v4828, %v4827
        %v4867 = vpack.c.bf16 %v4830, %v4829
        %v4868 = vpack.c.bf16 %v4832, %v4831
        %v4869 = vpack.c.bf16 %v4834, %v4833
        %v4870 = vpack.c.bf16 %v4836, %v4835
        %v4871 = vpack.c.bf16 %v4838, %v4837
        %v4872 = vpack.c.bf16 %v4840, %v4839
        %v4873 = vpack.c.bf16 %v4842, %v4841
        %v4874 = vpack.c.bf16 %v4844, %v4843
        %v4875 = vpack.c.bf16 %v4846, %v4845
        %v4876 = vpack.c.bf16 %v4848, %v4847
        %v4877 = vpack.c.bf16 %v4850, %v4849
        %v4878 = vpack.c.bf16 %v4852, %v4851
        %v4879 = vpack.c.bf16 %v4854, %v4853
        %v4880 = vpack.c.bf16 %v4856, %v4855
        %v4881 = vld [vmem:[#allocation16] sm:$0xf]
        %v4882 = vld [vmem:[#allocation17] sm:$0x1]
        %v4884 = vlaneseq
        %v4885 = vshrl.u32 %v4884, 7
        %v4886 = vsub.s32 0, %v4885
        %v4887 = vrot.slane %v4882, %v4886
        %v4890 = vsel %vm740, %v4857, 0
        %v4893 = vsel %vm740, %v4858, 0
        %v4896 = vsel %vm740, %v4859, 0
        %v4899 = vsel %vm740, %v4860, 0
        %v4902 = vsel %vm740, %v4861, 0
        %v4905 = vsel %vm740, %v4862, 0
        %v4908 = vsel %vm740, %v4863, 0
        %v4911 = vsel %vm740, %v4864, 0
        %v4914 = vsel %vm740, %v4865, 0
        %v4917 = vsel %vm740, %v4866, 0
        %v4920 = vsel %vm740, %v4867, 0
        %v4923 = vsel %vm740, %v4868, 0
        %v4926 = vsel %vm740, %v4869, 0
        %v4929 = vsel %vm740, %v4870, 0
        %v4932 = vsel %vm740, %v4871, 0
        %v4935 = vsel %vm740, %v4872, 0
        %v4938 = vsel %vm740, %v4873, 0
        %v4941 = vsel %vm740, %v4874, 0
        %v4944 = vsel %vm740, %v4875, 0
        %v4947 = vsel %vm740, %v4876, 0
        %v4950 = vsel %vm740, %v4877, 0
        %v4953 = vsel %vm740, %v4878, 0
        %v4956 = vsel %vm740, %v4879, 0
        %v4959 = vsel %vm740, %v4880, 0
        %v4962 = vsel %vm1107, %v4881, 0
        %4964 = vmatprep.subr.bf16.mxu0 0
        %4965 = vmatpush1.bf16.msra.mxu0 %v4962
        %4966 = vmatprep.subr.bf16.mxu0 0
        %4967 = vmatpush1.bf16.msra.mxu0 0
        %4968 = vmatprep.subr.bf16.mxu0 0
        %4969 = vmatpush1.bf16.msra.mxu0 0
        %4970 = vmatprep.subr.bf16.mxu0 0
        %4971 = vmatpush1.bf16.msra.mxu0 0
        %4972 = vmatprep.subr.bf16.mxu0 0
        %4973 = vmatpush1.bf16.msra.mxu0 0
        %4974 = vmatprep.subr.bf16.mxu0 0
        %4975 = vmatpush1.bf16.msra.mxu0 0
        %4976 = vmatprep.subr.bf16.mxu0 0
        %4977 = vmatpush1.bf16.msra.mxu0 0
        %4978 = vmatprep.subr.bf16.mxu0 0
        %4979 = vmatpush1.bf16.msra.mxu0 0
        %4980 = vmatprep.subr.bf16.mxu0 0
        %4981 = vmatpush1.bf16.msra.mxu0 0
        %4982 = vmatprep.subr.bf16.mxu0 0
        %4983 = vmatpush1.bf16.msra.mxu0 0
        %4984 = vmatprep.subr.bf16.mxu0 0
        %4985 = vmatpush1.bf16.msra.mxu0 0
        %4986 = vmatprep.subr.bf16.mxu0 0
        %4987 = vmatpush1.bf16.msra.mxu0 0
        %4988 = vmatprep.subr.bf16.mxu0 0
        %4989 = vmatpush1.bf16.msra.mxu0 0
        %4990 = vmatprep.subr.bf16.mxu0 0
        %4991 = vmatpush1.bf16.msra.mxu0 0
        %4992 = vmatprep.subr.bf16.mxu0 0
        %4993 = vmatpush1.bf16.msra.mxu0 0
        %4994 = vmatprep.subr.bf16.mxu0 0
        %4995 = vmatpush1.bf16.msra.mxu0 0
        %4996 = vmatprep.mubr.bf16.mxu0 0
        %4997 = vmatmul.mubr.bf16.gmra.mrb[0].mxu0 %v4890
        %v4998 = vpop.f32.mrb[0].mxu0
        %v4999 = vadd.f32 %v4887, %v4998
        %v5000 = vpop.f32.mrb[0].mxu0
        %v5001 = vpop.f32.mrb[0].mxu0
        %v5002 = vadd.f32 %v4887, %v5001
        %v5003 = vpop.f32.mrb[0].mxu0
        %5004 = vmatprep.mubr.bf16.mxu0 0
        %5005 = vmatmul.mubr.bf16.gmra.mrb[0].mxu0 %v4893
        %v5006 = vpop.f32.mrb[0].mxu0
        %v5007 = vadd.f32 %v4887, %v5006
        %v5008 = vpop.f32.mrb[0].mxu0
        %v5009 = vpop.f32.mrb[0].mxu0
        %v5010 = vadd.f32 %v4887, %v5009
        %v5011 = vpop.f32.mrb[0].mxu0
        %5012 = vmatprep.mubr.bf16.mxu0 0
        %5013 = vmatmul.mubr.bf16.gmra.mrb[0].mxu0 %v4896
        %v5014 = vpop.f32.mrb[0].mxu0
        %v5015 = vadd.f32 %v4887, %v5014
        %v5016 = vpop.f32.mrb[0].mxu0
        %v5017 = vpop.f32.mrb[0].mxu0
        %v5018 = vadd.f32 %v4887, %v5017
        %v5019 = vpop.f32.mrb[0].mxu0
        %5020 = vmatprep.mubr.bf16.mxu0 0
        %5021 = vmatmul.mubr.bf16.gmra.mrb[0].mxu0 %v4899
        %v5022 = vpop.f32.mrb[0].mxu0
        %v5023 = vadd.f32 %v4887, %v5022
        %v5024 = vpop.f32.mrb[0].mxu0
        %v5025 = vpop.f32.mrb[0].mxu0
        %v5026 = vadd.f32 %v4887, %v5025
        %v5027 = vpop.f32.mrb[0].mxu0
        %5028 = vmatprep.mubr.bf16.mxu0 0
        %5029 = vmatmul.mubr.bf16.gmra.mrb[0].mxu0 %v4902
        %v5030 = vpop.f32.mrb[0].mxu0
        %v5031 = vadd.f32 %v4887, %v5030
        %v5032 = vpop.f32.mrb[0].mxu0
        %v5033 = vpop.f32.mrb[0].mxu0
        %v5034 = vadd.f32 %v4887, %v5033
        %v5035 = vpop.f32.mrb[0].mxu0
        %5036 = vmatprep.mubr.bf16.mxu0 0
        %5037 = vmatmul.mubr.bf16.gmra.mrb[0].mxu0 %v4905
        %v5038 = vpop.f32.mrb[0].mxu0
        %v5039 = vadd.f32 %v4887, %v5038
        %v5040 = vpop.f32.mrb[0].mxu0
        %v5041 = vpop.f32.mrb[0].mxu0
        %v5042 = vadd.f32 %v4887, %v5041
        %v5043 = vpop.f32.mrb[0].mxu0
        %5044 = vmatprep.mubr.bf16.mxu0 0
        %5045 = vmatmul.mubr.bf16.gmra.mrb[0].mxu0 %v4908
        %v5046 = vpop.f32.mrb[0].mxu0
        %v5047 = vadd.f32 %v4887, %v5046
        %v5048 = vpop.f32.mrb[0].mxu0
        %v5049 = vpop.f32.mrb[0].mxu0
        %v5050 = vadd.f32 %v4887, %v5049
        %v5051 = vpop.f32.mrb[0].mxu0
        %5052 = vmatprep.mubr.bf16.mxu0 0
        %5053 = vmatmul.mubr.bf16.gmra.mrb[0].mxu0 %v4911
        %v5054 = vpop.f32.mrb[0].mxu0
        %v5055 = vadd.f32 %v4887, %v5054
        %v5056 = vpop.f32.mrb[0].mxu0
        %v5057 = vpop.f32.mrb[0].mxu0
        %v5058 = vadd.f32 %v4887, %v5057
        %v5059 = vpop.f32.mrb[0].mxu0
        %5060 = vmatprep.mubr.bf16.mxu0 0
        %5061 = vmatmul.mubr.bf16.gmra.mrb[0].mxu0 %v4914
        %v5062 = vpop.f32.mrb[0].mxu0
        %v5063 = vadd.f32 %v4887, %v5062
        %v5064 = vpop.f32.mrb[0].mxu0
        %v5065 = vpop.f32.mrb[0].mxu0
        %v5066 = vadd.f32 %v4887, %v5065
        %v5067 = vpop.f32.mrb[0].mxu0
        %5068 = vmatprep.mubr.bf16.mxu0 0
        %5069 = vmatmul.mubr.bf16.gmra.mrb[0].mxu0 %v4917
        %v5070 = vpop.f32.mrb[0].mxu0
        %v5071 = vadd.f32 %v4887, %v5070
        %v5072 = vpop.f32.mrb[0].mxu0
        %v5073 = vpop.f32.mrb[0].mxu0
        %v5074 = vadd.f32 %v4887, %v5073
        %v5075 = vpop.f32.mrb[0].mxu0
        %5076 = vmatprep.mubr.bf16.mxu0 0
        %5077 = vmatmul.mubr.bf16.gmra.mrb[0].mxu0 %v4920
        %v5078 = vpop.f32.mrb[0].mxu0
        %v5079 = vadd.f32 %v4887, %v5078
        %v5080 = vpop.f32.mrb[0].mxu0
        %v5081 = vpop.f32.mrb[0].mxu0
        %v5082 = vadd.f32 %v4887, %v5081
        %v5083 = vpop.f32.mrb[0].mxu0
        %5084 = vmatprep.mubr.bf16.mxu0 0
        %5085 = vmatmul.mubr.bf16.gmra.mrb[0].mxu0 %v4923
        %v5086 = vpop.f32.mrb[0].mxu0
        %v5087 = vadd.f32 %v4887, %v5086
        %v5088 = vpop.f32.mrb[0].mxu0
        %v5089 = vpop.f32.mrb[0].mxu0
        %v5090 = vadd.f32 %v4887, %v5089
        %v5091 = vpop.f32.mrb[0].mxu0
        %5092 = vmatprep.mubr.bf16.mxu0 0
        %5093 = vmatmul.mubr.bf16.gmra.mrb[0].mxu0 %v4926
        %v5094 = vpop.f32.mrb[0].mxu0
        %v5095 = vadd.f32 %v4887, %v5094
        %v5096 = vpop.f32.mrb[0].mxu0
        %v5097 = vpop.f32.mrb[0].mxu0
        %v5098 = vadd.f32 %v4887, %v5097
        %v5099 = vpop.f32.mrb[0].mxu0
        %5100 = vmatprep.mubr.bf16.mxu0 0
        %5101 = vmatmul.mubr.bf16.gmra.mrb[0].mxu0 %v4929
        %v5102 = vpop.f32.mrb[0].mxu0
        %v5103 = vadd.f32 %v4887, %v5102
        %v5104 = vpop.f32.mrb[0].mxu0
        %v5105 = vpop.f32.mrb[0].mxu0
        %v5106 = vadd.f32 %v4887, %v5105
        %v5107 = vpop.f32.mrb[0].mxu0
        %5108 = vmatprep.mubr.bf16.mxu0 0
        %5109 = vmatmul.mubr.bf16.gmra.mrb[0].mxu0 %v4932
        %v5110 = vpop.f32.mrb[0].mxu0
        %v5111 = vadd.f32 %v4887, %v5110
        %v5112 = vpop.f32.mrb[0].mxu0
        %v5113 = vpop.f32.mrb[0].mxu0
        %v5114 = vadd.f32 %v4887, %v5113
        %v5115 = vpop.f32.mrb[0].mxu0
        %5116 = vmatprep.mubr.bf16.mxu0 0
        %5117 = vmatmul.mubr.bf16.gmra.mrb[0].mxu0 %v4935
        %v5118 = vpop.f32.mrb[0].mxu0
        %v5119 = vadd.f32 %v4887, %v5118
        %v5120 = vpop.f32.mrb[0].mxu0
        %v5121 = vpop.f32.mrb[0].mxu0
        %v5122 = vadd.f32 %v4887, %v5121
        %v5123 = vpop.f32.mrb[0].mxu0
        %5124 = vmatprep.mubr.bf16.mxu0 0
        %5125 = vmatmul.mubr.bf16.gmra.mrb[0].mxu0 %v4938
        %v5126 = vpop.f32.mrb[0].mxu0
        %v5127 = vadd.f32 %v4887, %v5126
        %v5128 = vpop.f32.mrb[0].mxu0
        %v5129 = vpop.f32.mrb[0].mxu0
        %v5130 = vadd.f32 %v4887, %v5129
        %v5131 = vpop.f32.mrb[0].mxu0
        %5132 = vmatprep.mubr.bf16.mxu0 0
        %5133 = vmatmul.mubr.bf16.gmra.mrb[0].mxu0 %v4941
        %v5134 = vpop.f32.mrb[0].mxu0
        %v5135 = vadd.f32 %v4887, %v5134
        %v5136 = vpop.f32.mrb[0].mxu0
        %v5137 = vpop.f32.mrb[0].mxu0
        %v5138 = vadd.f32 %v4887, %v5137
        %v5139 = vpop.f32.mrb[0].mxu0
        %5140 = vmatprep.mubr.bf16.mxu0 0
        %5141 = vmatmul.mubr.bf16.gmra.mrb[0].mxu0 %v4944
        %v5142 = vpop.f32.mrb[0].mxu0
        %v5143 = vadd.f32 %v4887, %v5142
        %v5144 = vpop.f32.mrb[0].mxu0
        %v5145 = vpop.f32.mrb[0].mxu0
        %v5146 = vadd.f32 %v4887, %v5145
        %v5147 = vpop.f32.mrb[0].mxu0
        %5148 = vmatprep.mubr.bf16.mxu0 0
        %5149 = vmatmul.mubr.bf16.gmra.mrb[0].mxu0 %v4947
        %v5150 = vpop.f32.mrb[0].mxu0
        %v5151 = vadd.f32 %v4887, %v5150
        %v5152 = vpop.f32.mrb[0].mxu0
        %v5153 = vpop.f32.mrb[0].mxu0
        %v5154 = vadd.f32 %v4887, %v5153
        %v5155 = vpop.f32.mrb[0].mxu0
        %5156 = vmatprep.mubr.bf16.mxu0 0
        %5157 = vmatmul.mubr.bf16.gmra.mrb[0].mxu0 %v4950
        %v5158 = vpop.f32.mrb[0].mxu0
        %v5159 = vadd.f32 %v4887, %v5158
        %v5160 = vpop.f32.mrb[0].mxu0
        %v5161 = vpop.f32.mrb[0].mxu0
        %v5162 = vadd.f32 %v4887, %v5161
        %v5163 = vpop.f32.mrb[0].mxu0
        %5164 = vmatprep.mubr.bf16.mxu0 0
        %5165 = vmatmul.mubr.bf16.gmra.mrb[0].mxu0 %v4953
        %v5166 = vpop.f32.mrb[0].mxu0
        %v5167 = vadd.f32 %v4887, %v5166
        %v5168 = vpop.f32.mrb[0].mxu0
        %v5169 = vpop.f32.mrb[0].mxu0
        %v5170 = vadd.f32 %v4887, %v5169
        %v5171 = vpop.f32.mrb[0].mxu0
        %5172 = vmatprep.mubr.bf16.mxu0 0
        %5173 = vmatmul.mubr.bf16.gmra.mrb[0].mxu0 %v4956
        %v5174 = vpop.f32.mrb[0].mxu0
        %v5175 = vadd.f32 %v4887, %v5174
        %v5176 = vpop.f32.mrb[0].mxu0
        %v5177 = vpop.f32.mrb[0].mxu0
        %v5178 = vadd.f32 %v4887, %v5177
        %v5179 = vpop.f32.mrb[0].mxu0
        %5180 = vmatprep.mubr.bf16.mxu0 0
        %5181 = vmatmul.mubr.bf16.gmra.mrb[0].mxu0 %v4959
        %v5182 = vpop.f32.mrb[0].mxu0
        %v5183 = vadd.f32 %v4887, %v5182
        %v5184 = vpop.f32.mrb[0].mxu0
        %v5185 = vpop.f32.mrb[0].mxu0
        %v5186 = vadd.f32 %v4887, %v5185
        %v5187 = vpop.f32.mrb[0].mxu0
        %5188 = vdwg.mxu0
        %v5189 = vld [vmem:[%s357 + $0x30] sm:$0xe]
        %v5190 = vld [vmem:[%s357 + $0x34] sm:$0xf]
        %v5191 = vld [vmem:[%s357 + $0x38] sm:$0xf]
        %v5192 = vld [vmem:[%s357 + $0x3c] sm:$0xf]
        %v5193 = vld [vmem:[%s357 + $0x40] sm:$0xf]
        %v5194 = vld [vmem:[%s357 + $0x44] sm:$0xf]
        %v5195 = vld [vmem:[%s357 + $0x48] sm:$0xf]
        %v5196 = vld [vmem:[%s357 + $0x4c] sm:$0xf]
        %v5197 = vld [vmem:[%s357 + $0x50] sm:$0xf]
        %v5198 = vld [vmem:[%s357 + $0x54] sm:$0xf]
        %v5199 = vld [vmem:[%s357 + $0x58] sm:$0xf]
        %v5200 = vld [vmem:[%s357 + $0x5c] sm:$0xf]
        %v5201 = vld [vmem:[%s357 + $0x60] sm:$0xf]
        %v5202 = vld [vmem:[%s357 + $0x64] sm:$0xf]
        %v5203 = vld [vmem:[%s357 + $0x68] sm:$0xf]
        %v5204 = vld [vmem:[%s357 + $0x6c] sm:$0xf]
        %v5205 = vld [vmem:[%s357 + $0x70] sm:$0xf]
        %v5206 = vld [vmem:[%s357 + $0x74] sm:$0xf]
        %v5207 = vld [vmem:[%s357 + $0x78] sm:$0xf]
        %v5208 = vld [vmem:[%s357 + $0x7c] sm:$0xf]
        %v5209 = vld [vmem:[%s357 + $0x80] sm:$0xf]
        %v5210 = vld [vmem:[%s357 + $0x84] sm:$0xf]
        %v5211 = vld [vmem:[%s357 + $0x88] sm:$0xf]
        %v5212 = vld [vmem:[%s357 + $0x8c] sm:$0xf]
        %v5213 = vld [vmem:[%s357 + $0x90] sm:$0xf]
        %v5214 = vld [vmem:[%s357 + $0x94] sm:$0xf]
        %v5215 = vld [vmem:[%s357 + $0x98] sm:$0xf]
        %v5216 = vld [vmem:[%s357 + $0x9c] sm:$0xf]
        %v5217 = vld [vmem:[%s357 + $0xa0] sm:$0xf]
        %v5218 = vld [vmem:[%s357 + $0xa4] sm:$0xf]
        %v5219 = vld [vmem:[%s357 + $0xa8] sm:$0xf]
        %v5220 = vld [vmem:[%s357 + $0xac] sm:$0xf]
        %v5221 = vld [vmem:[%s357 + $0xb0] sm:$0xf]
        %v5222 = vld [vmem:[%s357 + $0xb4] sm:$0xf]
        %v5223 = vld [vmem:[%s357 + $0xb8] sm:$0xf]
        %v5224 = vld [vmem:[%s357 + $0xbc] sm:$0xf]
        %v5225 = vld [vmem:[%s357 + $0xc0] sm:$0xf]
        %v5226 = vld [vmem:[%s357 + $0xc4] sm:$0xf]
        %v5227 = vld [vmem:[%s357 + $0xc8] sm:$0xf]
        %v5228 = vld [vmem:[%s357 + $0xcc] sm:$0xf]
        %v5229 = vld [vmem:[%s357 + $0xd0] sm:$0xf]
        %v5230 = vld [vmem:[%s357 + $0xd4] sm:$0xf]
        %v5231 = vld [vmem:[%s357 + $0xd8] sm:$0xf]
        %v5232 = vld [vmem:[%s357 + $0xdc] sm:$0xf]
        %v5233 = vld [vmem:[%s357 + $0xe0] sm:$0xf]
        %v5234 = vld [vmem:[%s357 + $0xe4] sm:$0xf]
        %v5235 = vld [vmem:[%s357 + $0xe8] sm:$0xf]
        %v5236 = vld [vmem:[%s357 + $0xec] sm:$0xf]
        %v5237 = vunpack.c.l.bf16 %v5189
        %v5238 = vunpack.c.l.bf16 %v5190
        %v5239 = vunpack.c.l.bf16 %v5191
        %v5240 = vunpack.c.l.bf16 %v5192
        %v5241 = vunpack.c.l.bf16 %v5193
        %v5242 = vunpack.c.l.bf16 %v5194
        %v5243 = vunpack.c.l.bf16 %v5195
        %v5244 = vunpack.c.l.bf16 %v5196
        %v5245 = vunpack.c.l.bf16 %v5197
        %v5246 = vunpack.c.l.bf16 %v5198
        %v5247 = vunpack.c.l.bf16 %v5199
        %v5248 = vunpack.c.l.bf16 %v5200
        %v5249 = vunpack.c.l.bf16 %v5201
        %v5250 = vunpack.c.l.bf16 %v5202
        %v5251 = vunpack.c.l.bf16 %v5203
        %v5252 = vunpack.c.l.bf16 %v5204
        %v5253 = vunpack.c.l.bf16 %v5205
        %v5254 = vunpack.c.l.bf16 %v5206
        %v5255 = vunpack.c.l.bf16 %v5207
        %v5256 = vunpack.c.l.bf16 %v5208
        %v5257 = vunpack.c.l.bf16 %v5209
        %v5258 = vunpack.c.l.bf16 %v5210
        %v5259 = vunpack.c.l.bf16 %v5211
        %v5260 = vunpack.c.l.bf16 %v5212
        %v5261 = vunpack.c.l.bf16 %v5213
        %v5262 = vunpack.c.l.bf16 %v5214
        %v5263 = vunpack.c.l.bf16 %v5215
        %v5264 = vunpack.c.l.bf16 %v5216
        %v5265 = vunpack.c.l.bf16 %v5217
        %v5266 = vunpack.c.l.bf16 %v5218
        %v5267 = vunpack.c.l.bf16 %v5219
        %v5268 = vunpack.c.l.bf16 %v5220
        %v5269 = vunpack.c.l.bf16 %v5221
        %v5270 = vunpack.c.l.bf16 %v5222
        %v5271 = vunpack.c.l.bf16 %v5223
        %v5272 = vunpack.c.l.bf16 %v5224
        %v5273 = vunpack.c.l.bf16 %v5225
        %v5274 = vunpack.c.l.bf16 %v5226
        %v5275 = vunpack.c.l.bf16 %v5227
        %v5276 = vunpack.c.l.bf16 %v5228
        %v5277 = vunpack.c.l.bf16 %v5229
        %v5278 = vunpack.c.l.bf16 %v5230
        %v5279 = vunpack.c.l.bf16 %v5231
        %v5280 = vunpack.c.l.bf16 %v5232
        %v5281 = vunpack.c.l.bf16 %v5233
        %v5282 = vunpack.c.l.bf16 %v5234
        %v5283 = vunpack.c.l.bf16 %v5235
        %v5284 = vunpack.c.l.bf16 %v5236
        %vm5333 = vcmask 1042432
        %v5334 = vrot.slane %v4999, 5
        %v5335 = vrot.slane %v5002, 5
        %v5336 = vsel %vm5333, %v5334, %v5335
        %v5337 = vrot.slane %v5007, 5
        %v5338 = vsel %vm5333, %v5335, %v5337
        %v5339 = vrot.slane %v5010, 5
        %v5340 = vsel %vm5333, %v5337, %v5339
        %v5341 = vrot.slane %v5015, 5
        %v5342 = vsel %vm5333, %v5339, %v5341
        %v5343 = vrot.slane %v5018, 5
        %v5344 = vsel %vm5333, %v5341, %v5343
        %v5345 = vrot.slane %v5023, 5
        %v5346 = vsel %vm5333, %v5343, %v5345
        %v5347 = vrot.slane %v5026, 5
        %v5348 = vsel %vm5333, %v5345, %v5347
        %v5349 = vrot.slane %v5031, 5
        %v5350 = vsel %vm5333, %v5347, %v5349
        %v5351 = vrot.slane %v5034, 5
        %v5352 = vsel %vm5333, %v5349, %v5351
        %v5353 = vrot.slane %v5039, 5
        %v5354 = vsel %vm5333, %v5351, %v5353
        %v5355 = vrot.slane %v5042, 5
        %v5356 = vsel %vm5333, %v5353, %v5355
        %v5357 = vrot.slane %v5047, 5
        %v5358 = vsel %vm5333, %v5355, %v5357
        %v5359 = vrot.slane %v5050, 5
        %v5360 = vsel %vm5333, %v5357, %v5359
        %v5361 = vrot.slane %v5055, 5
        %v5362 = vsel %vm5333, %v5359, %v5361
        %v5363 = vrot.slane %v5058, 5
        %v5364 = vsel %vm5333, %v5361, %v5363
        %v5365 = vrot.slane %v5063, 5
        %v5366 = vsel %vm5333, %v5363, %v5365
        %v5367 = vrot.slane %v5066, 5
        %v5368 = vsel %vm5333, %v5365, %v5367
        %v5369 = vrot.slane %v5071, 5
        %v5370 = vsel %vm5333, %v5367, %v5369
        %v5371 = vrot.slane %v5074, 5
        %v5372 = vsel %vm5333, %v5369, %v5371
        %v5373 = vrot.slane %v5079, 5
        %v5374 = vsel %vm5333, %v5371, %v5373
        %v5375 = vrot.slane %v5082, 5
        %v5376 = vsel %vm5333, %v5373, %v5375
        %v5377 = vrot.slane %v5087, 5
        %v5378 = vsel %vm5333, %v5375, %v5377
        %v5379 = vrot.slane %v5090, 5
        %v5380 = vsel %vm5333, %v5377, %v5379
        %v5381 = vrot.slane %v5095, 5
        %v5382 = vsel %vm5333, %v5379, %v5381
        %v5383 = vrot.slane %v5098, 5
        %v5384 = vsel %vm5333, %v5381, %v5383
        %v5385 = vrot.slane %v5103, 5
        %v5386 = vsel %vm5333, %v5383, %v5385
        %v5387 = vrot.slane %v5106, 5
        %v5388 = vsel %vm5333, %v5385, %v5387
        %v5389 = vrot.slane %v5111, 5
        %v5390 = vsel %vm5333, %v5387, %v5389
        %v5391 = vrot.slane %v5114, 5
        %v5392 = vsel %vm5333, %v5389, %v5391
        %v5393 = vrot.slane %v5119, 5
        %v5394 = vsel %vm5333, %v5391, %v5393
        %v5395 = vrot.slane %v5122, 5
        %v5396 = vsel %vm5333, %v5393, %v5395
        %v5397 = vrot.slane %v5127, 5
        %v5398 = vsel %vm5333, %v5395, %v5397
        %v5399 = vrot.slane %v5130, 5
        %v5400 = vsel %vm5333, %v5397, %v5399
        %v5401 = vrot.slane %v5135, 5
        %v5402 = vsel %vm5333, %v5399, %v5401
        %v5403 = vrot.slane %v5138, 5
        %v5404 = vsel %vm5333, %v5401, %v5403
        %v5405 = vrot.slane %v5143, 5
        %v5406 = vsel %vm5333, %v5403, %v5405
        %v5407 = vrot.slane %v5146, 5
        %v5408 = vsel %vm5333, %v5405, %v5407
        %v5409 = vrot.slane %v5151, 5
        %v5410 = vsel %vm5333, %v5407, %v5409
        %v5411 = vrot.slane %v5154, 5
        %v5412 = vsel %vm5333, %v5409, %v5411
        %v5413 = vrot.slane %v5159, 5
        %v5414 = vsel %vm5333, %v5411, %v5413
        %v5415 = vrot.slane %v5162, 5
        %v5416 = vsel %vm5333, %v5413, %v5415
        %v5417 = vrot.slane %v5167, 5
        %v5418 = vsel %vm5333, %v5415, %v5417
        %v5419 = vrot.slane %v5170, 5
        %v5420 = vsel %vm5333, %v5417, %v5419
        %v5421 = vrot.slane %v5175, 5
        %v5422 = vsel %vm5333, %v5419, %v5421
        %v5423 = vrot.slane %v5178, 5
        %v5424 = vsel %vm5333, %v5421, %v5423
        %v5425 = vrot.slane %v5183, 5
        %v5426 = vsel %vm5333, %v5423, %v5425
        %v5427 = vrot.slane %v5186, 5
        %v5428 = vsel %vm5333, %v5425, %v5427
        %v5477 = vmul.f32 %v5237, %v5334
        %v5478 = vmul.f32 %v5238, %v5336
        %v5479 = vmul.f32 %v5239, %v5338
        %v5480 = vmul.f32 %v5240, %v5340
        %v5481 = vmul.f32 %v5241, %v5342
        %v5482 = vmul.f32 %v5242, %v5344
        %v5483 = vmul.f32 %v5243, %v5346
        %v5484 = vmul.f32 %v5244, %v5348
        %v5485 = vmul.f32 %v5245, %v5350
        %v5486 = vmul.f32 %v5246, %v5352
        %v5487 = vmul.f32 %v5247, %v5354
        %v5488 = vmul.f32 %v5248, %v5356
        %v5489 = vmul.f32 %v5249, %v5358
        %v5490 = vmul.f32 %v5250, %v5360
        %v5491 = vmul.f32 %v5251, %v5362
        %v5492 = vmul.f32 %v5252, %v5364
        %v5493 = vmul.f32 %v5253, %v5366
        %v5494 = vmul.f32 %v5254, %v5368
        %v5495 = vmul.f32 %v5255, %v5370
        %v5496 = vmul.f32 %v5256, %v5372
        %v5497 = vmul.f32 %v5257, %v5374
        %v5498 = vmul.f32 %v5258, %v5376
        %v5499 = vmul.f32 %v5259, %v5378
        %v5500 = vmul.f32 %v5260, %v5380
        %v5501 = vmul.f32 %v5261, %v5382
        %v5502 = vmul.f32 %v5262, %v5384
        %v5503 = vmul.f32 %v5263, %v5386
        %v5504 = vmul.f32 %v5264, %v5388
        %v5505 = vmul.f32 %v5265, %v5390
        %v5506 = vmul.f32 %v5266, %v5392
        %v5507 = vmul.f32 %v5267, %v5394
        %v5508 = vmul.f32 %v5268, %v5396
        %v5509 = vmul.f32 %v5269, %v5398
        %v5510 = vmul.f32 %v5270, %v5400
        %v5511 = vmul.f32 %v5271, %v5402
        %v5512 = vmul.f32 %v5272, %v5404
        %v5513 = vmul.f32 %v5273, %v5406
        %v5514 = vmul.f32 %v5274, %v5408
        %v5515 = vmul.f32 %v5275, %v5410
        %v5516 = vmul.f32 %v5276, %v5412
        %v5517 = vmul.f32 %v5277, %v5414
        %v5518 = vmul.f32 %v5278, %v5416
        %v5519 = vmul.f32 %v5279, %v5418
        %v5520 = vmul.f32 %v5280, %v5420
        %v5521 = vmul.f32 %v5281, %v5422
        %v5522 = vmul.f32 %v5282, %v5424
        %v5523 = vmul.f32 %v5283, %v5426
        %v5524 = vmul.f32 %v5284, %v5428
        %vm5573 = vcmask 1044480
        %v5574 = vrot.slane %v5477, 3
        %v5575 = vrot.slane %v5478, 3
        %v5576 = vsel %vm5573, %v5574, %v5575
        %v5577 = vrot.slane %v5479, 3
        %v5578 = vsel %vm5573, %v5575, %v5577
        %v5579 = vrot.slane %v5480, 3
        %v5580 = vrot.slane %v5481, 3
        %v5581 = vsel %vm5573, %v5579, %v5580
        %v5582 = vrot.slane %v5482, 3
        %v5583 = vsel %vm5573, %v5580, %v5582
        %v5584 = vrot.slane %v5483, 3
        %v5585 = vrot.slane %v5484, 3
        %v5586 = vsel %vm5573, %v5584, %v5585
        %v5587 = vrot.slane %v5485, 3
        %v5588 = vsel %vm5573, %v5585, %v5587
        %v5589 = vrot.slane %v5486, 3
        %v5590 = vrot.slane %v5487, 3
        %v5591 = vsel %vm5573, %v5589, %v5590
        %v5592 = vrot.slane %v5488, 3
        %v5593 = vsel %vm5573, %v5590, %v5592
        %v5594 = vrot.slane %v5489, 3
        %v5595 = vrot.slane %v5490, 3
        %v5596 = vsel %vm5573, %v5594, %v5595
        %v5597 = vrot.slane %v5491, 3
        %v5598 = vsel %vm5573, %v5595, %v5597
        %v5599 = vrot.slane %v5492, 3
        %v5600 = vrot.slane %v5493, 3
        %v5601 = vsel %vm5573, %v5599, %v5600
        %v5602 = vrot.slane %v5494, 3
        %v5603 = vsel %vm5573, %v5600, %v5602
        %v5604 = vrot.slane %v5495, 3
        %v5605 = vrot.slane %v5496, 3
        %v5606 = vsel %vm5573, %v5604, %v5605
        %v5607 = vrot.slane %v5497, 3
        %v5608 = vsel %vm5573, %v5605, %v5607
        %v5609 = vrot.slane %v5498, 3
        %v5610 = vrot.slane %v5499, 3
        %v5611 = vsel %vm5573, %v5609, %v5610
        %v5612 = vrot.slane %v5500, 3
        %v5613 = vsel %vm5573, %v5610, %v5612
        %v5614 = vrot.slane %v5501, 3
        %v5615 = vrot.slane %v5502, 3
        %v5616 = vsel %vm5573, %v5614, %v5615
        %v5617 = vrot.slane %v5503, 3
        %v5618 = vsel %vm5573, %v5615, %v5617
        %v5619 = vrot.slane %v5504, 3
        %v5620 = vrot.slane %v5505, 3
        %v5621 = vsel %vm5573, %v5619, %v5620
        %v5622 = vrot.slane %v5506, 3
        %v5623 = vsel %vm5573, %v5620, %v5622
        %v5624 = vrot.slane %v5507, 3
        %v5625 = vrot.slane %v5508, 3
        %v5626 = vsel %vm5573, %v5624, %v5625
        %v5627 = vrot.slane %v5509, 3
        %v5628 = vsel %vm5573, %v5625, %v5627
        %v5629 = vrot.slane %v5510, 3
        %v5630 = vrot.slane %v5511, 3
        %v5631 = vsel %vm5573, %v5629, %v5630
        %v5632 = vrot.slane %v5512, 3
        %v5633 = vsel %vm5573, %v5630, %v5632
        %v5634 = vrot.slane %v5513, 3
        %v5635 = vrot.slane %v5514, 3
        %v5636 = vsel %vm5573, %v5634, %v5635
        %v5637 = vrot.slane %v5515, 3
        %v5638 = vsel %vm5573, %v5635, %v5637
        %v5639 = vrot.slane %v5516, 3
        %v5640 = vrot.slane %v5517, 3
        %v5641 = vsel %vm5573, %v5639, %v5640
        %v5642 = vrot.slane %v5518, 3
        %v5643 = vsel %vm5573, %v5640, %v5642
        %v5644 = vrot.slane %v5519, 3
        %v5645 = vrot.slane %v5520, 3
        %v5646 = vsel %vm5573, %v5644, %v5645
        %v5647 = vrot.slane %v5521, 3
        %v5648 = vsel %vm5573, %v5645, %v5647
        %v5649 = vrot.slane %v5522, 3
        %v5650 = vrot.slane %v5523, 3
        %v5651 = vsel %vm5573, %v5649, %v5650
        %v5652 = vrot.slane %v5524, 3
        %v5653 = vsel %vm5573, %v5650, %v5652
        %5686 = vst.msk [vmem:[%s417] sm:$0xff] %vm740, %v5576
        %5687 = vst.msk [vmem:[%s417 + $0x8] sm:$0xff] %vm740, %v5578
        %5688 = vst.msk [vmem:[%s417 + $0x10] sm:$0xff] %vm740, %v5581
        %5689 = vst.msk [vmem:[%s417 + $0x18] sm:$0xff] %vm740, %v5583
        %5690 = vst.msk [vmem:[%s417 + $0x20] sm:$0xff] %vm740, %v5586
        %5691 = vst.msk [vmem:[%s417 + $0x28] sm:$0xff] %vm740, %v5588
        %5692 = vst.msk [vmem:[%s417 + $0x30] sm:$0xff] %vm740, %v5591
        %5693 = vst.msk [vmem:[%s417 + $0x38] sm:$0xff] %vm740, %v5593
        %5694 = vst.msk [vmem:[%s417 + $0x40] sm:$0xff] %vm740, %v5596
        %5695 = vst.msk [vmem:[%s417 + $0x48] sm:$0xff] %vm740, %v5598
        %5696 = vst.msk [vmem:[%s417 + $0x50] sm:$0xff] %vm740, %v5601
        %5697 = vst.msk [vmem:[%s417 + $0x58] sm:$0xff] %vm740, %v5603
        %5698 = vst.msk [vmem:[%s417 + $0x60] sm:$0xff] %vm740, %v5606
        %5699 = vst.msk [vmem:[%s417 + $0x68] sm:$0xff] %vm740, %v5608
        %5700 = vst.msk [vmem:[%s417 + $0x70] sm:$0xff] %vm740, %v5611
        %5701 = vst.msk [vmem:[%s417 + $0x78] sm:$0xff] %vm740, %v5613
        %5702 = vst.msk [vmem:[%s417 + $0x80] sm:$0xff] %vm740, %v5616
        %5703 = vst.msk [vmem:[%s417 + $0x88] sm:$0xff] %vm740, %v5618
        %5704 = vst.msk [vmem:[%s417 + $0x90] sm:$0xff] %vm740, %v5621
        %5705 = vst.msk [vmem:[%s417 + $0x98] sm:$0xff] %vm740, %v5623
        %5706 = vst.msk [vmem:[%s417 + $0xa0] sm:$0xff] %vm740, %v5626
        %5707 = vst.msk [vmem:[%s417 + $0xa8] sm:$0xff] %vm740, %v5628
        %5708 = vst.msk [vmem:[%s417 + $0xb0] sm:$0xff] %vm740, %v5631
        %5709 = vst.msk [vmem:[%s417 + $0xb8] sm:$0xff] %vm740, %v5633
        %5710 = vst.msk [vmem:[%s417 + $0xc0] sm:$0xff] %vm740, %v5636
        %5711 = vst.msk [vmem:[%s417 + $0xc8] sm:$0xff] %vm740, %v5638
        %5712 = vst.msk [vmem:[%s417 + $0xd0] sm:$0xff] %vm740, %v5641
        %5713 = vst.msk [vmem:[%s417 + $0xd8] sm:$0xff] %vm740, %v5643
        %5714 = vst.msk [vmem:[%s417 + $0xe0] sm:$0xff] %vm740, %v5646
        %5715 = vst.msk [vmem:[%s417 + $0xe8] sm:$0xff] %vm740, %v5648
        %5716 = vst.msk [vmem:[%s417 + $0xf0] sm:$0xff] %vm740, %v5651
        %5717 = vst.msk [vmem:[%s417 + $0xf8] sm:$0xff] %vm740, %v5653
        %s5718 = sand.u32 %s210, 1
        %s5719 = scalar_lea.sflag [#allocation7], %s5718
        %s5720 = sand.u32 %s210, 1
        %s5721 = smul.addr %s5720, 256
        %s5722 = scalar_lea.vmem [#allocation19], %s5721
        // Predicated region
        $region85: #{attention_module_forward.1} parent=51 // pred_check
          %p5723 = pneg %p220
        $region86: #{attention_module_forward.1} parent=51 // pred_check_branch
          %5725 = sbr.rel (%p5723) target = $region88
        $region87: #{attention_module_forward.1} parent=51 // pred_region
          %s5727 = ssub.s32 4096, 4096
          %5728 = vsyncadd %s5719, %s5727
          %s5729 = smul.addr %s29, 32
          %s5730 = smul.addr %s5729, 128
          %s5731 = scalar_lea.hbm %s8, %s5730
          %s5732 = sshll.u32 %s5722, 4
          %s5733 = int_to_ptr.vmem [resolvable:$true] %s5732
          %5738 = dma.vmem_to_hbm [thread:$0]  %s5733, 4096, %s5731, %s5719, 128, 128, 8
        $region88: #{attention_module_forward.1} parent=51 // pred_fallthru
          _
      $region52: #{attention_module_forward.1} parent=5 // pred_fallthru
        _
      %p5739 = scmp.le.s32.totalorder 2, %s24
      // Predicated region
      $region89: #{attention_module_forward.1} parent=5 // pred_check
        %p5740 = pneg %p5739
      $region90: #{attention_module_forward.1} parent=5 // pred_check_branch
        %5742 = sbr.rel (%p5740) target = $region92
      $region91: #{attention_module_forward.1} parent=5 // pred_region
        %s5743 = ssub.s32 %s24, 2
        // Predicated region
        $region93: #{attention_module_forward.1} parent=91 // pred_check
          %p5744 = pneg %p226
        $region94: #{attention_module_forward.1} parent=91 // pred_check_branch
          %5746 = sbr.rel (%p5744) target = $region96
        $region95: #{attention_module_forward.1} parent=91 // pred_region
          %s5747 = sand.u32 %s211, 1
          %s5748 = scalar_lea.sflag [#allocation7], %s5747
          %s5749 = sand.u32 %s211, 1
          %s5750 = smul.addr %s5749, 256
          %s5751 = scalar_lea.vmem [#allocation19], %s5750
          %5752 = dma.done %s5748, 4096
        $region96: #{attention_module_forward.1} parent=91 // pred_fallthru
          _
      $region92: #{attention_module_forward.1} parent=5 // pred_fallthru
        _
    $region6: #{attention_module_forward.1} parent=1 // loop_footer
      %s28 = sadd.s32 1, %s24
    $region7: #{attention_module_forward.1} parent=1 // loop_footer_branch
      %23 = sbr.rel target = $region3
    $region8: #{attention_module_forward.1} parent=1 // loop_exit
      _
    %5753 = vsyncpa [#allocation6], 1
    %s5754 = scalar_lea.sflag [#allocation6], 1
    %5755 = vsyncpa %s5754, 1
    %5756 = vsyncpa [#allocation9], 1
    %5757 = vsyncpa [#allocation12], 1
    %5758 = vsyncpa [#allocation15], 1
    %5759 = vsyncpa [#allocation18], 1
    %5760 = vsyncpa [#allocation7], 1
    %s5761 = scalar_lea.sflag [#allocation7], 1
    %5762 = vsyncpa %s5761, 1

</llo_original>
